<compile_context>
chip_gen: v7x
topology: tpu7x:2x2x1
jax: 0.10.0
libtpu: 0.0.40
codegen_flags: <defaults>
</compile_context>

<pallas_src>
import jax
import jax.numpy as jnp
from jax.experimental import pallas as pl
from jax.experimental.pallas import tpu as pltpu

FEAT_DIM = 1000          # logical feature width (torch.nn.Linear(1000, n_class))
FEAT_PAD = 1024          # 128-aligned padding of the feature dim
N_CLASS_PAD = 128        # lane-dense output block width (sliced back in wrapper)
TK_DEFAULT = 2048        # reduction-dim tile target (amortizes per-step overhead)
VMEM_CAP_BYTES = 48 << 20  # <= v7x physical 64 MiB; fine on v5e/v6e


def _round_up(x, m):
    return ((x + m - 1) // m) * m


def _pick_tk(d_pad, tk_target):
    """Largest multiple of 128 <= tk_target that divides d_pad (no zero K-rows)."""
    tk = min(_round_up(tk_target, 128), d_pad)
    tk = (tk // 128) * 128
    while d_pad % tk:
        tk -= 128
    return tk


def _default_hidden_splits():
    """Use 2 hidden-dim splits on v7x (2 TensorCores/chip), 1 elsewhere."""
    try:
        kind = jax.devices()[0].device_kind.lower()
    except Exception:
        return 1
    return 2 if ("v7" in kind or "7x" in kind) else 1


def manager_forward_kernel(x_ref, w1_ref, b1_ref, w2_ref, out_ref, acc_ref):
    """Per (hidden-split c, K-step k): out[c] = relu(x @ w1[:, c] + b1[c]) @ w2[c]."""
    k = pl.program_id(1)
    tk = w1_ref.shape[0]

    @pl.when(k == 0)
    def _init():
        acc_ref[...] = jnp.zeros_like(acc_ref)

    # Slice the resident x block; offset is a compile-hinted multiple of 128.
    off = pl.multiple_of(k * tk, 128)
    acc_ref[...] += jnp.dot(x_ref[:, pl.ds(off, tk)], w1_ref[...],
                            preferred_element_type=jnp.float32)

    @pl.when(k == pl.num_programs(1) - 1)
    def _finalize():
        # Bias + ReLU in fp32 (VPU has slack; v5e has no bf16 VALU).
        h = jnp.maximum(acc_ref[...] + b1_ref[...], 0.0)
        # Partial task-head matmul for this hidden split (b2 added in wrapper).
        out_ref[0] = jnp.dot(h.astype(w2_ref.dtype), w2_ref[...],
                             preferred_element_type=jnp.float32)


def manager_forward(x_nchw, packed, task, class_incremental=True,
                    tk=TK_DEFAULT, hidden_splits=None):
    """Equivalent of Manager.forward(features, task), using pre-packed params."""
    if hidden_splits is None:
        hidden_splits = _default_hidden_splits()
    n_split = hidden_splits
    assert FEAT_PAD % n_split == 0 and (FEAT_PAD // n_split) % 128 == 0
    f_split = FEAT_PAD // n_split

    B = x_nchw.shape[0]
    x = x_nchw.reshape(B, -1)                  # glue: flatten NCHW
    D = x.shape[1]

    w1_p, b1_p = packed["arch_w"], packed["arch_b"]      # pre-cast / pre-padded
    d_pad = w1_p.shape[0]
    assert D <= d_pad, "pack_params was built for a smaller input dim"

    if class_incremental:
        # glue: static (Python int) per-task head selection.
        # TODO(synk): if `task` ever becomes a traced value, switch to
        # PrefetchScalarGridSpec(num_scalar_prefetch=1) and index the stacked
        # head buffer inside the BlockSpec index_map instead.
        w2_p = packed["head_w"][task]
        b2_p = packed["head_b"][task]
        n_class = packed["n_class"][task]
    else:
        w2_p, b2_p = packed["head_w"], packed["head_b"]
        n_class = packed["n_class"]

    # Only the activation is cast/padded per call (weights were packed at init).
    x_p = jnp.pad(x.astype(jnp.bfloat16), ((0, 0), (0, d_pad - D)))

    tk = _pick_tk(d_pad, tk)
    n_k = d_pad // tk

    cost = pl.CostEstimate(
        flops=2 * B * d_pad * FEAT_PAD + 2 * B * FEAT_PAD * N_CLASS_PAD,
        transcendentals=0,
        bytes_accessed=(x_p.size * 2 + w1_p.size * 2 + w2_p.size * 2
                        + b1_p.size * 4 + b2_p.size * 4
                        + n_split * B * N_CLASS_PAD * 4),
    )

    # Explicit scoped-VMEM budget: resident x, double-buffered bf16 w1 tiles,
    # resident w2/biases, out blocks, f32 accumulator scratch, plus headroom.
    vmem_bytes = int(min(
        VMEM_CAP_BYTES,
        2 * B * d_pad * 2
        + 2 * tk * f_split * 2
        + 2 * f_split * N_CLASS_PAD * 2
        + 2 * (f_split + N_CLASS_PAD) * 4
        + 2 * B * N_CLASS_PAD * 4
        + _round_up(B, 8) * f_split * 4
        + (4 << 20),
    ))

    # TODO(synk): on v7x, if profiling shows exposed DMA waits after raising tk,
    # add pipeline_mode=pl.Buffered(3) to the w1 BlockSpec.
    out_partial = pl.pallas_call(
        manager_forward_kernel,
        out_shape=jax.ShapeDtypeStruct((n_split, B, N_CLASS_PAD), jnp.float32),
        grid_spec=pltpu.PrefetchScalarGridSpec(
            num_scalar_prefetch=0,
            grid=(n_split, n_k),
            in_specs=[
                pl.BlockSpec((B, d_pad), lambda c, k: (0, 0)),        # x (resident)
                pl.BlockSpec((tk, f_split), lambda c, k: (k, c)),     # w1 chunk
                pl.BlockSpec((1, f_split), lambda c, k: (0, c)),      # b1 slice
                pl.BlockSpec((f_split, N_CLASS_PAD), lambda c, k: (c, 0)),  # w2
            ],
            out_specs=pl.BlockSpec((1, B, N_CLASS_PAD), lambda c, k: (c, 0, 0)),
            scratch_shapes=[pltpu.VMEM((B, f_split), jnp.float32)],
        ),
        compiler_params=pltpu.CompilerParams(
            dimension_semantics=("parallel", "arbitrary"),  # c parallel, K reduce
            vmem_limit_bytes=vmem_bytes,
        ),
        cost_estimate=cost,
    )(x_p, w1_p, b1_p, w2_p)

    # glue: combine hidden-split partials, add head bias, drop lane padding.
    logits = out_partial.sum(axis=0) + b2_p
    return logits[:, :n_class]


def init_params(key, in_dim, taskcla):
    """Deterministic synthetic f32 parameters with the exact PyTorch shapes."""
    k1, k2, k3, _ = jax.random.split(key, 4)
    arch_w = jax.random.normal(k1, (in_dim, FEAT_DIM), jnp.float32) * 0.02
    arch_b = jnp.zeros((1, FEAT_DIM), jnp.float32)
    n_tasks = len(taskcla)
    n_class = taskcla[0][1]  # heads stacked -> assumes same width per task
    head_w = jax.random.normal(k2, (n_tasks, FEAT_DIM, n_class), jnp.float32) * 0.02
    head_b = jax.random.normal(k3, (n_tasks, 1, n_class), jnp.float32) * 0.01
    return {"arch_w": arch_w, "arch_b": arch_b,
            "head_w": head_w, "head_b": head_b}


def pack_params(params, in_dim, taskcla):
    """One-time cast+pad of all weights (hoisted out of the forward path)."""
    d_pad = _round_up(in_dim, 128)
    w1, b1 = params["arch_w"], params["arch_b"]
    hw, hb = params["head_w"], params["head_b"]
    n_class = hw.shape[-1]
    packed = {
        "arch_w": jnp.pad(w1.astype(jnp.bfloat16),
                          ((0, d_pad - w1.shape[0]), (0, FEAT_PAD - w1.shape[1]))),
        "arch_b": jnp.pad(b1.astype(jnp.float32),
                          ((0, 0), (0, FEAT_PAD - b1.shape[1]))),
        "head_w": jnp.pad(hw.astype(jnp.bfloat16),
                          ((0, 0), (0, FEAT_PAD - hw.shape[1]),
                           (0, N_CLASS_PAD - n_class))),
        "head_b": jnp.pad(hb.astype(jnp.float32),
                          ((0, 0), (0, 0), (0, N_CLASS_PAD - n_class))),
        "n_class": [nc for _, nc in taskcla],
    }
    return packed


if __name__ == "__main__":
    key = jax.random.PRNGKey(0)
    kx, kp = jax.random.split(key)

    # Small NCHW input consistent with an image backbone: B=2, C=4, H=W=16
    B, C, H, W = 2, 4, 16, 16
    x = jax.random.normal(kx, (B, C, H, W), jnp.float32)

    taskcla = [(0, 10), (1, 10)]           # two tasks, 10 classes each
    in_dim = C * H * W
    params = init_params(kp, in_dim, taskcla)
    packed = pack_params(params, in_dim, taskcla)   # one-time weight packing
    jax.block_until_ready(packed["arch_w"])

    task = 1
    logits = manager_forward(x, packed, task, class_incremental=True)
    jax.block_until_ready(logits)

    # Reference with matched bf16-in / f32-accum precision (plain JAX).
    # NOTE: PyTorch keeps fp32 throughout; bf16 streaming is an intentional
    # precision trade (~1e-2 relative drift vs fp32).
    xf = x.reshape(B, -1)
    h_ref = jnp.maximum(
        jnp.dot(xf.astype(jnp.bfloat16), params["arch_w"].astype(jnp.bfloat16),
                preferred_element_type=jnp.float32) + params["arch_b"], 0.0)
    ref = jnp.dot(h_ref.astype(jnp.bfloat16),
                  params["head_w"][task].astype(jnp.bfloat16),
                  preferred_element_type=jnp.float32) + params["head_b"][task]

    assert logits.shape == (B, taskcla[task][1])
    assert jnp.allclose(logits, ref, atol=2e-2, rtol=2e-2), (
        float(jnp.max(jnp.abs(logits - ref))))

    # TODO(synk): training-time pieces (CrossEntropyLoss, LwF distillation loss,
    # SGD loop, evaluation metrics) are not part of Manager.forward and are omitted.
    print("KERNEL_OK")
</pallas_src>

<mosaic_0001>
module attributes {stable_mosaic.version = 11 : i64} {
  func.func @manager_forward_kernel(%arg0: i32, %arg1: i32, %arg2: memref<2x1024xbf16, #tpu.memory_space<vmem>>, %arg3: memref<1024x1024xbf16, #tpu.memory_space<vmem>>, %arg4: memref<1x1024xf32, #tpu.memory_space<vmem>>, %arg5: memref<1024x128xbf16, #tpu.memory_space<vmem>>, %arg6: memref<1x2x128xf32, #tpu.memory_space<vmem>>, %arg7: memref<2x1024xf32, #tpu.memory_space<vmem>>) attributes {dimension_semantics = [#tpu.dimension_semantics<parallel>, #tpu.dimension_semantics<arbitrary>], iteration_bounds = array<i64: 1, 1>, scalar_prefetch = 0 : i64, scratch_operands = 1 : i64, tpu.core_type = #tpu.core_type<tc>, window_params = [{pipeline_mode = #tpu.pipeline_mode<synchronous>, transform_indices = @transform_0, window_bounds = array<i64: 2, 1024>}, {transform_indices = @transform_1, window_bounds = array<i64: 1024, 1024>}, {transform_indices = @transform_2, window_bounds = array<i64: 1, 1024>}, {transform_indices = @transform_3, window_bounds = array<i64: 1024, 128>}, {transform_indices = @transform_4, window_bounds = array<i64: 1, 2, 128>}]} {
    %c0_i32 = arith.constant 0 : i32
    %0 = arith.cmpi eq, %arg1, %c0_i32 : i32
    %1 = arith.extui %0 : i1 to i32
    %c0_i32_0 = arith.constant 0 : i32
    %2 = arith.cmpi ne, %1, %c0_i32_0 : i32
    scf.if %2 {
      %cst_9 = arith.constant 0.000000e+00 : f32
      %15 = vector.broadcast %cst_9 : f32 to vector<2x1024xf32>
      %c0_10 = arith.constant 0 : index
      %c0_11 = arith.constant 0 : index
      %16 = vector.load %arg7[%c0_10, %c0_11] : memref<2x1024xf32, #tpu.memory_space<vmem>>, vector<2x1024xf32>
      tpu.vector_store %arg7[%c0_10, %c0_11], %15 {strides = array<i32>} : memref<2x1024xf32, #tpu.memory_space<vmem>>, vector<2x1024xf32>,
    } else {
    }
    %c1024_i32 = arith.constant 1024 : i32
    %3 = arith.muli %arg1, %c1024_i32 : i32
    %4 = tpu.assume_multiple %3, 128 : i32
    %c0 = arith.constant 0 : index
    %c0_1 = arith.constant 0 : index
    %5 = vector.load %arg7[%c0, %c0_1] : memref<2x1024xf32, #tpu.memory_space<vmem>>, vector<2x1024xf32>
    %c0_2 = arith.constant 0 : index
    %6 = arith.index_cast %4 : i32 to index
    %7 = vector.load %arg2[%c0_2, %6] : memref<2x1024xbf16, #tpu.memory_space<vmem>>, vector<2x1024xbf16>
    %c0_3 = arith.constant 0 : index
    %c0_4 = arith.constant 0 : index
    %8 = vector.load %arg3[%c0_3, %c0_4] : memref<1024x1024xbf16, #tpu.memory_space<vmem>>, vector<1024x1024xbf16>
    %cst = arith.constant dense<0.000000e+00> : vector<2x1024xf32>
    %9 = tpu.matmul %7, %8, %cst {dimension_numbers = #tpu.dot_dimension_numbers<[1], [0], [0], [1], [0, 0, 1, 1], [], []>} : vector<2x1024xbf16>, vector<1024x1024xbf16>, vector<2x1024xf32> -> vector<2x1024xf32>
    %10 = arith.addf %5, %9 : vector<2x1024xf32>
    %c0_5 = arith.constant 0 : index
    %c0_6 = arith.constant 0 : index
    %11 = vector.load %arg7[%c0_5, %c0_6] : memref<2x1024xf32, #tpu.memory_space<vmem>>, vector<2x1024xf32>
    tpu.vector_store %arg7[%c0_5, %c0_6], %10 {strides = array<i32>} : memref<2x1024xf32, #tpu.memory_space<vmem>>, vector<2x1024xf32>,
    %c0_i32_7 = arith.constant 0 : i32
    %12 = arith.cmpi eq, %arg1, %c0_i32_7 : i32
    %13 = arith.extui %12 : i1 to i32
    %c0_i32_8 = arith.constant 0 : i32
    %14 = arith.cmpi ne, %13, %c0_i32_8 : i32
    scf.if %14 {
      %c0_9 = arith.constant 0 : index
      %c0_10 = arith.constant 0 : index
      %15 = vector.load %arg7[%c0_9, %c0_10] : memref<2x1024xf32, #tpu.memory_space<vmem>>, vector<2x1024xf32>
      %c0_11 = arith.constant 0 : index
      %c0_12 = arith.constant 0 : index
      %16 = vector.load %arg4[%c0_11, %c0_12] : memref<1x1024xf32, #tpu.memory_space<vmem>>, vector<1x1024xf32>
      %17 = vector.broadcast %16 : vector<1x1024xf32> to vector<2x1024xf32>
      %18 = arith.addf %15, %17 : vector<2x1024xf32>
      %cst_13 = arith.constant 0.000000e+00 : f32
      %19 = vector.broadcast %cst_13 : f32 to vector<2x1024xf32>
      %20 = arith.maximumf %18, %19 : vector<2x1024xf32>
      %21 = arith.truncf %20 : vector<2x1024xf32> to vector<2x1024xbf16>
      %c0_14 = arith.constant 0 : index
      %c0_15 = arith.constant 0 : index
      %22 = vector.load %arg5[%c0_14, %c0_15] : memref<1024x128xbf16, #tpu.memory_space<vmem>>, vector<1024x128xbf16>
      %cst_16 = arith.constant dense<0.000000e+00> : vector<2x128xf32>
      %23 = tpu.matmul %21, %22, %cst_16 {dimension_numbers = #tpu.dot_dimension_numbers<[1], [0], [0], [1], [0, 0, 1, 1], [], []>} : vector<2x1024xbf16>, vector<1024x128xbf16>, vector<2x128xf32> -> vector<2x128xf32>
      %c0_17 = arith.constant 0 : index
      %c0_18 = arith.constant 0 : index
      %c0_19 = arith.constant 0 : index
      %24 = vector.load %arg6[%c0_17, %c0_18, %c0_19] : memref<1x2x128xf32, #tpu.memory_space<vmem>>, vector<1x2x128xf32>
      %25 = vector.shape_cast %24 : vector<1x2x128xf32> to vector<2x128xf32>
      %26 = vector.shape_cast %23 : vector<2x128xf32> to vector<1x2x128xf32>
      tpu.vector_store %arg6[%c0_17, %c0_18, %c0_19], %26 {strides = array<i32>} : memref<1x2x128xf32, #tpu.memory_space<vmem>>, vector<1x2x128xf32>,
    } else {
    }
    return
  }
  func.func @transform_0(%arg0: i32, %arg1: i32) -> (i32, i32) {
    %c0_i32 = arith.constant 0 : i32
    %c0_i32_0 = arith.constant 0 : i32
    %c0_i32_1 = arith.constant 0 : i32
    return %c0_i32, %c0_i32_0 : i32, i32
  }
  func.func @transform_1(%arg0: i32, %arg1: i32) -> (i32, i32) {
    %c0_i32 = arith.constant 0 : i32
    return %arg1, %arg0 : i32, i32
  }
  func.func @transform_2(%arg0: i32, %arg1: i32) -> (i32, i32) {
    %c0_i32 = arith.constant 0 : i32
    %c0_i32_0 = arith.constant 0 : i32
    return %c0_i32, %arg0 : i32, i32
  }
  func.func @transform_3(%arg0: i32, %arg1: i32) -> (i32, i32) {
    %c0_i32 = arith.constant 0 : i32
    %c0_i32_0 = arith.constant 0 : i32
    return %arg0, %c0_i32 : i32, i32
  }
  func.func @transform_4(%arg0: i32, %arg1: i32) -> (i32, i32, i32) {
    %c0_i32 = arith.constant 0 : i32
    %c0_i32_0 = arith.constant 0 : i32
    %c0_i32_1 = arith.constant 0 : i32
    return %arg0, %c0_i32, %c0_i32_0 : i32, i32, i32
  }
}

</mosaic_0001>

<llo_original>
// kernel: tpu_custom_call.1
$region0: #{tpu_custom_call.1}
  #allocation0 [shape = 'u32[]', space=smem, size = 0x4, offset = 0x4, fixed_abs, tag = 'smem constant byte address 0x4 - core index']
  #allocation1 [shape = 'u32[144,128]{1,0:T(1,128)}', space=vmem, size = 0x12000, scoped, tag = 'internal scratch']
  #allocation2 [shape = 'f32[2,1024]{1,0:T(2,128)}', space=vmem, size = 0x2000, scoped, tag = 'scratch operand']
  %s0 = inlined_call_operand.hbm [shape: bf16[2,1024], index: 0, kind: input, shape index: {}]
  %s1 = inlined_call_operand.hbm [shape: bf16[1024,1024], index: 1, kind: input, shape index: {}]
  %s2 = inlined_call_operand.hbm [shape: f32[1,1024], index: 2, kind: input, shape index: {}]
  %s3 = inlined_call_operand.hbm [shape: bf16[1024,128], index: 3, kind: input, shape index: {}]
  %s4 = inlined_call_operand.hbm [shape: f32[1,2,128], index: 4, kind: output, shape index: {}]
  %s5 = sld [smem:[#allocation0]]
  $region50: #{tpu_custom_call.1} parent=0
    _
  %s7 = ssub.s32 1, %s5
  %s8 = scalar_select 0, %s7, %s5
  $region1: #{tpu_custom_call.1} parent=0
    #allocation3 [shape = 'u8[4096]{0}', space=vmem, size = 0x1000, scoped, tag = 'input window, operand 0, single buffered']
    #allocation4 [shape = 's32[1]{0}', space=sflag, size = 0x4, scoped, tag = 'scoped memory for tpu_custom_call.1']
    #allocation5 [shape = 's32[1]{0}', space=sflag, size = 0x4, scoped, tag = 'scoped memory for tpu_custom_call.1']
    #allocation6 [shape = 'u8[2097152]{0}', space=vmem, size = 0x200000, scoped, tag = 'input window, operand 1, single buffered']
    #allocation7 [shape = 's32[1]{0}', space=sflag, size = 0x4, scoped, tag = 'scoped memory for tpu_custom_call.1']
    #allocation8 [shape = 'u8[4096]{0}', space=vmem, size = 0x1000, scoped, tag = 'input window, operand 2, single buffered']
    #allocation9 [shape = 'u8[262144]{0}', space=vmem, size = 0x40000, scoped, tag = 'input window, operand 3, single buffered']
    #allocation10 [shape = 's32[1]{0}', space=sflag, size = 0x4, scoped, tag = 'scoped memory for tpu_custom_call.1']
    #allocation11 [shape = 'u8[1024]{0}', space=vmem, size = 0x400, scoped, tag = 'output window, operand 0, single buffered']
    %9 = vsyncpa [#allocation4], 0
    %10 = vsyncpa [#allocation7], 0
    %11 = vsyncpa [#allocation10], 0
    %12 = vsyncpa [#allocation5], 0
    // Predicated region
    $region2: #{tpu_custom_call.1} parent=1 // pred_check
      _
    $region3: #{tpu_custom_call.1} parent=1 // pred_check_branch
      %14 = sbr.rel (0) target = $region5
    $region4: #{tpu_custom_call.1} parent=1 // pred_region
      %s16 = ssub.s32 128, 128
      %17 = vsyncadd [#allocation4], %s16
      %s19 = sshll.u32 [#allocation3], 4
      %s20 = int_to_ptr.vmem [resolvable:$true] %s19
      %22 = dma.hbm_to_vmem [thread:$0]  %s0, 128, %s20, [#allocation4]
    $region5: #{tpu_custom_call.1} parent=1 // pred_fallthru
      _
    // Predicated region
    $region6: #{tpu_custom_call.1} parent=1 // pred_check
      _
    $region7: #{tpu_custom_call.1} parent=1 // pred_check_branch
      %24 = sbr.rel (0) target = $region9
    $region8: #{tpu_custom_call.1} parent=1 // pred_region
      %s26 = ssub.s32 65536, 65536
      %27 = vsyncadd [#allocation7], %s26
      %s28 = sshll.u32 [#allocation6], 4
      %s29 = int_to_ptr.vmem [resolvable:$true] %s28
      %34 = dma.hbm_to_vmem [thread:$0]  %s1, 65536, %s29, [#allocation7], 512, 512, 32
    $region9: #{tpu_custom_call.1} parent=1 // pred_fallthru
      _
    // Predicated region
    $region10: #{tpu_custom_call.1} parent=1 // pred_check
      _
    $region11: #{tpu_custom_call.1} parent=1 // pred_check_branch
      %36 = sbr.rel (0) target = $region13
    $region12: #{tpu_custom_call.1} parent=1 // pred_region
      %s38 = ssub.s32 128, 128
      %39 = vsyncadd [#allocation7], %s38
      %s41 = sshll.u32 [#allocation8], 4
      %s42 = int_to_ptr.vmem [resolvable:$true] %s41
      %44 = dma.hbm_to_vmem [thread:$0]  %s2, 128, %s42, [#allocation7]
    $region13: #{tpu_custom_call.1} parent=1 // pred_fallthru
      _
    // Predicated region
    $region14: #{tpu_custom_call.1} parent=1 // pred_check
      _
    $region15: #{tpu_custom_call.1} parent=1 // pred_check_branch
      %46 = sbr.rel (0) target = $region17
    $region16: #{tpu_custom_call.1} parent=1 // pred_region
      %s48 = ssub.s32 8192, 8192
      %49 = vsyncadd [#allocation10], %s48
      %s50 = sshll.u32 [#allocation9], 4
      %s51 = int_to_ptr.vmem [resolvable:$true] %s50
      %56 = dma.hbm_to_vmem [thread:$0]  %s3, 8192, %s51, [#allocation10], 64, 64, 4
    $region17: #{tpu_custom_call.1} parent=1 // pred_fallthru
      _
    // Predicated region
    $region18: #{tpu_custom_call.1} parent=1 // pred_check
      _
    $region19: #{tpu_custom_call.1} parent=1 // pred_check_branch
      %58 = sbr.rel (0) target = $region21
    $region20: #{tpu_custom_call.1} parent=1 // pred_region
      %59 = dma.done [#allocation4], 128
    $region21: #{tpu_custom_call.1} parent=1 // pred_fallthru
      _
    // Predicated region
    $region22: #{tpu_custom_call.1} parent=1 // pred_check
      _
    $region23: #{tpu_custom_call.1} parent=1 // pred_check_branch
      %61 = sbr.rel (0) target = $region25
    $region24: #{tpu_custom_call.1} parent=1 // pred_region
      %62 = dma.done [#allocation7], 65536
    $region25: #{tpu_custom_call.1} parent=1 // pred_fallthru
      _
    // Predicated region
    $region26: #{tpu_custom_call.1} parent=1 // pred_check
      _
    $region27: #{tpu_custom_call.1} parent=1 // pred_check_branch
      %64 = sbr.rel (0) target = $region29
    $region28: #{tpu_custom_call.1} parent=1 // pred_region
      %65 = dma.done [#allocation7], 128
    $region29: #{tpu_custom_call.1} parent=1 // pred_fallthru
      _
    // Predicated region
    $region30: #{tpu_custom_call.1} parent=1 // pred_check
      _
    $region31: #{tpu_custom_call.1} parent=1 // pred_check_branch
      %67 = sbr.rel (0) target = $region33
    $region32: #{tpu_custom_call.1} parent=1 // pred_region
      %68 = dma.done [#allocation10], 8192
    $region33: #{tpu_custom_call.1} parent=1 // pred_fallthru
      _
    %p70 = scmp.eq.s32.totalorder 0, 0
    // Predicated region
    $region34: #{tpu_custom_call.1} parent=1 // pred_check
      %p71 = pneg %p70
    $region35: #{tpu_custom_call.1} parent=1 // pred_check_branch
      %73 = sbr.rel (%p71) target = $region37
    $region36: #{tpu_custom_call.1} parent=1 // pred_region
      %74 = vst [vmem:[#allocation2] sm:$0xff] 0.0
      %75 = vst [vmem:[#allocation2 + $0x8] sm:$0xff] 0.0
    $region37: #{tpu_custom_call.1} parent=1 // pred_fallthru
      _
    %s76 = smul.u32 0, 1024
    %v77 = vld [vmem:[#allocation2] sm:$0xff]
    %v78 = vld [vmem:[#allocation2 + $0x8] sm:$0xff]
    %s79 = sshra.s32 %s76, 7
    %s80 = sand.u32 %s76, 127
    %s81 = scalar_lea.vmem [#allocation3], %s79
    %v82 = vld [vmem:[%s81] sm:$0xff]
    %v83 = vld [vmem:[#allocation6] sm:$0xff]
    %v84 = vld [vmem:[#allocation6 + $0x8] sm:$0xff]
    %v85 = vld [vmem:[#allocation6 + $0x10] sm:$0xff]
    %v86 = vld [vmem:[#allocation6 + $0x18] sm:$0xff]
    %v87 = vld [vmem:[#allocation6 + $0x20] sm:$0xff]
    %v88 = vld [vmem:[#allocation6 + $0x28] sm:$0xff]
    %v89 = vld [vmem:[#allocation6 + $0x30] sm:$0xff]
    %v90 = vld [vmem:[#allocation6 + $0x38] sm:$0xff]
    %v91 = vld [vmem:[#allocation6 + $0x40] sm:$0xff]
    %v92 = vld [vmem:[#allocation6 + $0x48] sm:$0xff]
    %v93 = vld [vmem:[#allocation6 + $0x50] sm:$0xff]
    %v94 = vld [vmem:[#allocation6 + $0x58] sm:$0xff]
    %v95 = vld [vmem:[#allocation6 + $0x60] sm:$0xff]
    %v96 = vld [vmem:[#allocation6 + $0x68] sm:$0xff]
    %v97 = vld [vmem:[#allocation6 + $0x70] sm:$0xff]
    %v98 = vld [vmem:[#allocation6 + $0x78] sm:$0xff]
    %v99 = vld [vmem:[#allocation6 + $0x80] sm:$0xff]
    %v100 = vld [vmem:[#allocation6 + $0x88] sm:$0xff]
    %v101 = vld [vmem:[#allocation6 + $0x90] sm:$0xff]
    %v102 = vld [vmem:[#allocation6 + $0x98] sm:$0xff]
    %v103 = vld [vmem:[#allocation6 + $0xa0] sm:$0xff]
    %v104 = vld [vmem:[#allocation6 + $0xa8] sm:$0xff]
    %v105 = vld [vmem:[#allocation6 + $0xb0] sm:$0xff]
    %v106 = vld [vmem:[#allocation6 + $0xb8] sm:$0xff]
    %v107 = vld [vmem:[#allocation6 + $0xc0] sm:$0xff]
    %v108 = vld [vmem:[#allocation6 + $0xc8] sm:$0xff]
    %v109 = vld [vmem:[#allocation6 + $0xd0] sm:$0xff]
    %v110 = vld [vmem:[#allocation6 + $0xd8] sm:$0xff]
    %v111 = vld [vmem:[#allocation6 + $0xe0] sm:$0xff]
    %v112 = vld [vmem:[#allocation6 + $0xe8] sm:$0xff]
    %v113 = vld [vmem:[#allocation6 + $0xf0] sm:$0xff]
    %v114 = vld [vmem:[#allocation6 + $0xf8] sm:$0xff]
    %v115 = vld [vmem:[#allocation6 + $0x100] sm:$0xff]
    %v116 = vld [vmem:[#allocation6 + $0x108] sm:$0xff]
    %v117 = vld [vmem:[#allocation6 + $0x110] sm:$0xff]
    %v118 = vld [vmem:[#allocation6 + $0x118] sm:$0xff]
    %v119 = vld [vmem:[#allocation6 + $0x120] sm:$0xff]
    %v120 = vld [vmem:[#allocation6 + $0x128] sm:$0xff]
    %v121 = vld [vmem:[#allocation6 + $0x130] sm:$0xff]
    %v122 = vld [vmem:[#allocation6 + $0x138] sm:$0xff]
    %v123 = vld [vmem:[#allocation6 + $0x140] sm:$0xff]
    %v124 = vld [vmem:[#allocation6 + $0x148] sm:$0xff]
    %v125 = vld [vmem:[#allocation6 + $0x150] sm:$0xff]
    %v126 = vld [vmem:[#allocation6 + $0x158] sm:$0xff]
    %v127 = vld [vmem:[#allocation6 + $0x160] sm:$0xff]
    %v128 = vld [vmem:[#allocation6 + $0x168] sm:$0xff]
    %v129 = vld [vmem:[#allocation6 + $0x170] sm:$0xff]
    %v130 = vld [vmem:[#allocation6 + $0x178] sm:$0xff]
    %v131 = vld [vmem:[#allocation6 + $0x180] sm:$0xff]
    %v132 = vld [vmem:[#allocation6 + $0x188] sm:$0xff]
    %v133 = vld [vmem:[#allocation6 + $0x190] sm:$0xff]
    %v134 = vld [vmem:[#allocation6 + $0x198] sm:$0xff]
    %v135 = vld [vmem:[#allocation6 + $0x1a0] sm:$0xff]
    %v136 = vld [vmem:[#allocation6 + $0x1a8] sm:$0xff]
    %v137 = vld [vmem:[#allocation6 + $0x1b0] sm:$0xff]
    %v138 = vld [vmem:[#allocation6 + $0x1b8] sm:$0xff]
    %v139 = vld [vmem:[#allocation6 + $0x1c0] sm:$0xff]
    %v140 = vld [vmem:[#allocation6 + $0x1c8] sm:$0xff]
    %v141 = vld [vmem:[#allocation6 + $0x1d0] sm:$0xff]
    %v142 = vld [vmem:[#allocation6 + $0x1d8] sm:$0xff]
    %v143 = vld [vmem:[#allocation6 + $0x1e0] sm:$0xff]
    %v144 = vld [vmem:[#allocation6 + $0x1e8] sm:$0xff]
    %v145 = vld [vmem:[#allocation6 + $0x1f0] sm:$0xff]
    %v146 = vld [vmem:[#allocation6 + $0x1f8] sm:$0xff]
    %v147 = vld [vmem:[#allocation6 + $0x200] sm:$0xff]
    %v148 = vld [vmem:[#allocation6 + $0x208] sm:$0xff]
    %v149 = vld [vmem:[#allocation6 + $0x210] sm:$0xff]
    %v150 = vld [vmem:[#allocation6 + $0x218] sm:$0xff]
    %v151 = vld [vmem:[#allocation6 + $0x220] sm:$0xff]
    %v152 = vld [vmem:[#allocation6 + $0x228] sm:$0xff]
    %v153 = vld [vmem:[#allocation6 + $0x230] sm:$0xff]
    %v154 = vld [vmem:[#allocation6 + $0x238] sm:$0xff]
    %v155 = vld [vmem:[#allocation6 + $0x240] sm:$0xff]
    %v156 = vld [vmem:[#allocation6 + $0x248] sm:$0xff]
    %v157 = vld [vmem:[#allocation6 + $0x250] sm:$0xff]
    %v158 = vld [vmem:[#allocation6 + $0x258] sm:$0xff]
    %v159 = vld [vmem:[#allocation6 + $0x260] sm:$0xff]
    %v160 = vld [vmem:[#allocation6 + $0x268] sm:$0xff]
    %v161 = vld [vmem:[#allocation6 + $0x270] sm:$0xff]
    %v162 = vld [vmem:[#allocation6 + $0x278] sm:$0xff]
    %v163 = vld [vmem:[#allocation6 + $0x280] sm:$0xff]
    %v164 = vld [vmem:[#allocation6 + $0x288] sm:$0xff]
    %v165 = vld [vmem:[#allocation6 + $0x290] sm:$0xff]
    %v166 = vld [vmem:[#allocation6 + $0x298] sm:$0xff]
    %v167 = vld [vmem:[#allocation6 + $0x2a0] sm:$0xff]
    %v168 = vld [vmem:[#allocation6 + $0x2a8] sm:$0xff]
    %v169 = vld [vmem:[#allocation6 + $0x2b0] sm:$0xff]
    %v170 = vld [vmem:[#allocation6 + $0x2b8] sm:$0xff]
    %v171 = vld [vmem:[#allocation6 + $0x2c0] sm:$0xff]
    %v172 = vld [vmem:[#allocation6 + $0x2c8] sm:$0xff]
    %v173 = vld [vmem:[#allocation6 + $0x2d0] sm:$0xff]
    %v174 = vld [vmem:[#allocation6 + $0x2d8] sm:$0xff]
    %v175 = vld [vmem:[#allocation6 + $0x2e0] sm:$0xff]
    %v176 = vld [vmem:[#allocation6 + $0x2e8] sm:$0xff]
    %v177 = vld [vmem:[#allocation6 + $0x2f0] sm:$0xff]
    %v178 = vld [vmem:[#allocation6 + $0x2f8] sm:$0xff]
    %v179 = vld [vmem:[#allocation6 + $0x300] sm:$0xff]
    %v180 = vld [vmem:[#allocation6 + $0x308] sm:$0xff]
    %v181 = vld [vmem:[#allocation6 + $0x310] sm:$0xff]
    %v182 = vld [vmem:[#allocation6 + $0x318] sm:$0xff]
    %v183 = vld [vmem:[#allocation6 + $0x320] sm:$0xff]
    %v184 = vld [vmem:[#allocation6 + $0x328] sm:$0xff]
    %v185 = vld [vmem:[#allocation6 + $0x330] sm:$0xff]
    %v186 = vld [vmem:[#allocation6 + $0x338] sm:$0xff]
    %v187 = vld [vmem:[#allocation6 + $0x340] sm:$0xff]
    %v188 = vld [vmem:[#allocation6 + $0x348] sm:$0xff]
    %v189 = vld [vmem:[#allocation6 + $0x350] sm:$0xff]
    %v190 = vld [vmem:[#allocation6 + $0x358] sm:$0xff]
    %v191 = vld [vmem:[#allocation6 + $0x360] sm:$0xff]
    %v192 = vld [vmem:[#allocation6 + $0x368] sm:$0xff]
    %v193 = vld [vmem:[#allocation6 + $0x370] sm:$0xff]
    %v194 = vld [vmem:[#allocation6 + $0x378] sm:$0xff]
    %v195 = vld [vmem:[#allocation6 + $0x380] sm:$0xff]
    %v196 = vld [vmem:[#allocation6 + $0x388] sm:$0xff]
    %v197 = vld [vmem:[#allocation6 + $0x390] sm:$0xff]
    %v198 = vld [vmem:[#allocation6 + $0x398] sm:$0xff]
    %v199 = vld [vmem:[#allocation6 + $0x3a0] sm:$0xff]
    %v200 = vld [vmem:[#allocation6 + $0x3a8] sm:$0xff]
    %v201 = vld [vmem:[#allocation6 + $0x3b0] sm:$0xff]
    %v202 = vld [vmem:[#allocation6 + $0x3b8] sm:$0xff]
    %v203 = vld [vmem:[#allocation6 + $0x3c0] sm:$0xff]
    %v204 = vld [vmem:[#allocation6 + $0x3c8] sm:$0xff]
    %v205 = vld [vmem:[#allocation6 + $0x3d0] sm:$0xff]
    %v206 = vld [vmem:[#allocation6 + $0x3d8] sm:$0xff]
    %v207 = vld [vmem:[#allocation6 + $0x3e0] sm:$0xff]
    %v208 = vld [vmem:[#allocation6 + $0x3e8] sm:$0xff]
    %v209 = vld [vmem:[#allocation6 + $0x3f0] sm:$0xff]
    %v210 = vld [vmem:[#allocation6 + $0x3f8] sm:$0xff]
    %v211 = vld [vmem:[#allocation6 + $0x400] sm:$0xff]
    %v212 = vld [vmem:[#allocation6 + $0x408] sm:$0xff]
    %v213 = vld [vmem:[#allocation6 + $0x410] sm:$0xff]
    %v214 = vld [vmem:[#allocation6 + $0x418] sm:$0xff]
    %v215 = vld [vmem:[#allocation6 + $0x420] sm:$0xff]
    %v216 = vld [vmem:[#allocation6 + $0x428] sm:$0xff]
    %v217 = vld [vmem:[#allocation6 + $0x430] sm:$0xff]
    %v218 = vld [vmem:[#allocation6 + $0x438] sm:$0xff]
    %v219 = vld [vmem:[#allocation6 + $0x440] sm:$0xff]
    %v220 = vld [vmem:[#allocation6 + $0x448] sm:$0xff]
    %v221 = vld [vmem:[#allocation6 + $0x450] sm:$0xff]
    %v222 = vld [vmem:[#allocation6 + $0x458] sm:$0xff]
    %v223 = vld [vmem:[#allocation6 + $0x460] sm:$0xff]
    %v224 = vld [vmem:[#allocation6 + $0x468] sm:$0xff]
    %v225 = vld [vmem:[#allocation6 + $0x470] sm:$0xff]
    %v226 = vld [vmem:[#allocation6 + $0x478] sm:$0xff]
    %v227 = vld [vmem:[#allocation6 + $0x480] sm:$0xff]
    %v228 = vld [vmem:[#allocation6 + $0x488] sm:$0xff]
    %v229 = vld [vmem:[#allocation6 + $0x490] sm:$0xff]
    %v230 = vld [vmem:[#allocation6 + $0x498] sm:$0xff]
    %v231 = vld [vmem:[#allocation6 + $0x4a0] sm:$0xff]
    %v232 = vld [vmem:[#allocation6 + $0x4a8] sm:$0xff]
    %v233 = vld [vmem:[#allocation6 + $0x4b0] sm:$0xff]
    %v234 = vld [vmem:[#allocation6 + $0x4b8] sm:$0xff]
    %v235 = vld [vmem:[#allocation6 + $0x4c0] sm:$0xff]
    %v236 = vld [vmem:[#allocation6 + $0x4c8] sm:$0xff]
    %v237 = vld [vmem:[#allocation6 + $0x4d0] sm:$0xff]
    %v238 = vld [vmem:[#allocation6 + $0x4d8] sm:$0xff]
    %v239 = vld [vmem:[#allocation6 + $0x4e0] sm:$0xff]
    %v240 = vld [vmem:[#allocation6 + $0x4e8] sm:$0xff]
    %v241 = vld [vmem:[#allocation6 + $0x4f0] sm:$0xff]
    %v242 = vld [vmem:[#allocation6 + $0x4f8] sm:$0xff]
    %v243 = vld [vmem:[#allocation6 + $0x500] sm:$0xff]
    %v244 = vld [vmem:[#allocation6 + $0x508] sm:$0xff]
    %v245 = vld [vmem:[#allocation6 + $0x510] sm:$0xff]
    %v246 = vld [vmem:[#allocation6 + $0x518] sm:$0xff]
    %v247 = vld [vmem:[#allocation6 + $0x520] sm:$0xff]
    %v248 = vld [vmem:[#allocation6 + $0x528] sm:$0xff]
    %v249 = vld [vmem:[#allocation6 + $0x530] sm:$0xff]
    %v250 = vld [vmem:[#allocation6 + $0x538] sm:$0xff]
    %v251 = vld [vmem:[#allocation6 + $0x540] sm:$0xff]
    %v252 = vld [vmem:[#allocation6 + $0x548] sm:$0xff]
    %v253 = vld [vmem:[#allocation6 + $0x550] sm:$0xff]
    %v254 = vld [vmem:[#allocation6 + $0x558] sm:$0xff]
    %v255 = vld [vmem:[#allocation6 + $0x560] sm:$0xff]
    %v256 = vld [vmem:[#allocation6 + $0x568] sm:$0xff]
    %v257 = vld [vmem:[#allocation6 + $0x570] sm:$0xff]
    %v258 = vld [vmem:[#allocation6 + $0x578] sm:$0xff]
    %v259 = vld [vmem:[#allocation6 + $0x580] sm:$0xff]
    %v260 = vld [vmem:[#allocation6 + $0x588] sm:$0xff]
    %v261 = vld [vmem:[#allocation6 + $0x590] sm:$0xff]
    %v262 = vld [vmem:[#allocation6 + $0x598] sm:$0xff]
    %v263 = vld [vmem:[#allocation6 + $0x5a0] sm:$0xff]
    %v264 = vld [vmem:[#allocation6 + $0x5a8] sm:$0xff]
    %v265 = vld [vmem:[#allocation6 + $0x5b0] sm:$0xff]
    %v266 = vld [vmem:[#allocation6 + $0x5b8] sm:$0xff]
    %v267 = vld [vmem:[#allocation6 + $0x5c0] sm:$0xff]
    %v268 = vld [vmem:[#allocation6 + $0x5c8] sm:$0xff]
    %v269 = vld [vmem:[#allocation6 + $0x5d0] sm:$0xff]
    %v270 = vld [vmem:[#allocation6 + $0x5d8] sm:$0xff]
    %v271 = vld [vmem:[#allocation6 + $0x5e0] sm:$0xff]
    %v272 = vld [vmem:[#allocation6 + $0x5e8] sm:$0xff]
    %v273 = vld [vmem:[#allocation6 + $0x5f0] sm:$0xff]
    %v274 = vld [vmem:[#allocation6 + $0x5f8] sm:$0xff]
    %v275 = vld [vmem:[#allocation6 + $0x600] sm:$0xff]
    %v276 = vld [vmem:[#allocation6 + $0x608] sm:$0xff]
    %v277 = vld [vmem:[#allocation6 + $0x610] sm:$0xff]
    %v278 = vld [vmem:[#allocation6 + $0x618] sm:$0xff]
    %v279 = vld [vmem:[#allocation6 + $0x620] sm:$0xff]
    %v280 = vld [vmem:[#allocation6 + $0x628] sm:$0xff]
    %v281 = vld [vmem:[#allocation6 + $0x630] sm:$0xff]
    %v282 = vld [vmem:[#allocation6 + $0x638] sm:$0xff]
    %v283 = vld [vmem:[#allocation6 + $0x640] sm:$0xff]
    %v284 = vld [vmem:[#allocation6 + $0x648] sm:$0xff]
    %v285 = vld [vmem:[#allocation6 + $0x650] sm:$0xff]
    %v286 = vld [vmem:[#allocation6 + $0x658] sm:$0xff]
    %v287 = vld [vmem:[#allocation6 + $0x660] sm:$0xff]
    %v288 = vld [vmem:[#allocation6 + $0x668] sm:$0xff]
    %v289 = vld [vmem:[#allocation6 + $0x670] sm:$0xff]
    %v290 = vld [vmem:[#allocation6 + $0x678] sm:$0xff]
    %v291 = vld [vmem:[#allocation6 + $0x680] sm:$0xff]
    %v292 = vld [vmem:[#allocation6 + $0x688] sm:$0xff]
    %v293 = vld [vmem:[#allocation6 + $0x690] sm:$0xff]
    %v294 = vld [vmem:[#allocation6 + $0x698] sm:$0xff]
    %v295 = vld [vmem:[#allocation6 + $0x6a0] sm:$0xff]
    %v296 = vld [vmem:[#allocation6 + $0x6a8] sm:$0xff]
    %v297 = vld [vmem:[#allocation6 + $0x6b0] sm:$0xff]
    %v298 = vld [vmem:[#allocation6 + $0x6b8] sm:$0xff]
    %v299 = vld [vmem:[#allocation6 + $0x6c0] sm:$0xff]
    %v300 = vld [vmem:[#allocation6 + $0x6c8] sm:$0xff]
    %v301 = vld [vmem:[#allocation6 + $0x6d0] sm:$0xff]
    %v302 = vld [vmem:[#allocation6 + $0x6d8] sm:$0xff]
    %v303 = vld [vmem:[#allocation6 + $0x6e0] sm:$0xff]
    %v304 = vld [vmem:[#allocation6 + $0x6e8] sm:$0xff]
    %v305 = vld [vmem:[#allocation6 + $0x6f0] sm:$0xff]
    %v306 = vld [vmem:[#allocation6 + $0x6f8] sm:$0xff]
    %v307 = vld [vmem:[#allocation6 + $0x700] sm:$0xff]
    %v308 = vld [vmem:[#allocation6 + $0x708] sm:$0xff]
    %v309 = vld [vmem:[#allocation6 + $0x710] sm:$0xff]
    %v310 = vld [vmem:[#allocation6 + $0x718] sm:$0xff]
    %v311 = vld [vmem:[#allocation6 + $0x720] sm:$0xff]
    %v312 = vld [vmem:[#allocation6 + $0x728] sm:$0xff]
    %v313 = vld [vmem:[#allocation6 + $0x730] sm:$0xff]
    %v314 = vld [vmem:[#allocation6 + $0x738] sm:$0xff]
    %v315 = vld [vmem:[#allocation6 + $0x740] sm:$0xff]
    %v316 = vld [vmem:[#allocation6 + $0x748] sm:$0xff]
    %v317 = vld [vmem:[#allocation6 + $0x750] sm:$0xff]
    %v318 = vld [vmem:[#allocation6 + $0x758] sm:$0xff]
    %v319 = vld [vmem:[#allocation6 + $0x760] sm:$0xff]
    %v320 = vld [vmem:[#allocation6 + $0x768] sm:$0xff]
    %v321 = vld [vmem:[#allocation6 + $0x770] sm:$0xff]
    %v322 = vld [vmem:[#allocation6 + $0x778] sm:$0xff]
    %v323 = vld [vmem:[#allocation6 + $0x780] sm:$0xff]
    %v324 = vld [vmem:[#allocation6 + $0x788] sm:$0xff]
    %v325 = vld [vmem:[#allocation6 + $0x790] sm:$0xff]
    %v326 = vld [vmem:[#allocation6 + $0x798] sm:$0xff]
    %v327 = vld [vmem:[#allocation6 + $0x7a0] sm:$0xff]
    %v328 = vld [vmem:[#allocation6 + $0x7a8] sm:$0xff]
    %v329 = vld [vmem:[#allocation6 + $0x7b0] sm:$0xff]
    %v330 = vld [vmem:[#allocation6 + $0x7b8] sm:$0xff]
    %v331 = vld [vmem:[#allocation6 + $0x7c0] sm:$0xff]
    %v332 = vld [vmem:[#allocation6 + $0x7c8] sm:$0xff]
    %v333 = vld [vmem:[#allocation6 + $0x7d0] sm:$0xff]
    %v334 = vld [vmem:[#allocation6 + $0x7d8] sm:$0xff]
    %v335 = vld [vmem:[#allocation6 + $0x7e0] sm:$0xff]
    %v336 = vld [vmem:[#allocation6 + $0x7e8] sm:$0xff]
    %v337 = vld [vmem:[#allocation6 + $0x7f0] sm:$0xff]
    %v338 = vld [vmem:[#allocation6 + $0x7f8] sm:$0xff]
    %v339 = vld [vmem:[#allocation6 + $0x800] sm:$0xff]
    %v340 = vld [vmem:[#allocation6 + $0x808] sm:$0xff]
    %v341 = vld [vmem:[#allocation6 + $0x810] sm:$0xff]
    %v342 = vld [vmem:[#allocation6 + $0x818] sm:$0xff]
    %v343 = vld [vmem:[#allocation6 + $0x820] sm:$0xff]
    %v344 = vld [vmem:[#allocation6 + $0x828] sm:$0xff]
    %v345 = vld [vmem:[#allocation6 + $0x830] sm:$0xff]
    %v346 = vld [vmem:[#allocation6 + $0x838] sm:$0xff]
    %v347 = vld [vmem:[#allocation6 + $0x840] sm:$0xff]
    %v348 = vld [vmem:[#allocation6 + $0x848] sm:$0xff]
    %v349 = vld [vmem:[#allocation6 + $0x850] sm:$0xff]
    %v350 = vld [vmem:[#allocation6 + $0x858] sm:$0xff]
    %v351 = vld [vmem:[#allocation6 + $0x860] sm:$0xff]
    %v352 = vld [vmem:[#allocation6 + $0x868] sm:$0xff]
    %v353 = vld [vmem:[#allocation6 + $0x870] sm:$0xff]
    %v354 = vld [vmem:[#allocation6 + $0x878] sm:$0xff]
    %v355 = vld [vmem:[#allocation6 + $0x880] sm:$0xff]
    %v356 = vld [vmem:[#allocation6 + $0x888] sm:$0xff]
    %v357 = vld [vmem:[#allocation6 + $0x890] sm:$0xff]
    %v358 = vld [vmem:[#allocation6 + $0x898] sm:$0xff]
    %v359 = vld [vmem:[#allocation6 + $0x8a0] sm:$0xff]
    %v360 = vld [vmem:[#allocation6 + $0x8a8] sm:$0xff]
    %v361 = vld [vmem:[#allocation6 + $0x8b0] sm:$0xff]
    %v362 = vld [vmem:[#allocation6 + $0x8b8] sm:$0xff]
    %v363 = vld [vmem:[#allocation6 + $0x8c0] sm:$0xff]
    %v364 = vld [vmem:[#allocation6 + $0x8c8] sm:$0xff]
    %v365 = vld [vmem:[#allocation6 + $0x8d0] sm:$0xff]
    %v366 = vld [vmem:[#allocation6 + $0x8d8] sm:$0xff]
    %v367 = vld [vmem:[#allocation6 + $0x8e0] sm:$0xff]
    %v368 = vld [vmem:[#allocation6 + $0x8e8] sm:$0xff]
    %v369 = vld [vmem:[#allocation6 + $0x8f0] sm:$0xff]
    %v370 = vld [vmem:[#allocation6 + $0x8f8] sm:$0xff]
    %v371 = vld [vmem:[#allocation6 + $0x900] sm:$0xff]
    %v372 = vld [vmem:[#allocation6 + $0x908] sm:$0xff]
    %v373 = vld [vmem:[#allocation6 + $0x910] sm:$0xff]
    %v374 = vld [vmem:[#allocation6 + $0x918] sm:$0xff]
    %v375 = vld [vmem:[#allocation6 + $0x920] sm:$0xff]
    %v376 = vld [vmem:[#allocation6 + $0x928] sm:$0xff]
    %v377 = vld [vmem:[#allocation6 + $0x930] sm:$0xff]
    %v378 = vld [vmem:[#allocation6 + $0x938] sm:$0xff]
    %v379 = vld [vmem:[#allocation6 + $0x940] sm:$0xff]
    %v380 = vld [vmem:[#allocation6 + $0x948] sm:$0xff]
    %v381 = vld [vmem:[#allocation6 + $0x950] sm:$0xff]
    %v382 = vld [vmem:[#allocation6 + $0x958] sm:$0xff]
    %v383 = vld [vmem:[#allocation6 + $0x960] sm:$0xff]
    %v384 = vld [vmem:[#allocation6 + $0x968] sm:$0xff]
    %v385 = vld [vmem:[#allocation6 + $0x970] sm:$0xff]
    %v386 = vld [vmem:[#allocation6 + $0x978] sm:$0xff]
    %v387 = vld [vmem:[#allocation6 + $0x980] sm:$0xff]
    %v388 = vld [vmem:[#allocation6 + $0x988] sm:$0xff]
    %v389 = vld [vmem:[#allocation6 + $0x990] sm:$0xff]
    %v390 = vld [vmem:[#allocation6 + $0x998] sm:$0xff]
    %v391 = vld [vmem:[#allocation6 + $0x9a0] sm:$0xff]
    %v392 = vld [vmem:[#allocation6 + $0x9a8] sm:$0xff]
    %v393 = vld [vmem:[#allocation6 + $0x9b0] sm:$0xff]
    %v394 = vld [vmem:[#allocation6 + $0x9b8] sm:$0xff]
    %v395 = vld [vmem:[#allocation6 + $0x9c0] sm:$0xff]
    %v396 = vld [vmem:[#allocation6 + $0x9c8] sm:$0xff]
    %v397 = vld [vmem:[#allocation6 + $0x9d0] sm:$0xff]
    %v398 = vld [vmem:[#allocation6 + $0x9d8] sm:$0xff]
    %v399 = vld [vmem:[#allocation6 + $0x9e0] sm:$0xff]
    %v400 = vld [vmem:[#allocation6 + $0x9e8] sm:$0xff]
    %v401 = vld [vmem:[#allocation6 + $0x9f0] sm:$0xff]
    %v402 = vld [vmem:[#allocation6 + $0x9f8] sm:$0xff]
    %v403 = vld [vmem:[#allocation6 + $0xa00] sm:$0xff]
    %v404 = vld [vmem:[#allocation6 + $0xa08] sm:$0xff]
    %v405 = vld [vmem:[#allocation6 + $0xa10] sm:$0xff]
    %v406 = vld [vmem:[#allocation6 + $0xa18] sm:$0xff]
    %v407 = vld [vmem:[#allocation6 + $0xa20] sm:$0xff]
    %v408 = vld [vmem:[#allocation6 + $0xa28] sm:$0xff]
    %v409 = vld [vmem:[#allocation6 + $0xa30] sm:$0xff]
    %v410 = vld [vmem:[#allocation6 + $0xa38] sm:$0xff]
    %v411 = vld [vmem:[#allocation6 + $0xa40] sm:$0xff]
    %v412 = vld [vmem:[#allocation6 + $0xa48] sm:$0xff]
    %v413 = vld [vmem:[#allocation6 + $0xa50] sm:$0xff]
    %v414 = vld [vmem:[#allocation6 + $0xa58] sm:$0xff]
    %v415 = vld [vmem:[#allocation6 + $0xa60] sm:$0xff]
    %v416 = vld [vmem:[#allocation6 + $0xa68] sm:$0xff]
    %v417 = vld [vmem:[#allocation6 + $0xa70] sm:$0xff]
    %v418 = vld [vmem:[#allocation6 + $0xa78] sm:$0xff]
    %v419 = vld [vmem:[#allocation6 + $0xa80] sm:$0xff]
    %v420 = vld [vmem:[#allocation6 + $0xa88] sm:$0xff]
    %v421 = vld [vmem:[#allocation6 + $0xa90] sm:$0xff]
    %v422 = vld [vmem:[#allocation6 + $0xa98] sm:$0xff]
    %v423 = vld [vmem:[#allocation6 + $0xaa0] sm:$0xff]
    %v424 = vld [vmem:[#allocation6 + $0xaa8] sm:$0xff]
    %v425 = vld [vmem:[#allocation6 + $0xab0] sm:$0xff]
    %v426 = vld [vmem:[#allocation6 + $0xab8] sm:$0xff]
    %v427 = vld [vmem:[#allocation6 + $0xac0] sm:$0xff]
    %v428 = vld [vmem:[#allocation6 + $0xac8] sm:$0xff]
    %v429 = vld [vmem:[#allocation6 + $0xad0] sm:$0xff]
    %v430 = vld [vmem:[#allocation6 + $0xad8] sm:$0xff]
    %v431 = vld [vmem:[#allocation6 + $0xae0] sm:$0xff]
    %v432 = vld [vmem:[#allocation6 + $0xae8] sm:$0xff]
    %v433 = vld [vmem:[#allocation6 + $0xaf0] sm:$0xff]
    %v434 = vld [vmem:[#allocation6 + $0xaf8] sm:$0xff]
    %v435 = vld [vmem:[#allocation6 + $0xb00] sm:$0xff]
    %v436 = vld [vmem:[#allocation6 + $0xb08] sm:$0xff]
    %v437 = vld [vmem:[#allocation6 + $0xb10] sm:$0xff]
    %v438 = vld [vmem:[#allocation6 + $0xb18] sm:$0xff]
    %v439 = vld [vmem:[#allocation6 + $0xb20] sm:$0xff]
    %v440 = vld [vmem:[#allocation6 + $0xb28] sm:$0xff]
    %v441 = vld [vmem:[#allocation6 + $0xb30] sm:$0xff]
    %v442 = vld [vmem:[#allocation6 + $0xb38] sm:$0xff]
    %v443 = vld [vmem:[#allocation6 + $0xb40] sm:$0xff]
    %v444 = vld [vmem:[#allocation6 + $0xb48] sm:$0xff]
    %v445 = vld [vmem:[#allocation6 + $0xb50] sm:$0xff]
    %v446 = vld [vmem:[#allocation6 + $0xb58] sm:$0xff]
    %v447 = vld [vmem:[#allocation6 + $0xb60] sm:$0xff]
    %v448 = vld [vmem:[#allocation6 + $0xb68] sm:$0xff]
    %v449 = vld [vmem:[#allocation6 + $0xb70] sm:$0xff]
    %v450 = vld [vmem:[#allocation6 + $0xb78] sm:$0xff]
    %v451 = vld [vmem:[#allocation6 + $0xb80] sm:$0xff]
    %v452 = vld [vmem:[#allocation6 + $0xb88] sm:$0xff]
    %v453 = vld [vmem:[#allocation6 + $0xb90] sm:$0xff]
    %v454 = vld [vmem:[#allocation6 + $0xb98] sm:$0xff]
    %v455 = vld [vmem:[#allocation6 + $0xba0] sm:$0xff]
    %v456 = vld [vmem:[#allocation6 + $0xba8] sm:$0xff]
    %v457 = vld [vmem:[#allocation6 + $0xbb0] sm:$0xff]
    %v458 = vld [vmem:[#allocation6 + $0xbb8] sm:$0xff]
    %v459 = vld [vmem:[#allocation6 + $0xbc0] sm:$0xff]
    %v460 = vld [vmem:[#allocation6 + $0xbc8] sm:$0xff]
    %v461 = vld [vmem:[#allocation6 + $0xbd0] sm:$0xff]
    %v462 = vld [vmem:[#allocation6 + $0xbd8] sm:$0xff]
    %v463 = vld [vmem:[#allocation6 + $0xbe0] sm:$0xff]
    %v464 = vld [vmem:[#allocation6 + $0xbe8] sm:$0xff]
    %v465 = vld [vmem:[#allocation6 + $0xbf0] sm:$0xff]
    %v466 = vld [vmem:[#allocation6 + $0xbf8] sm:$0xff]
    %v467 = vld [vmem:[#allocation6 + $0xc00] sm:$0xff]
    %v468 = vld [vmem:[#allocation6 + $0xc08] sm:$0xff]
    %v469 = vld [vmem:[#allocation6 + $0xc10] sm:$0xff]
    %v470 = vld [vmem:[#allocation6 + $0xc18] sm:$0xff]
    %v471 = vld [vmem:[#allocation6 + $0xc20] sm:$0xff]
    %v472 = vld [vmem:[#allocation6 + $0xc28] sm:$0xff]
    %v473 = vld [vmem:[#allocation6 + $0xc30] sm:$0xff]
    %v474 = vld [vmem:[#allocation6 + $0xc38] sm:$0xff]
    %v475 = vld [vmem:[#allocation6 + $0xc40] sm:$0xff]
    %v476 = vld [vmem:[#allocation6 + $0xc48] sm:$0xff]
    %v477 = vld [vmem:[#allocation6 + $0xc50] sm:$0xff]
    %v478 = vld [vmem:[#allocation6 + $0xc58] sm:$0xff]
    %v479 = vld [vmem:[#allocation6 + $0xc60] sm:$0xff]
    %v480 = vld [vmem:[#allocation6 + $0xc68] sm:$0xff]
    %v481 = vld [vmem:[#allocation6 + $0xc70] sm:$0xff]
    %v482 = vld [vmem:[#allocation6 + $0xc78] sm:$0xff]
    %v483 = vld [vmem:[#allocation6 + $0xc80] sm:$0xff]
    %v484 = vld [vmem:[#allocation6 + $0xc88] sm:$0xff]
    %v485 = vld [vmem:[#allocation6 + $0xc90] sm:$0xff]
    %v486 = vld [vmem:[#allocation6 + $0xc98] sm:$0xff]
    %v487 = vld [vmem:[#allocation6 + $0xca0] sm:$0xff]
    %v488 = vld [vmem:[#allocation6 + $0xca8] sm:$0xff]
    %v489 = vld [vmem:[#allocation6 + $0xcb0] sm:$0xff]
    %v490 = vld [vmem:[#allocation6 + $0xcb8] sm:$0xff]
    %v491 = vld [vmem:[#allocation6 + $0xcc0] sm:$0xff]
    %v492 = vld [vmem:[#allocation6 + $0xcc8] sm:$0xff]
    %v493 = vld [vmem:[#allocation6 + $0xcd0] sm:$0xff]
    %v494 = vld [vmem:[#allocation6 + $0xcd8] sm:$0xff]
    %v495 = vld [vmem:[#allocation6 + $0xce0] sm:$0xff]
    %v496 = vld [vmem:[#allocation6 + $0xce8] sm:$0xff]
    %v497 = vld [vmem:[#allocation6 + $0xcf0] sm:$0xff]
    %v498 = vld [vmem:[#allocation6 + $0xcf8] sm:$0xff]
    %v499 = vld [vmem:[#allocation6 + $0xd00] sm:$0xff]
    %v500 = vld [vmem:[#allocation6 + $0xd08] sm:$0xff]
    %v501 = vld [vmem:[#allocation6 + $0xd10] sm:$0xff]
    %v502 = vld [vmem:[#allocation6 + $0xd18] sm:$0xff]
    %v503 = vld [vmem:[#allocation6 + $0xd20] sm:$0xff]
    %v504 = vld [vmem:[#allocation6 + $0xd28] sm:$0xff]
    %v505 = vld [vmem:[#allocation6 + $0xd30] sm:$0xff]
    %v506 = vld [vmem:[#allocation6 + $0xd38] sm:$0xff]
    %v507 = vld [vmem:[#allocation6 + $0xd40] sm:$0xff]
    %v508 = vld [vmem:[#allocation6 + $0xd48] sm:$0xff]
    %v509 = vld [vmem:[#allocation6 + $0xd50] sm:$0xff]
    %v510 = vld [vmem:[#allocation6 + $0xd58] sm:$0xff]
    %v511 = vld [vmem:[#allocation6 + $0xd60] sm:$0xff]
    %v512 = vld [vmem:[#allocation6 + $0xd68] sm:$0xff]
    %v513 = vld [vmem:[#allocation6 + $0xd70] sm:$0xff]
    %v514 = vld [vmem:[#allocation6 + $0xd78] sm:$0xff]
    %v515 = vld [vmem:[#allocation6 + $0xd80] sm:$0xff]
    %v516 = vld [vmem:[#allocation6 + $0xd88] sm:$0xff]
    %v517 = vld [vmem:[#allocation6 + $0xd90] sm:$0xff]
    %v518 = vld [vmem:[#allocation6 + $0xd98] sm:$0xff]
    %v519 = vld [vmem:[#allocation6 + $0xda0] sm:$0xff]
    %v520 = vld [vmem:[#allocation6 + $0xda8] sm:$0xff]
    %v521 = vld [vmem:[#allocation6 + $0xdb0] sm:$0xff]
    %v522 = vld [vmem:[#allocation6 + $0xdb8] sm:$0xff]
    %v523 = vld [vmem:[#allocation6 + $0xdc0] sm:$0xff]
    %v524 = vld [vmem:[#allocation6 + $0xdc8] sm:$0xff]
    %v525 = vld [vmem:[#allocation6 + $0xdd0] sm:$0xff]
    %v526 = vld [vmem:[#allocation6 + $0xdd8] sm:$0xff]
    %v527 = vld [vmem:[#allocation6 + $0xde0] sm:$0xff]
    %v528 = vld [vmem:[#allocation6 + $0xde8] sm:$0xff]
    %v529 = vld [vmem:[#allocation6 + $0xdf0] sm:$0xff]
    %v530 = vld [vmem:[#allocation6 + $0xdf8] sm:$0xff]
    %v531 = vld [vmem:[#allocation6 + $0xe00] sm:$0xff]
    %v532 = vld [vmem:[#allocation6 + $0xe08] sm:$0xff]
    %v533 = vld [vmem:[#allocation6 + $0xe10] sm:$0xff]
    %v534 = vld [vmem:[#allocation6 + $0xe18] sm:$0xff]
    %v535 = vld [vmem:[#allocation6 + $0xe20] sm:$0xff]
    %v536 = vld [vmem:[#allocation6 + $0xe28] sm:$0xff]
    %v537 = vld [vmem:[#allocation6 + $0xe30] sm:$0xff]
    %v538 = vld [vmem:[#allocation6 + $0xe38] sm:$0xff]
    %v539 = vld [vmem:[#allocation6 + $0xe40] sm:$0xff]
    %v540 = vld [vmem:[#allocation6 + $0xe48] sm:$0xff]
    %v541 = vld [vmem:[#allocation6 + $0xe50] sm:$0xff]
    %v542 = vld [vmem:[#allocation6 + $0xe58] sm:$0xff]
    %v543 = vld [vmem:[#allocation6 + $0xe60] sm:$0xff]
    %v544 = vld [vmem:[#allocation6 + $0xe68] sm:$0xff]
    %v545 = vld [vmem:[#allocation6 + $0xe70] sm:$0xff]
    %v546 = vld [vmem:[#allocation6 + $0xe78] sm:$0xff]
    %v547 = vld [vmem:[#allocation6 + $0xe80] sm:$0xff]
    %v548 = vld [vmem:[#allocation6 + $0xe88] sm:$0xff]
    %v549 = vld [vmem:[#allocation6 + $0xe90] sm:$0xff]
    %v550 = vld [vmem:[#allocation6 + $0xe98] sm:$0xff]
    %v551 = vld [vmem:[#allocation6 + $0xea0] sm:$0xff]
    %v552 = vld [vmem:[#allocation6 + $0xea8] sm:$0xff]
    %v553 = vld [vmem:[#allocation6 + $0xeb0] sm:$0xff]
    %v554 = vld [vmem:[#allocation6 + $0xeb8] sm:$0xff]
    %v555 = vld [vmem:[#allocation6 + $0xec0] sm:$0xff]
    %v556 = vld [vmem:[#allocation6 + $0xec8] sm:$0xff]
    %v557 = vld [vmem:[#allocation6 + $0xed0] sm:$0xff]
    %v558 = vld [vmem:[#allocation6 + $0xed8] sm:$0xff]
    %v559 = vld [vmem:[#allocation6 + $0xee0] sm:$0xff]
    %v560 = vld [vmem:[#allocation6 + $0xee8] sm:$0xff]
    %v561 = vld [vmem:[#allocation6 + $0xef0] sm:$0xff]
    %v562 = vld [vmem:[#allocation6 + $0xef8] sm:$0xff]
    %v563 = vld [vmem:[#allocation6 + $0xf00] sm:$0xff]
    %v564 = vld [vmem:[#allocation6 + $0xf08] sm:$0xff]
    %v565 = vld [vmem:[#allocation6 + $0xf10] sm:$0xff]
    %v566 = vld [vmem:[#allocation6 + $0xf18] sm:$0xff]
    %v567 = vld [vmem:[#allocation6 + $0xf20] sm:$0xff]
    %v568 = vld [vmem:[#allocation6 + $0xf28] sm:$0xff]
    %v569 = vld [vmem:[#allocation6 + $0xf30] sm:$0xff]
    %v570 = vld [vmem:[#allocation6 + $0xf38] sm:$0xff]
    %v571 = vld [vmem:[#allocation6 + $0xf40] sm:$0xff]
    %v572 = vld [vmem:[#allocation6 + $0xf48] sm:$0xff]
    %v573 = vld [vmem:[#allocation6 + $0xf50] sm:$0xff]
    %v574 = vld [vmem:[#allocation6 + $0xf58] sm:$0xff]
    %v575 = vld [vmem:[#allocation6 + $0xf60] sm:$0xff]
    %v576 = vld [vmem:[#allocation6 + $0xf68] sm:$0xff]
    %v577 = vld [vmem:[#allocation6 + $0xf70] sm:$0xff]
    %v578 = vld [vmem:[#allocation6 + $0xf78] sm:$0xff]
    %v579 = vld [vmem:[#allocation6 + $0xf80] sm:$0xff]
    %v580 = vld [vmem:[#allocation6 + $0xf88] sm:$0xff]
    %v581 = vld [vmem:[#allocation6 + $0xf90] sm:$0xff]
    %v582 = vld [vmem:[#allocation6 + $0xf98] sm:$0xff]
    %v583 = vld [vmem:[#allocation6 + $0xfa0] sm:$0xff]
    %v584 = vld [vmem:[#allocation6 + $0xfa8] sm:$0xff]
    %v585 = vld [vmem:[#allocation6 + $0xfb0] sm:$0xff]
    %v586 = vld [vmem:[#allocation6 + $0xfb8] sm:$0xff]
    %v587 = vld [vmem:[#allocation6 + $0xfc0] sm:$0xff]
    %v588 = vld [vmem:[#allocation6 + $0xfc8] sm:$0xff]
    %v589 = vld [vmem:[#allocation6 + $0xfd0] sm:$0xff]
    %v590 = vld [vmem:[#allocation6 + $0xfd8] sm:$0xff]
    %v591 = vld [vmem:[#allocation6 + $0xfe0] sm:$0xff]
    %v592 = vld [vmem:[#allocation6 + $0xfe8] sm:$0xff]
    %v593 = vld [vmem:[#allocation6 + $0xff0] sm:$0xff]
    %v594 = vld [vmem:[#allocation6 + $0xff8] sm:$0xff]
    %v596 = vcombine.high %v82, %v82
    %v598 = vunpack.c.l.s4 1966171168
    %v599 = vunpack.c.0.s8 %v598
    %v600 = vlaneseq
    %v601 = vshrl.u32 %v600, 7
    %v602 = vsub.s32 %v599, %v601
    %v603 = vrot.slane %v82, %v602
    %v605 = vunpack.c.l.s4 1966171168
    %v606 = vunpack.c.0.s8 %v605
    %v607 = vlaneseq
    %v608 = vshrl.u32 %v607, 7
    %v609 = vsub.s32 %v606, %v608
    %v610 = vrot.slane %v596, %v609
    %v611 = vcombine.high %v603, %v603
    %v612 = vcombine.high %v610, %v610
    %v614 = vunpack.c.l.s4 1966171168
    %v615 = vunpack.c.0.s8 %v614
    %v616 = vlaneseq
    %v617 = vshrl.u32 %v616, 7
    %v618 = vsub.s32 %v615, %v617
    %v619 = vrot.slane %v603, %v618
    %v621 = vunpack.c.l.s4 1966171168
    %v622 = vunpack.c.0.s8 %v621
    %v623 = vlaneseq
    %v624 = vshrl.u32 %v623, 7
    %v625 = vsub.s32 %v622, %v624
    %v626 = vrot.slane %v610, %v625
    %v628 = vunpack.c.l.s4 1966171168
    %v629 = vunpack.c.0.s8 %v628
    %v630 = vlaneseq
    %v631 = vshrl.u32 %v630, 7
    %v632 = vsub.s32 %v629, %v631
    %v633 = vrot.slane %v611, %v632
    %v635 = vunpack.c.l.s4 1966171168
    %v636 = vunpack.c.0.s8 %v635
    %v637 = vlaneseq
    %v638 = vshrl.u32 %v637, 7
    %v639 = vsub.s32 %v636, %v638
    %v640 = vrot.slane %v612, %v639
    %v641 = vcombine.high %v619, %v619
    %v642 = vcombine.high %v626, %v626
    %v643 = vcombine.high %v633, %v633
    %v644 = vcombine.high %v640, %v640
    %v1165 = vunpack.c.l.b16 %v83
    %v1166 = vunpack.c.h.b16 %v83
    %v1167 = vunpack.c.l.b16 %v84
    %v1168 = vunpack.c.h.b16 %v84
    %v1169 = vunpack.c.l.b16 %v85
    %v1170 = vunpack.c.h.b16 %v85
    %v1171 = vunpack.c.l.b16 %v86
    %v1172 = vunpack.c.h.b16 %v86
    %v1173 = vunpack.c.l.b16 %v87
    %v1174 = vunpack.c.h.b16 %v87
    %v1175 = vunpack.c.l.b16 %v88
    %v1176 = vunpack.c.h.b16 %v88
    %v1177 = vunpack.c.l.b16 %v89
    %v1178 = vunpack.c.h.b16 %v89
    %v1179 = vunpack.c.l.b16 %v90
    %v1180 = vunpack.c.h.b16 %v90
    %v1181 = vunpack.c.l.b16 %v91
    %v1182 = vunpack.c.h.b16 %v91
    %v1183 = vunpack.c.l.b16 %v92
    %v1184 = vunpack.c.h.b16 %v92
    %v1185 = vunpack.c.l.b16 %v93
    %v1186 = vunpack.c.h.b16 %v93
    %v1187 = vunpack.c.l.b16 %v94
    %v1188 = vunpack.c.h.b16 %v94
    %v1189 = vunpack.c.l.b16 %v95
    %v1190 = vunpack.c.h.b16 %v95
    %v1191 = vunpack.c.l.b16 %v96
    %v1192 = vunpack.c.h.b16 %v96
    %v1193 = vunpack.c.l.b16 %v97
    %v1194 = vunpack.c.h.b16 %v97
    %v1195 = vunpack.c.l.b16 %v98
    %v1196 = vunpack.c.h.b16 %v98
    %v1197 = vunpack.c.l.b16 %v99
    %v1198 = vunpack.c.h.b16 %v99
    %v1199 = vunpack.c.l.b16 %v100
    %v1200 = vunpack.c.h.b16 %v100
    %v1201 = vunpack.c.l.b16 %v101
    %v1202 = vunpack.c.h.b16 %v101
    %v1203 = vunpack.c.l.b16 %v102
    %v1204 = vunpack.c.h.b16 %v102
    %v1205 = vunpack.c.l.b16 %v103
    %v1206 = vunpack.c.h.b16 %v103
    %v1207 = vunpack.c.l.b16 %v104
    %v1208 = vunpack.c.h.b16 %v104
    %v1209 = vunpack.c.l.b16 %v105
    %v1210 = vunpack.c.h.b16 %v105
    %v1211 = vunpack.c.l.b16 %v106
    %v1212 = vunpack.c.h.b16 %v106
    %v1213 = vunpack.c.l.b16 %v107
    %v1214 = vunpack.c.h.b16 %v107
    %v1215 = vunpack.c.l.b16 %v108
    %v1216 = vunpack.c.h.b16 %v108
    %v1217 = vunpack.c.l.b16 %v109
    %v1218 = vunpack.c.h.b16 %v109
    %v1219 = vunpack.c.l.b16 %v110
    %v1220 = vunpack.c.h.b16 %v110
    %v1221 = vunpack.c.l.b16 %v111
    %v1222 = vunpack.c.h.b16 %v111
    %v1223 = vunpack.c.l.b16 %v112
    %v1224 = vunpack.c.h.b16 %v112
    %v1225 = vunpack.c.l.b16 %v113
    %v1226 = vunpack.c.h.b16 %v113
    %v1227 = vunpack.c.l.b16 %v114
    %v1228 = vunpack.c.h.b16 %v114
    %v1229 = vunpack.c.l.b16 %v115
    %v1230 = vunpack.c.h.b16 %v115
    %v1231 = vunpack.c.l.b16 %v116
    %v1232 = vunpack.c.h.b16 %v116
    %v1233 = vunpack.c.l.b16 %v117
    %v1234 = vunpack.c.h.b16 %v117
    %v1235 = vunpack.c.l.b16 %v118
    %v1236 = vunpack.c.h.b16 %v118
    %v1237 = vunpack.c.l.b16 %v119
    %v1238 = vunpack.c.h.b16 %v119
    %v1239 = vunpack.c.l.b16 %v120
    %v1240 = vunpack.c.h.b16 %v120
    %v1241 = vunpack.c.l.b16 %v121
    %v1242 = vunpack.c.h.b16 %v121
    %v1243 = vunpack.c.l.b16 %v122
    %v1244 = vunpack.c.h.b16 %v122
    %v1245 = vunpack.c.l.b16 %v123
    %v1246 = vunpack.c.h.b16 %v123
    %v1247 = vunpack.c.l.b16 %v124
    %v1248 = vunpack.c.h.b16 %v124
    %v1249 = vunpack.c.l.b16 %v125
    %v1250 = vunpack.c.h.b16 %v125
    %v1251 = vunpack.c.l.b16 %v126
    %v1252 = vunpack.c.h.b16 %v126
    %v1253 = vunpack.c.l.b16 %v127
    %v1254 = vunpack.c.h.b16 %v127
    %v1255 = vunpack.c.l.b16 %v128
    %v1256 = vunpack.c.h.b16 %v128
    %v1257 = vunpack.c.l.b16 %v129
    %v1258 = vunpack.c.h.b16 %v129
    %v1259 = vunpack.c.l.b16 %v130
    %v1260 = vunpack.c.h.b16 %v130
    %v1261 = vunpack.c.l.b16 %v131
    %v1262 = vunpack.c.h.b16 %v131
    %v1263 = vunpack.c.l.b16 %v132
    %v1264 = vunpack.c.h.b16 %v132
    %v1265 = vunpack.c.l.b16 %v133
    %v1266 = vunpack.c.h.b16 %v133
    %v1267 = vunpack.c.l.b16 %v134
    %v1268 = vunpack.c.h.b16 %v134
    %v1269 = vunpack.c.l.b16 %v135
    %v1270 = vunpack.c.h.b16 %v135
    %v1271 = vunpack.c.l.b16 %v136
    %v1272 = vunpack.c.h.b16 %v136
    %v1273 = vunpack.c.l.b16 %v137
    %v1274 = vunpack.c.h.b16 %v137
    %v1275 = vunpack.c.l.b16 %v138
    %v1276 = vunpack.c.h.b16 %v138
    %v1277 = vunpack.c.l.b16 %v139
    %v1278 = vunpack.c.h.b16 %v139
    %v1279 = vunpack.c.l.b16 %v140
    %v1280 = vunpack.c.h.b16 %v140
    %v1281 = vunpack.c.l.b16 %v141
    %v1282 = vunpack.c.h.b16 %v141
    %v1283 = vunpack.c.l.b16 %v142
    %v1284 = vunpack.c.h.b16 %v142
    %v1285 = vunpack.c.l.b16 %v143
    %v1286 = vunpack.c.h.b16 %v143
    %v1287 = vunpack.c.l.b16 %v144
    %v1288 = vunpack.c.h.b16 %v144
    %v1289 = vunpack.c.l.b16 %v145
    %v1290 = vunpack.c.h.b16 %v145
    %v1291 = vunpack.c.l.b16 %v146
    %v1292 = vunpack.c.h.b16 %v146
    %v1293 = vunpack.c.l.b16 %v147
    %v1294 = vunpack.c.h.b16 %v147
    %v1295 = vunpack.c.l.b16 %v148
    %v1296 = vunpack.c.h.b16 %v148
    %v1297 = vunpack.c.l.b16 %v149
    %v1298 = vunpack.c.h.b16 %v149
    %v1299 = vunpack.c.l.b16 %v150
    %v1300 = vunpack.c.h.b16 %v150
    %v1301 = vunpack.c.l.b16 %v151
    %v1302 = vunpack.c.h.b16 %v151
    %v1303 = vunpack.c.l.b16 %v152
    %v1304 = vunpack.c.h.b16 %v152
    %v1305 = vunpack.c.l.b16 %v153
    %v1306 = vunpack.c.h.b16 %v153
    %v1307 = vunpack.c.l.b16 %v154
    %v1308 = vunpack.c.h.b16 %v154
    %v1309 = vunpack.c.l.b16 %v155
    %v1310 = vunpack.c.h.b16 %v155
    %v1311 = vunpack.c.l.b16 %v156
    %v1312 = vunpack.c.h.b16 %v156
    %v1313 = vunpack.c.l.b16 %v157
    %v1314 = vunpack.c.h.b16 %v157
    %v1315 = vunpack.c.l.b16 %v158
    %v1316 = vunpack.c.h.b16 %v158
    %v1317 = vunpack.c.l.b16 %v159
    %v1318 = vunpack.c.h.b16 %v159
    %v1319 = vunpack.c.l.b16 %v160
    %v1320 = vunpack.c.h.b16 %v160
    %v1321 = vunpack.c.l.b16 %v161
    %v1322 = vunpack.c.h.b16 %v161
    %v1323 = vunpack.c.l.b16 %v162
    %v1324 = vunpack.c.h.b16 %v162
    %v1325 = vunpack.c.l.b16 %v163
    %v1326 = vunpack.c.h.b16 %v163
    %v1327 = vunpack.c.l.b16 %v164
    %v1328 = vunpack.c.h.b16 %v164
    %v1329 = vunpack.c.l.b16 %v165
    %v1330 = vunpack.c.h.b16 %v165
    %v1331 = vunpack.c.l.b16 %v166
    %v1332 = vunpack.c.h.b16 %v166
    %v1333 = vunpack.c.l.b16 %v167
    %v1334 = vunpack.c.h.b16 %v167
    %v1335 = vunpack.c.l.b16 %v168
    %v1336 = vunpack.c.h.b16 %v168
    %v1337 = vunpack.c.l.b16 %v169
    %v1338 = vunpack.c.h.b16 %v169
    %v1339 = vunpack.c.l.b16 %v170
    %v1340 = vunpack.c.h.b16 %v170
    %v1341 = vunpack.c.l.b16 %v171
    %v1342 = vunpack.c.h.b16 %v171
    %v1343 = vunpack.c.l.b16 %v172
    %v1344 = vunpack.c.h.b16 %v172
    %v1345 = vunpack.c.l.b16 %v173
    %v1346 = vunpack.c.h.b16 %v173
    %v1347 = vunpack.c.l.b16 %v174
    %v1348 = vunpack.c.h.b16 %v174
    %v1349 = vunpack.c.l.b16 %v175
    %v1350 = vunpack.c.h.b16 %v175
    %v1351 = vunpack.c.l.b16 %v176
    %v1352 = vunpack.c.h.b16 %v176
    %v1353 = vunpack.c.l.b16 %v177
    %v1354 = vunpack.c.h.b16 %v177
    %v1355 = vunpack.c.l.b16 %v178
    %v1356 = vunpack.c.h.b16 %v178
    %v1357 = vunpack.c.l.b16 %v179
    %v1358 = vunpack.c.h.b16 %v179
    %v1359 = vunpack.c.l.b16 %v180
    %v1360 = vunpack.c.h.b16 %v180
    %v1361 = vunpack.c.l.b16 %v181
    %v1362 = vunpack.c.h.b16 %v181
    %v1363 = vunpack.c.l.b16 %v182
    %v1364 = vunpack.c.h.b16 %v182
    %v1365 = vunpack.c.l.b16 %v183
    %v1366 = vunpack.c.h.b16 %v183
    %v1367 = vunpack.c.l.b16 %v184
    %v1368 = vunpack.c.h.b16 %v184
    %v1369 = vunpack.c.l.b16 %v185
    %v1370 = vunpack.c.h.b16 %v185
    %v1371 = vunpack.c.l.b16 %v186
    %v1372 = vunpack.c.h.b16 %v186
    %v1373 = vunpack.c.l.b16 %v187
    %v1374 = vunpack.c.h.b16 %v187
    %v1375 = vunpack.c.l.b16 %v188
    %v1376 = vunpack.c.h.b16 %v188
    %v1377 = vunpack.c.l.b16 %v189
    %v1378 = vunpack.c.h.b16 %v189
    %v1379 = vunpack.c.l.b16 %v190
    %v1380 = vunpack.c.h.b16 %v190
    %v1381 = vunpack.c.l.b16 %v191
    %v1382 = vunpack.c.h.b16 %v191
    %v1383 = vunpack.c.l.b16 %v192
    %v1384 = vunpack.c.h.b16 %v192
    %v1385 = vunpack.c.l.b16 %v193
    %v1386 = vunpack.c.h.b16 %v193
    %v1387 = vunpack.c.l.b16 %v194
    %v1388 = vunpack.c.h.b16 %v194
    %v1389 = vunpack.c.l.b16 %v195
    %v1390 = vunpack.c.h.b16 %v195
    %v1391 = vunpack.c.l.b16 %v196
    %v1392 = vunpack.c.h.b16 %v196
    %v1393 = vunpack.c.l.b16 %v197
    %v1394 = vunpack.c.h.b16 %v197
    %v1395 = vunpack.c.l.b16 %v198
    %v1396 = vunpack.c.h.b16 %v198
    %v1397 = vunpack.c.l.b16 %v199
    %v1398 = vunpack.c.h.b16 %v199
    %v1399 = vunpack.c.l.b16 %v200
    %v1400 = vunpack.c.h.b16 %v200
    %v1401 = vunpack.c.l.b16 %v201
    %v1402 = vunpack.c.h.b16 %v201
    %v1403 = vunpack.c.l.b16 %v202
    %v1404 = vunpack.c.h.b16 %v202
    %v1405 = vunpack.c.l.b16 %v203
    %v1406 = vunpack.c.h.b16 %v203
    %v1407 = vunpack.c.l.b16 %v204
    %v1408 = vunpack.c.h.b16 %v204
    %v1409 = vunpack.c.l.b16 %v205
    %v1410 = vunpack.c.h.b16 %v205
    %v1411 = vunpack.c.l.b16 %v206
    %v1412 = vunpack.c.h.b16 %v206
    %v1413 = vunpack.c.l.b16 %v207
    %v1414 = vunpack.c.h.b16 %v207
    %v1415 = vunpack.c.l.b16 %v208
    %v1416 = vunpack.c.h.b16 %v208
    %v1417 = vunpack.c.l.b16 %v209
    %v1418 = vunpack.c.h.b16 %v209
    %v1419 = vunpack.c.l.b16 %v210
    %v1420 = vunpack.c.h.b16 %v210
    %v1421 = vunpack.c.l.b16 %v211
    %v1422 = vunpack.c.h.b16 %v211
    %v1423 = vunpack.c.l.b16 %v212
    %v1424 = vunpack.c.h.b16 %v212
    %v1425 = vunpack.c.l.b16 %v213
    %v1426 = vunpack.c.h.b16 %v213
    %v1427 = vunpack.c.l.b16 %v214
    %v1428 = vunpack.c.h.b16 %v214
    %v1429 = vunpack.c.l.b16 %v215
    %v1430 = vunpack.c.h.b16 %v215
    %v1431 = vunpack.c.l.b16 %v216
    %v1432 = vunpack.c.h.b16 %v216
    %v1433 = vunpack.c.l.b16 %v217
    %v1434 = vunpack.c.h.b16 %v217
    %v1435 = vunpack.c.l.b16 %v218
    %v1436 = vunpack.c.h.b16 %v218
    %v1437 = vunpack.c.l.b16 %v219
    %v1438 = vunpack.c.h.b16 %v219
    %v1439 = vunpack.c.l.b16 %v220
    %v1440 = vunpack.c.h.b16 %v220
    %v1441 = vunpack.c.l.b16 %v221
    %v1442 = vunpack.c.h.b16 %v221
    %v1443 = vunpack.c.l.b16 %v222
    %v1444 = vunpack.c.h.b16 %v222
    %v1445 = vunpack.c.l.b16 %v223
    %v1446 = vunpack.c.h.b16 %v223
    %v1447 = vunpack.c.l.b16 %v224
    %v1448 = vunpack.c.h.b16 %v224
    %v1449 = vunpack.c.l.b16 %v225
    %v1450 = vunpack.c.h.b16 %v225
    %v1451 = vunpack.c.l.b16 %v226
    %v1452 = vunpack.c.h.b16 %v226
    %v1453 = vunpack.c.l.b16 %v227
    %v1454 = vunpack.c.h.b16 %v227
    %v1455 = vunpack.c.l.b16 %v228
    %v1456 = vunpack.c.h.b16 %v228
    %v1457 = vunpack.c.l.b16 %v229
    %v1458 = vunpack.c.h.b16 %v229
    %v1459 = vunpack.c.l.b16 %v230
    %v1460 = vunpack.c.h.b16 %v230
    %v1461 = vunpack.c.l.b16 %v231
    %v1462 = vunpack.c.h.b16 %v231
    %v1463 = vunpack.c.l.b16 %v232
    %v1464 = vunpack.c.h.b16 %v232
    %v1465 = vunpack.c.l.b16 %v233
    %v1466 = vunpack.c.h.b16 %v233
    %v1467 = vunpack.c.l.b16 %v234
    %v1468 = vunpack.c.h.b16 %v234
    %v1469 = vunpack.c.l.b16 %v235
    %v1470 = vunpack.c.h.b16 %v235
    %v1471 = vunpack.c.l.b16 %v236
    %v1472 = vunpack.c.h.b16 %v236
    %v1473 = vunpack.c.l.b16 %v237
    %v1474 = vunpack.c.h.b16 %v237
    %v1475 = vunpack.c.l.b16 %v238
    %v1476 = vunpack.c.h.b16 %v238
    %v1477 = vunpack.c.l.b16 %v239
    %v1478 = vunpack.c.h.b16 %v239
    %v1479 = vunpack.c.l.b16 %v240
    %v1480 = vunpack.c.h.b16 %v240
    %v1481 = vunpack.c.l.b16 %v241
    %v1482 = vunpack.c.h.b16 %v241
    %v1483 = vunpack.c.l.b16 %v242
    %v1484 = vunpack.c.h.b16 %v242
    %v1485 = vunpack.c.l.b16 %v243
    %v1486 = vunpack.c.h.b16 %v243
    %v1487 = vunpack.c.l.b16 %v244
    %v1488 = vunpack.c.h.b16 %v244
    %v1489 = vunpack.c.l.b16 %v245
    %v1490 = vunpack.c.h.b16 %v245
    %v1491 = vunpack.c.l.b16 %v246
    %v1492 = vunpack.c.h.b16 %v246
    %v1493 = vunpack.c.l.b16 %v247
    %v1494 = vunpack.c.h.b16 %v247
    %v1495 = vunpack.c.l.b16 %v248
    %v1496 = vunpack.c.h.b16 %v248
    %v1497 = vunpack.c.l.b16 %v249
    %v1498 = vunpack.c.h.b16 %v249
    %v1499 = vunpack.c.l.b16 %v250
    %v1500 = vunpack.c.h.b16 %v250
    %v1501 = vunpack.c.l.b16 %v251
    %v1502 = vunpack.c.h.b16 %v251
    %v1503 = vunpack.c.l.b16 %v252
    %v1504 = vunpack.c.h.b16 %v252
    %v1505 = vunpack.c.l.b16 %v253
    %v1506 = vunpack.c.h.b16 %v253
    %v1507 = vunpack.c.l.b16 %v254
    %v1508 = vunpack.c.h.b16 %v254
    %v1509 = vunpack.c.l.b16 %v255
    %v1510 = vunpack.c.h.b16 %v255
    %v1511 = vunpack.c.l.b16 %v256
    %v1512 = vunpack.c.h.b16 %v256
    %v1513 = vunpack.c.l.b16 %v257
    %v1514 = vunpack.c.h.b16 %v257
    %v1515 = vunpack.c.l.b16 %v258
    %v1516 = vunpack.c.h.b16 %v258
    %v1517 = vunpack.c.l.b16 %v259
    %v1518 = vunpack.c.h.b16 %v259
    %v1519 = vunpack.c.l.b16 %v260
    %v1520 = vunpack.c.h.b16 %v260
    %v1521 = vunpack.c.l.b16 %v261
    %v1522 = vunpack.c.h.b16 %v261
    %v1523 = vunpack.c.l.b16 %v262
    %v1524 = vunpack.c.h.b16 %v262
    %v1525 = vunpack.c.l.b16 %v263
    %v1526 = vunpack.c.h.b16 %v263
    %v1527 = vunpack.c.l.b16 %v264
    %v1528 = vunpack.c.h.b16 %v264
    %v1529 = vunpack.c.l.b16 %v265
    %v1530 = vunpack.c.h.b16 %v265
    %v1531 = vunpack.c.l.b16 %v266
    %v1532 = vunpack.c.h.b16 %v266
    %v1533 = vunpack.c.l.b16 %v267
    %v1534 = vunpack.c.h.b16 %v267
    %v1535 = vunpack.c.l.b16 %v268
    %v1536 = vunpack.c.h.b16 %v268
    %v1537 = vunpack.c.l.b16 %v269
    %v1538 = vunpack.c.h.b16 %v269
    %v1539 = vunpack.c.l.b16 %v270
    %v1540 = vunpack.c.h.b16 %v270
    %v1541 = vunpack.c.l.b16 %v271
    %v1542 = vunpack.c.h.b16 %v271
    %v1543 = vunpack.c.l.b16 %v272
    %v1544 = vunpack.c.h.b16 %v272
    %v1545 = vunpack.c.l.b16 %v273
    %v1546 = vunpack.c.h.b16 %v273
    %v1547 = vunpack.c.l.b16 %v274
    %v1548 = vunpack.c.h.b16 %v274
    %v1549 = vunpack.c.l.b16 %v275
    %v1550 = vunpack.c.h.b16 %v275
    %v1551 = vunpack.c.l.b16 %v276
    %v1552 = vunpack.c.h.b16 %v276
    %v1553 = vunpack.c.l.b16 %v277
    %v1554 = vunpack.c.h.b16 %v277
    %v1555 = vunpack.c.l.b16 %v278
    %v1556 = vunpack.c.h.b16 %v278
    %v1557 = vunpack.c.l.b16 %v279
    %v1558 = vunpack.c.h.b16 %v279
    %v1559 = vunpack.c.l.b16 %v280
    %v1560 = vunpack.c.h.b16 %v280
    %v1561 = vunpack.c.l.b16 %v281
    %v1562 = vunpack.c.h.b16 %v281
    %v1563 = vunpack.c.l.b16 %v282
    %v1564 = vunpack.c.h.b16 %v282
    %v1565 = vunpack.c.l.b16 %v283
    %v1566 = vunpack.c.h.b16 %v283
    %v1567 = vunpack.c.l.b16 %v284
    %v1568 = vunpack.c.h.b16 %v284
    %v1569 = vunpack.c.l.b16 %v285
    %v1570 = vunpack.c.h.b16 %v285
    %v1571 = vunpack.c.l.b16 %v286
    %v1572 = vunpack.c.h.b16 %v286
    %v1573 = vunpack.c.l.b16 %v287
    %v1574 = vunpack.c.h.b16 %v287
    %v1575 = vunpack.c.l.b16 %v288
    %v1576 = vunpack.c.h.b16 %v288
    %v1577 = vunpack.c.l.b16 %v289
    %v1578 = vunpack.c.h.b16 %v289
    %v1579 = vunpack.c.l.b16 %v290
    %v1580 = vunpack.c.h.b16 %v290
    %v1581 = vunpack.c.l.b16 %v291
    %v1582 = vunpack.c.h.b16 %v291
    %v1583 = vunpack.c.l.b16 %v292
    %v1584 = vunpack.c.h.b16 %v292
    %v1585 = vunpack.c.l.b16 %v293
    %v1586 = vunpack.c.h.b16 %v293
    %v1587 = vunpack.c.l.b16 %v294
    %v1588 = vunpack.c.h.b16 %v294
    %v1589 = vunpack.c.l.b16 %v295
    %v1590 = vunpack.c.h.b16 %v295
    %v1591 = vunpack.c.l.b16 %v296
    %v1592 = vunpack.c.h.b16 %v296
    %v1593 = vunpack.c.l.b16 %v297
    %v1594 = vunpack.c.h.b16 %v297
    %v1595 = vunpack.c.l.b16 %v298
    %v1596 = vunpack.c.h.b16 %v298
    %v1597 = vunpack.c.l.b16 %v299
    %v1598 = vunpack.c.h.b16 %v299
    %v1599 = vunpack.c.l.b16 %v300
    %v1600 = vunpack.c.h.b16 %v300
    %v1601 = vunpack.c.l.b16 %v301
    %v1602 = vunpack.c.h.b16 %v301
    %v1603 = vunpack.c.l.b16 %v302
    %v1604 = vunpack.c.h.b16 %v302
    %v1605 = vunpack.c.l.b16 %v303
    %v1606 = vunpack.c.h.b16 %v303
    %v1607 = vunpack.c.l.b16 %v304
    %v1608 = vunpack.c.h.b16 %v304
    %v1609 = vunpack.c.l.b16 %v305
    %v1610 = vunpack.c.h.b16 %v305
    %v1611 = vunpack.c.l.b16 %v306
    %v1612 = vunpack.c.h.b16 %v306
    %v1613 = vunpack.c.l.b16 %v307
    %v1614 = vunpack.c.h.b16 %v307
    %v1615 = vunpack.c.l.b16 %v308
    %v1616 = vunpack.c.h.b16 %v308
    %v1617 = vunpack.c.l.b16 %v309
    %v1618 = vunpack.c.h.b16 %v309
    %v1619 = vunpack.c.l.b16 %v310
    %v1620 = vunpack.c.h.b16 %v310
    %v1621 = vunpack.c.l.b16 %v311
    %v1622 = vunpack.c.h.b16 %v311
    %v1623 = vunpack.c.l.b16 %v312
    %v1624 = vunpack.c.h.b16 %v312
    %v1625 = vunpack.c.l.b16 %v313
    %v1626 = vunpack.c.h.b16 %v313
    %v1627 = vunpack.c.l.b16 %v314
    %v1628 = vunpack.c.h.b16 %v314
    %v1629 = vunpack.c.l.b16 %v315
    %v1630 = vunpack.c.h.b16 %v315
    %v1631 = vunpack.c.l.b16 %v316
    %v1632 = vunpack.c.h.b16 %v316
    %v1633 = vunpack.c.l.b16 %v317
    %v1634 = vunpack.c.h.b16 %v317
    %v1635 = vunpack.c.l.b16 %v318
    %v1636 = vunpack.c.h.b16 %v318
    %v1637 = vunpack.c.l.b16 %v319
    %v1638 = vunpack.c.h.b16 %v319
    %v1639 = vunpack.c.l.b16 %v320
    %v1640 = vunpack.c.h.b16 %v320
    %v1641 = vunpack.c.l.b16 %v321
    %v1642 = vunpack.c.h.b16 %v321
    %v1643 = vunpack.c.l.b16 %v322
    %v1644 = vunpack.c.h.b16 %v322
    %v1645 = vunpack.c.l.b16 %v323
    %v1646 = vunpack.c.h.b16 %v323
    %v1647 = vunpack.c.l.b16 %v324
    %v1648 = vunpack.c.h.b16 %v324
    %v1649 = vunpack.c.l.b16 %v325
    %v1650 = vunpack.c.h.b16 %v325
    %v1651 = vunpack.c.l.b16 %v326
    %v1652 = vunpack.c.h.b16 %v326
    %v1653 = vunpack.c.l.b16 %v327
    %v1654 = vunpack.c.h.b16 %v327
    %v1655 = vunpack.c.l.b16 %v328
    %v1656 = vunpack.c.h.b16 %v328
    %v1657 = vunpack.c.l.b16 %v329
    %v1658 = vunpack.c.h.b16 %v329
    %v1659 = vunpack.c.l.b16 %v330
    %v1660 = vunpack.c.h.b16 %v330
    %v1661 = vunpack.c.l.b16 %v331
    %v1662 = vunpack.c.h.b16 %v331
    %v1663 = vunpack.c.l.b16 %v332
    %v1664 = vunpack.c.h.b16 %v332
    %v1665 = vunpack.c.l.b16 %v333
    %v1666 = vunpack.c.h.b16 %v333
    %v1667 = vunpack.c.l.b16 %v334
    %v1668 = vunpack.c.h.b16 %v334
    %v1669 = vunpack.c.l.b16 %v335
    %v1670 = vunpack.c.h.b16 %v335
    %v1671 = vunpack.c.l.b16 %v336
    %v1672 = vunpack.c.h.b16 %v336
    %v1673 = vunpack.c.l.b16 %v337
    %v1674 = vunpack.c.h.b16 %v337
    %v1675 = vunpack.c.l.b16 %v338
    %v1676 = vunpack.c.h.b16 %v338
    %v1677 = vunpack.c.l.b16 %v339
    %v1678 = vunpack.c.h.b16 %v339
    %v1679 = vunpack.c.l.b16 %v340
    %v1680 = vunpack.c.h.b16 %v340
    %v1681 = vunpack.c.l.b16 %v341
    %v1682 = vunpack.c.h.b16 %v341
    %v1683 = vunpack.c.l.b16 %v342
    %v1684 = vunpack.c.h.b16 %v342
    %v1685 = vunpack.c.l.b16 %v343
    %v1686 = vunpack.c.h.b16 %v343
    %v1687 = vunpack.c.l.b16 %v344
    %v1688 = vunpack.c.h.b16 %v344
    %v1689 = vunpack.c.l.b16 %v345
    %v1690 = vunpack.c.h.b16 %v345
    %v1691 = vunpack.c.l.b16 %v346
    %v1692 = vunpack.c.h.b16 %v346
    %v1693 = vunpack.c.l.b16 %v347
    %v1694 = vunpack.c.h.b16 %v347
    %v1695 = vunpack.c.l.b16 %v348
    %v1696 = vunpack.c.h.b16 %v348
    %v1697 = vunpack.c.l.b16 %v349
    %v1698 = vunpack.c.h.b16 %v349
    %v1699 = vunpack.c.l.b16 %v350
    %v1700 = vunpack.c.h.b16 %v350
    %v1701 = vunpack.c.l.b16 %v351
    %v1702 = vunpack.c.h.b16 %v351
    %v1703 = vunpack.c.l.b16 %v352
    %v1704 = vunpack.c.h.b16 %v352
    %v1705 = vunpack.c.l.b16 %v353
    %v1706 = vunpack.c.h.b16 %v353
    %v1707 = vunpack.c.l.b16 %v354
    %v1708 = vunpack.c.h.b16 %v354
    %v1709 = vunpack.c.l.b16 %v355
    %v1710 = vunpack.c.h.b16 %v355
    %v1711 = vunpack.c.l.b16 %v356
    %v1712 = vunpack.c.h.b16 %v356
    %v1713 = vunpack.c.l.b16 %v357
    %v1714 = vunpack.c.h.b16 %v357
    %v1715 = vunpack.c.l.b16 %v358
    %v1716 = vunpack.c.h.b16 %v358
    %v1717 = vunpack.c.l.b16 %v359
    %v1718 = vunpack.c.h.b16 %v359
    %v1719 = vunpack.c.l.b16 %v360
    %v1720 = vunpack.c.h.b16 %v360
    %v1721 = vunpack.c.l.b16 %v361
    %v1722 = vunpack.c.h.b16 %v361
    %v1723 = vunpack.c.l.b16 %v362
    %v1724 = vunpack.c.h.b16 %v362
    %v1725 = vunpack.c.l.b16 %v363
    %v1726 = vunpack.c.h.b16 %v363
    %v1727 = vunpack.c.l.b16 %v364
    %v1728 = vunpack.c.h.b16 %v364
    %v1729 = vunpack.c.l.b16 %v365
    %v1730 = vunpack.c.h.b16 %v365
    %v1731 = vunpack.c.l.b16 %v366
    %v1732 = vunpack.c.h.b16 %v366
    %v1733 = vunpack.c.l.b16 %v367
    %v1734 = vunpack.c.h.b16 %v367
    %v1735 = vunpack.c.l.b16 %v368
    %v1736 = vunpack.c.h.b16 %v368
    %v1737 = vunpack.c.l.b16 %v369
    %v1738 = vunpack.c.h.b16 %v369
    %v1739 = vunpack.c.l.b16 %v370
    %v1740 = vunpack.c.h.b16 %v370
    %v1741 = vunpack.c.l.b16 %v371
    %v1742 = vunpack.c.h.b16 %v371
    %v1743 = vunpack.c.l.b16 %v372
    %v1744 = vunpack.c.h.b16 %v372
    %v1745 = vunpack.c.l.b16 %v373
    %v1746 = vunpack.c.h.b16 %v373
    %v1747 = vunpack.c.l.b16 %v374
    %v1748 = vunpack.c.h.b16 %v374
    %v1749 = vunpack.c.l.b16 %v375
    %v1750 = vunpack.c.h.b16 %v375
    %v1751 = vunpack.c.l.b16 %v376
    %v1752 = vunpack.c.h.b16 %v376
    %v1753 = vunpack.c.l.b16 %v377
    %v1754 = vunpack.c.h.b16 %v377
    %v1755 = vunpack.c.l.b16 %v378
    %v1756 = vunpack.c.h.b16 %v378
    %v1757 = vunpack.c.l.b16 %v379
    %v1758 = vunpack.c.h.b16 %v379
    %v1759 = vunpack.c.l.b16 %v380
    %v1760 = vunpack.c.h.b16 %v380
    %v1761 = vunpack.c.l.b16 %v381
    %v1762 = vunpack.c.h.b16 %v381
    %v1763 = vunpack.c.l.b16 %v382
    %v1764 = vunpack.c.h.b16 %v382
    %v1765 = vunpack.c.l.b16 %v383
    %v1766 = vunpack.c.h.b16 %v383
    %v1767 = vunpack.c.l.b16 %v384
    %v1768 = vunpack.c.h.b16 %v384
    %v1769 = vunpack.c.l.b16 %v385
    %v1770 = vunpack.c.h.b16 %v385
    %v1771 = vunpack.c.l.b16 %v386
    %v1772 = vunpack.c.h.b16 %v386
    %v1773 = vunpack.c.l.b16 %v387
    %v1774 = vunpack.c.h.b16 %v387
    %v1775 = vunpack.c.l.b16 %v388
    %v1776 = vunpack.c.h.b16 %v388
    %v1777 = vunpack.c.l.b16 %v389
    %v1778 = vunpack.c.h.b16 %v389
    %v1779 = vunpack.c.l.b16 %v390
    %v1780 = vunpack.c.h.b16 %v390
    %v1781 = vunpack.c.l.b16 %v391
    %v1782 = vunpack.c.h.b16 %v391
    %v1783 = vunpack.c.l.b16 %v392
    %v1784 = vunpack.c.h.b16 %v392
    %v1785 = vunpack.c.l.b16 %v393
    %v1786 = vunpack.c.h.b16 %v393
    %v1787 = vunpack.c.l.b16 %v394
    %v1788 = vunpack.c.h.b16 %v394
    %v1789 = vunpack.c.l.b16 %v395
    %v1790 = vunpack.c.h.b16 %v395
    %v1791 = vunpack.c.l.b16 %v396
    %v1792 = vunpack.c.h.b16 %v396
    %v1793 = vunpack.c.l.b16 %v397
    %v1794 = vunpack.c.h.b16 %v397
    %v1795 = vunpack.c.l.b16 %v398
    %v1796 = vunpack.c.h.b16 %v398
    %v1797 = vunpack.c.l.b16 %v399
    %v1798 = vunpack.c.h.b16 %v399
    %v1799 = vunpack.c.l.b16 %v400
    %v1800 = vunpack.c.h.b16 %v400
    %v1801 = vunpack.c.l.b16 %v401
    %v1802 = vunpack.c.h.b16 %v401
    %v1803 = vunpack.c.l.b16 %v402
    %v1804 = vunpack.c.h.b16 %v402
    %v1805 = vunpack.c.l.b16 %v403
    %v1806 = vunpack.c.h.b16 %v403
    %v1807 = vunpack.c.l.b16 %v404
    %v1808 = vunpack.c.h.b16 %v404
    %v1809 = vunpack.c.l.b16 %v405
    %v1810 = vunpack.c.h.b16 %v405
    %v1811 = vunpack.c.l.b16 %v406
    %v1812 = vunpack.c.h.b16 %v406
    %v1813 = vunpack.c.l.b16 %v407
    %v1814 = vunpack.c.h.b16 %v407
    %v1815 = vunpack.c.l.b16 %v408
    %v1816 = vunpack.c.h.b16 %v408
    %v1817 = vunpack.c.l.b16 %v409
    %v1818 = vunpack.c.h.b16 %v409
    %v1819 = vunpack.c.l.b16 %v410
    %v1820 = vunpack.c.h.b16 %v410
    %v1821 = vunpack.c.l.b16 %v411
    %v1822 = vunpack.c.h.b16 %v411
    %v1823 = vunpack.c.l.b16 %v412
    %v1824 = vunpack.c.h.b16 %v412
    %v1825 = vunpack.c.l.b16 %v413
    %v1826 = vunpack.c.h.b16 %v413
    %v1827 = vunpack.c.l.b16 %v414
    %v1828 = vunpack.c.h.b16 %v414
    %v1829 = vunpack.c.l.b16 %v415
    %v1830 = vunpack.c.h.b16 %v415
    %v1831 = vunpack.c.l.b16 %v416
    %v1832 = vunpack.c.h.b16 %v416
    %v1833 = vunpack.c.l.b16 %v417
    %v1834 = vunpack.c.h.b16 %v417
    %v1835 = vunpack.c.l.b16 %v418
    %v1836 = vunpack.c.h.b16 %v418
    %v1837 = vunpack.c.l.b16 %v419
    %v1838 = vunpack.c.h.b16 %v419
    %v1839 = vunpack.c.l.b16 %v420
    %v1840 = vunpack.c.h.b16 %v420
    %v1841 = vunpack.c.l.b16 %v421
    %v1842 = vunpack.c.h.b16 %v421
    %v1843 = vunpack.c.l.b16 %v422
    %v1844 = vunpack.c.h.b16 %v422
    %v1845 = vunpack.c.l.b16 %v423
    %v1846 = vunpack.c.h.b16 %v423
    %v1847 = vunpack.c.l.b16 %v424
    %v1848 = vunpack.c.h.b16 %v424
    %v1849 = vunpack.c.l.b16 %v425
    %v1850 = vunpack.c.h.b16 %v425
    %v1851 = vunpack.c.l.b16 %v426
    %v1852 = vunpack.c.h.b16 %v426
    %v1853 = vunpack.c.l.b16 %v427
    %v1854 = vunpack.c.h.b16 %v427
    %v1855 = vunpack.c.l.b16 %v428
    %v1856 = vunpack.c.h.b16 %v428
    %v1857 = vunpack.c.l.b16 %v429
    %v1858 = vunpack.c.h.b16 %v429
    %v1859 = vunpack.c.l.b16 %v430
    %v1860 = vunpack.c.h.b16 %v430
    %v1861 = vunpack.c.l.b16 %v431
    %v1862 = vunpack.c.h.b16 %v431
    %v1863 = vunpack.c.l.b16 %v432
    %v1864 = vunpack.c.h.b16 %v432
    %v1865 = vunpack.c.l.b16 %v433
    %v1866 = vunpack.c.h.b16 %v433
    %v1867 = vunpack.c.l.b16 %v434
    %v1868 = vunpack.c.h.b16 %v434
    %v1869 = vunpack.c.l.b16 %v435
    %v1870 = vunpack.c.h.b16 %v435
    %v1871 = vunpack.c.l.b16 %v436
    %v1872 = vunpack.c.h.b16 %v436
    %v1873 = vunpack.c.l.b16 %v437
    %v1874 = vunpack.c.h.b16 %v437
    %v1875 = vunpack.c.l.b16 %v438
    %v1876 = vunpack.c.h.b16 %v438
    %v1877 = vunpack.c.l.b16 %v439
    %v1878 = vunpack.c.h.b16 %v439
    %v1879 = vunpack.c.l.b16 %v440
    %v1880 = vunpack.c.h.b16 %v440
    %v1881 = vunpack.c.l.b16 %v441
    %v1882 = vunpack.c.h.b16 %v441
    %v1883 = vunpack.c.l.b16 %v442
    %v1884 = vunpack.c.h.b16 %v442
    %v1885 = vunpack.c.l.b16 %v443
    %v1886 = vunpack.c.h.b16 %v443
    %v1887 = vunpack.c.l.b16 %v444
    %v1888 = vunpack.c.h.b16 %v444
    %v1889 = vunpack.c.l.b16 %v445
    %v1890 = vunpack.c.h.b16 %v445
    %v1891 = vunpack.c.l.b16 %v446
    %v1892 = vunpack.c.h.b16 %v446
    %v1893 = vunpack.c.l.b16 %v447
    %v1894 = vunpack.c.h.b16 %v447
    %v1895 = vunpack.c.l.b16 %v448
    %v1896 = vunpack.c.h.b16 %v448
    %v1897 = vunpack.c.l.b16 %v449
    %v1898 = vunpack.c.h.b16 %v449
    %v1899 = vunpack.c.l.b16 %v450
    %v1900 = vunpack.c.h.b16 %v450
    %v1901 = vunpack.c.l.b16 %v451
    %v1902 = vunpack.c.h.b16 %v451
    %v1903 = vunpack.c.l.b16 %v452
    %v1904 = vunpack.c.h.b16 %v452
    %v1905 = vunpack.c.l.b16 %v453
    %v1906 = vunpack.c.h.b16 %v453
    %v1907 = vunpack.c.l.b16 %v454
    %v1908 = vunpack.c.h.b16 %v454
    %v1909 = vunpack.c.l.b16 %v455
    %v1910 = vunpack.c.h.b16 %v455
    %v1911 = vunpack.c.l.b16 %v456
    %v1912 = vunpack.c.h.b16 %v456
    %v1913 = vunpack.c.l.b16 %v457
    %v1914 = vunpack.c.h.b16 %v457
    %v1915 = vunpack.c.l.b16 %v458
    %v1916 = vunpack.c.h.b16 %v458
    %v1917 = vunpack.c.l.b16 %v459
    %v1918 = vunpack.c.h.b16 %v459
    %v1919 = vunpack.c.l.b16 %v460
    %v1920 = vunpack.c.h.b16 %v460
    %v1921 = vunpack.c.l.b16 %v461
    %v1922 = vunpack.c.h.b16 %v461
    %v1923 = vunpack.c.l.b16 %v462
    %v1924 = vunpack.c.h.b16 %v462
    %v1925 = vunpack.c.l.b16 %v463
    %v1926 = vunpack.c.h.b16 %v463
    %v1927 = vunpack.c.l.b16 %v464
    %v1928 = vunpack.c.h.b16 %v464
    %v1929 = vunpack.c.l.b16 %v465
    %v1930 = vunpack.c.h.b16 %v465
    %v1931 = vunpack.c.l.b16 %v466
    %v1932 = vunpack.c.h.b16 %v466
    %v1933 = vunpack.c.l.b16 %v467
    %v1934 = vunpack.c.h.b16 %v467
    %v1935 = vunpack.c.l.b16 %v468
    %v1936 = vunpack.c.h.b16 %v468
    %v1937 = vunpack.c.l.b16 %v469
    %v1938 = vunpack.c.h.b16 %v469
    %v1939 = vunpack.c.l.b16 %v470
    %v1940 = vunpack.c.h.b16 %v470
    %v1941 = vunpack.c.l.b16 %v471
    %v1942 = vunpack.c.h.b16 %v471
    %v1943 = vunpack.c.l.b16 %v472
    %v1944 = vunpack.c.h.b16 %v472
    %v1945 = vunpack.c.l.b16 %v473
    %v1946 = vunpack.c.h.b16 %v473
    %v1947 = vunpack.c.l.b16 %v474
    %v1948 = vunpack.c.h.b16 %v474
    %v1949 = vunpack.c.l.b16 %v475
    %v1950 = vunpack.c.h.b16 %v475
    %v1951 = vunpack.c.l.b16 %v476
    %v1952 = vunpack.c.h.b16 %v476
    %v1953 = vunpack.c.l.b16 %v477
    %v1954 = vunpack.c.h.b16 %v477
    %v1955 = vunpack.c.l.b16 %v478
    %v1956 = vunpack.c.h.b16 %v478
    %v1957 = vunpack.c.l.b16 %v479
    %v1958 = vunpack.c.h.b16 %v479
    %v1959 = vunpack.c.l.b16 %v480
    %v1960 = vunpack.c.h.b16 %v480
    %v1961 = vunpack.c.l.b16 %v481
    %v1962 = vunpack.c.h.b16 %v481
    %v1963 = vunpack.c.l.b16 %v482
    %v1964 = vunpack.c.h.b16 %v482
    %v1965 = vunpack.c.l.b16 %v483
    %v1966 = vunpack.c.h.b16 %v483
    %v1967 = vunpack.c.l.b16 %v484
    %v1968 = vunpack.c.h.b16 %v484
    %v1969 = vunpack.c.l.b16 %v485
    %v1970 = vunpack.c.h.b16 %v485
    %v1971 = vunpack.c.l.b16 %v486
    %v1972 = vunpack.c.h.b16 %v486
    %v1973 = vunpack.c.l.b16 %v487
    %v1974 = vunpack.c.h.b16 %v487
    %v1975 = vunpack.c.l.b16 %v488
    %v1976 = vunpack.c.h.b16 %v488
    %v1977 = vunpack.c.l.b16 %v489
    %v1978 = vunpack.c.h.b16 %v489
    %v1979 = vunpack.c.l.b16 %v490
    %v1980 = vunpack.c.h.b16 %v490
    %v1981 = vunpack.c.l.b16 %v491
    %v1982 = vunpack.c.h.b16 %v491
    %v1983 = vunpack.c.l.b16 %v492
    %v1984 = vunpack.c.h.b16 %v492
    %v1985 = vunpack.c.l.b16 %v493
    %v1986 = vunpack.c.h.b16 %v493
    %v1987 = vunpack.c.l.b16 %v494
    %v1988 = vunpack.c.h.b16 %v494
    %v1989 = vunpack.c.l.b16 %v495
    %v1990 = vunpack.c.h.b16 %v495
    %v1991 = vunpack.c.l.b16 %v496
    %v1992 = vunpack.c.h.b16 %v496
    %v1993 = vunpack.c.l.b16 %v497
    %v1994 = vunpack.c.h.b16 %v497
    %v1995 = vunpack.c.l.b16 %v498
    %v1996 = vunpack.c.h.b16 %v498
    %v1997 = vunpack.c.l.b16 %v499
    %v1998 = vunpack.c.h.b16 %v499
    %v1999 = vunpack.c.l.b16 %v500
    %v2000 = vunpack.c.h.b16 %v500
    %v2001 = vunpack.c.l.b16 %v501
    %v2002 = vunpack.c.h.b16 %v501
    %v2003 = vunpack.c.l.b16 %v502
    %v2004 = vunpack.c.h.b16 %v502
    %v2005 = vunpack.c.l.b16 %v503
    %v2006 = vunpack.c.h.b16 %v503
    %v2007 = vunpack.c.l.b16 %v504
    %v2008 = vunpack.c.h.b16 %v504
    %v2009 = vunpack.c.l.b16 %v505
    %v2010 = vunpack.c.h.b16 %v505
    %v2011 = vunpack.c.l.b16 %v506
    %v2012 = vunpack.c.h.b16 %v506
    %v2013 = vunpack.c.l.b16 %v507
    %v2014 = vunpack.c.h.b16 %v507
    %v2015 = vunpack.c.l.b16 %v508
    %v2016 = vunpack.c.h.b16 %v508
    %v2017 = vunpack.c.l.b16 %v509
    %v2018 = vunpack.c.h.b16 %v509
    %v2019 = vunpack.c.l.b16 %v510
    %v2020 = vunpack.c.h.b16 %v510
    %v2021 = vunpack.c.l.b16 %v511
    %v2022 = vunpack.c.h.b16 %v511
    %v2023 = vunpack.c.l.b16 %v512
    %v2024 = vunpack.c.h.b16 %v512
    %v2025 = vunpack.c.l.b16 %v513
    %v2026 = vunpack.c.h.b16 %v513
    %v2027 = vunpack.c.l.b16 %v514
    %v2028 = vunpack.c.h.b16 %v514
    %v2029 = vunpack.c.l.b16 %v515
    %v2030 = vunpack.c.h.b16 %v515
    %v2031 = vunpack.c.l.b16 %v516
    %v2032 = vunpack.c.h.b16 %v516
    %v2033 = vunpack.c.l.b16 %v517
    %v2034 = vunpack.c.h.b16 %v517
    %v2035 = vunpack.c.l.b16 %v518
    %v2036 = vunpack.c.h.b16 %v518
    %v2037 = vunpack.c.l.b16 %v519
    %v2038 = vunpack.c.h.b16 %v519
    %v2039 = vunpack.c.l.b16 %v520
    %v2040 = vunpack.c.h.b16 %v520
    %v2041 = vunpack.c.l.b16 %v521
    %v2042 = vunpack.c.h.b16 %v521
    %v2043 = vunpack.c.l.b16 %v522
    %v2044 = vunpack.c.h.b16 %v522
    %v2045 = vunpack.c.l.b16 %v523
    %v2046 = vunpack.c.h.b16 %v523
    %v2047 = vunpack.c.l.b16 %v524
    %v2048 = vunpack.c.h.b16 %v524
    %v2049 = vunpack.c.l.b16 %v525
    %v2050 = vunpack.c.h.b16 %v525
    %v2051 = vunpack.c.l.b16 %v526
    %v2052 = vunpack.c.h.b16 %v526
    %v2053 = vunpack.c.l.b16 %v527
    %v2054 = vunpack.c.h.b16 %v527
    %v2055 = vunpack.c.l.b16 %v528
    %v2056 = vunpack.c.h.b16 %v528
    %v2057 = vunpack.c.l.b16 %v529
    %v2058 = vunpack.c.h.b16 %v529
    %v2059 = vunpack.c.l.b16 %v530
    %v2060 = vunpack.c.h.b16 %v530
    %v2061 = vunpack.c.l.b16 %v531
    %v2062 = vunpack.c.h.b16 %v531
    %v2063 = vunpack.c.l.b16 %v532
    %v2064 = vunpack.c.h.b16 %v532
    %v2065 = vunpack.c.l.b16 %v533
    %v2066 = vunpack.c.h.b16 %v533
    %v2067 = vunpack.c.l.b16 %v534
    %v2068 = vunpack.c.h.b16 %v534
    %v2069 = vunpack.c.l.b16 %v535
    %v2070 = vunpack.c.h.b16 %v535
    %v2071 = vunpack.c.l.b16 %v536
    %v2072 = vunpack.c.h.b16 %v536
    %v2073 = vunpack.c.l.b16 %v537
    %v2074 = vunpack.c.h.b16 %v537
    %v2075 = vunpack.c.l.b16 %v538
    %v2076 = vunpack.c.h.b16 %v538
    %v2077 = vunpack.c.l.b16 %v539
    %v2078 = vunpack.c.h.b16 %v539
    %v2079 = vunpack.c.l.b16 %v540
    %v2080 = vunpack.c.h.b16 %v540
    %v2081 = vunpack.c.l.b16 %v541
    %v2082 = vunpack.c.h.b16 %v541
    %v2083 = vunpack.c.l.b16 %v542
    %v2084 = vunpack.c.h.b16 %v542
    %v2085 = vunpack.c.l.b16 %v543
    %v2086 = vunpack.c.h.b16 %v543
    %v2087 = vunpack.c.l.b16 %v544
    %v2088 = vunpack.c.h.b16 %v544
    %v2089 = vunpack.c.l.b16 %v545
    %v2090 = vunpack.c.h.b16 %v545
    %v2091 = vunpack.c.l.b16 %v546
    %v2092 = vunpack.c.h.b16 %v546
    %v2093 = vunpack.c.l.b16 %v547
    %v2094 = vunpack.c.h.b16 %v547
    %v2095 = vunpack.c.l.b16 %v548
    %v2096 = vunpack.c.h.b16 %v548
    %v2097 = vunpack.c.l.b16 %v549
    %v2098 = vunpack.c.h.b16 %v549
    %v2099 = vunpack.c.l.b16 %v550
    %v2100 = vunpack.c.h.b16 %v550
    %v2101 = vunpack.c.l.b16 %v551
    %v2102 = vunpack.c.h.b16 %v551
    %v2103 = vunpack.c.l.b16 %v552
    %v2104 = vunpack.c.h.b16 %v552
    %v2105 = vunpack.c.l.b16 %v553
    %v2106 = vunpack.c.h.b16 %v553
    %v2107 = vunpack.c.l.b16 %v554
    %v2108 = vunpack.c.h.b16 %v554
    %v2109 = vunpack.c.l.b16 %v555
    %v2110 = vunpack.c.h.b16 %v555
    %v2111 = vunpack.c.l.b16 %v556
    %v2112 = vunpack.c.h.b16 %v556
    %v2113 = vunpack.c.l.b16 %v557
    %v2114 = vunpack.c.h.b16 %v557
    %v2115 = vunpack.c.l.b16 %v558
    %v2116 = vunpack.c.h.b16 %v558
    %v2117 = vunpack.c.l.b16 %v559
    %v2118 = vunpack.c.h.b16 %v559
    %v2119 = vunpack.c.l.b16 %v560
    %v2120 = vunpack.c.h.b16 %v560
    %v2121 = vunpack.c.l.b16 %v561
    %v2122 = vunpack.c.h.b16 %v561
    %v2123 = vunpack.c.l.b16 %v562
    %v2124 = vunpack.c.h.b16 %v562
    %v2125 = vunpack.c.l.b16 %v563
    %v2126 = vunpack.c.h.b16 %v563
    %v2127 = vunpack.c.l.b16 %v564
    %v2128 = vunpack.c.h.b16 %v564
    %v2129 = vunpack.c.l.b16 %v565
    %v2130 = vunpack.c.h.b16 %v565
    %v2131 = vunpack.c.l.b16 %v566
    %v2132 = vunpack.c.h.b16 %v566
    %v2133 = vunpack.c.l.b16 %v567
    %v2134 = vunpack.c.h.b16 %v567
    %v2135 = vunpack.c.l.b16 %v568
    %v2136 = vunpack.c.h.b16 %v568
    %v2137 = vunpack.c.l.b16 %v569
    %v2138 = vunpack.c.h.b16 %v569
    %v2139 = vunpack.c.l.b16 %v570
    %v2140 = vunpack.c.h.b16 %v570
    %v2141 = vunpack.c.l.b16 %v571
    %v2142 = vunpack.c.h.b16 %v571
    %v2143 = vunpack.c.l.b16 %v572
    %v2144 = vunpack.c.h.b16 %v572
    %v2145 = vunpack.c.l.b16 %v573
    %v2146 = vunpack.c.h.b16 %v573
    %v2147 = vunpack.c.l.b16 %v574
    %v2148 = vunpack.c.h.b16 %v574
    %v2149 = vunpack.c.l.b16 %v575
    %v2150 = vunpack.c.h.b16 %v575
    %v2151 = vunpack.c.l.b16 %v576
    %v2152 = vunpack.c.h.b16 %v576
    %v2153 = vunpack.c.l.b16 %v577
    %v2154 = vunpack.c.h.b16 %v577
    %v2155 = vunpack.c.l.b16 %v578
    %v2156 = vunpack.c.h.b16 %v578
    %v2157 = vunpack.c.l.b16 %v579
    %v2158 = vunpack.c.h.b16 %v579
    %v2159 = vunpack.c.l.b16 %v580
    %v2160 = vunpack.c.h.b16 %v580
    %v2161 = vunpack.c.l.b16 %v581
    %v2162 = vunpack.c.h.b16 %v581
    %v2163 = vunpack.c.l.b16 %v582
    %v2164 = vunpack.c.h.b16 %v582
    %v2165 = vunpack.c.l.b16 %v583
    %v2166 = vunpack.c.h.b16 %v583
    %v2167 = vunpack.c.l.b16 %v584
    %v2168 = vunpack.c.h.b16 %v584
    %v2169 = vunpack.c.l.b16 %v585
    %v2170 = vunpack.c.h.b16 %v585
    %v2171 = vunpack.c.l.b16 %v586
    %v2172 = vunpack.c.h.b16 %v586
    %v2173 = vunpack.c.l.b16 %v587
    %v2174 = vunpack.c.h.b16 %v587
    %v2175 = vunpack.c.l.b16 %v588
    %v2176 = vunpack.c.h.b16 %v588
    %v2177 = vunpack.c.l.b16 %v589
    %v2178 = vunpack.c.h.b16 %v589
    %v2179 = vunpack.c.l.b16 %v590
    %v2180 = vunpack.c.h.b16 %v590
    %v2181 = vunpack.c.l.b16 %v591
    %v2182 = vunpack.c.h.b16 %v591
    %v2183 = vunpack.c.l.b16 %v592
    %v2184 = vunpack.c.h.b16 %v592
    %v2185 = vunpack.c.l.b16 %v593
    %v2186 = vunpack.c.h.b16 %v593
    %v2187 = vunpack.c.l.b16 %v594
    %v2188 = vunpack.c.h.b16 %v594
    %v2189 = vpack.c.b16 %v1173, %v1165
    %v2190 = vpack.c.b16 %v1174, %v1166
    %v2191 = vpack.c.b16 %v1175, %v1167
    %v2192 = vpack.c.b16 %v1176, %v1168
    %v2193 = vpack.c.b16 %v1177, %v1169
    %v2194 = vpack.c.b16 %v1178, %v1170
    %v2195 = vpack.c.b16 %v1179, %v1171
    %v2196 = vpack.c.b16 %v1180, %v1172
    %v2197 = vpack.c.b16 %v1189, %v1181
    %v2198 = vpack.c.b16 %v1190, %v1182
    %v2199 = vpack.c.b16 %v1191, %v1183
    %v2200 = vpack.c.b16 %v1192, %v1184
    %v2201 = vpack.c.b16 %v1193, %v1185
    %v2202 = vpack.c.b16 %v1194, %v1186
    %v2203 = vpack.c.b16 %v1195, %v1187
    %v2204 = vpack.c.b16 %v1196, %v1188
    %v2205 = vpack.c.b16 %v1205, %v1197
    %v2206 = vpack.c.b16 %v1206, %v1198
    %v2207 = vpack.c.b16 %v1207, %v1199
    %v2208 = vpack.c.b16 %v1208, %v1200
    %v2209 = vpack.c.b16 %v1209, %v1201
    %v2210 = vpack.c.b16 %v1210, %v1202
    %v2211 = vpack.c.b16 %v1211, %v1203
    %v2212 = vpack.c.b16 %v1212, %v1204
    %v2213 = vpack.c.b16 %v1221, %v1213
    %v2214 = vpack.c.b16 %v1222, %v1214
    %v2215 = vpack.c.b16 %v1223, %v1215
    %v2216 = vpack.c.b16 %v1224, %v1216
    %v2217 = vpack.c.b16 %v1225, %v1217
    %v2218 = vpack.c.b16 %v1226, %v1218
    %v2219 = vpack.c.b16 %v1227, %v1219
    %v2220 = vpack.c.b16 %v1228, %v1220
    %v2221 = vpack.c.b16 %v1237, %v1229
    %v2222 = vpack.c.b16 %v1238, %v1230
    %v2223 = vpack.c.b16 %v1239, %v1231
    %v2224 = vpack.c.b16 %v1240, %v1232
    %v2225 = vpack.c.b16 %v1241, %v1233
    %v2226 = vpack.c.b16 %v1242, %v1234
    %v2227 = vpack.c.b16 %v1243, %v1235
    %v2228 = vpack.c.b16 %v1244, %v1236
    %v2229 = vpack.c.b16 %v1253, %v1245
    %v2230 = vpack.c.b16 %v1254, %v1246
    %v2231 = vpack.c.b16 %v1255, %v1247
    %v2232 = vpack.c.b16 %v1256, %v1248
    %v2233 = vpack.c.b16 %v1257, %v1249
    %v2234 = vpack.c.b16 %v1258, %v1250
    %v2235 = vpack.c.b16 %v1259, %v1251
    %v2236 = vpack.c.b16 %v1260, %v1252
    %v2237 = vpack.c.b16 %v1269, %v1261
    %v2238 = vpack.c.b16 %v1270, %v1262
    %v2239 = vpack.c.b16 %v1271, %v1263
    %v2240 = vpack.c.b16 %v1272, %v1264
    %v2241 = vpack.c.b16 %v1273, %v1265
    %v2242 = vpack.c.b16 %v1274, %v1266
    %v2243 = vpack.c.b16 %v1275, %v1267
    %v2244 = vpack.c.b16 %v1276, %v1268
    %v2245 = vpack.c.b16 %v1285, %v1277
    %v2246 = vpack.c.b16 %v1286, %v1278
    %v2247 = vpack.c.b16 %v1287, %v1279
    %v2248 = vpack.c.b16 %v1288, %v1280
    %v2249 = vpack.c.b16 %v1289, %v1281
    %v2250 = vpack.c.b16 %v1290, %v1282
    %v2251 = vpack.c.b16 %v1291, %v1283
    %v2252 = vpack.c.b16 %v1292, %v1284
    %v2253 = vpack.c.b16 %v1301, %v1293
    %v2254 = vpack.c.b16 %v1302, %v1294
    %v2255 = vpack.c.b16 %v1303, %v1295
    %v2256 = vpack.c.b16 %v1304, %v1296
    %v2257 = vpack.c.b16 %v1305, %v1297
    %v2258 = vpack.c.b16 %v1306, %v1298
    %v2259 = vpack.c.b16 %v1307, %v1299
    %v2260 = vpack.c.b16 %v1308, %v1300
    %v2261 = vpack.c.b16 %v1317, %v1309
    %v2262 = vpack.c.b16 %v1318, %v1310
    %v2263 = vpack.c.b16 %v1319, %v1311
    %v2264 = vpack.c.b16 %v1320, %v1312
    %v2265 = vpack.c.b16 %v1321, %v1313
    %v2266 = vpack.c.b16 %v1322, %v1314
    %v2267 = vpack.c.b16 %v1323, %v1315
    %v2268 = vpack.c.b16 %v1324, %v1316
    %v2269 = vpack.c.b16 %v1333, %v1325
    %v2270 = vpack.c.b16 %v1334, %v1326
    %v2271 = vpack.c.b16 %v1335, %v1327
    %v2272 = vpack.c.b16 %v1336, %v1328
    %v2273 = vpack.c.b16 %v1337, %v1329
    %v2274 = vpack.c.b16 %v1338, %v1330
    %v2275 = vpack.c.b16 %v1339, %v1331
    %v2276 = vpack.c.b16 %v1340, %v1332
    %v2277 = vpack.c.b16 %v1349, %v1341
    %v2278 = vpack.c.b16 %v1350, %v1342
    %v2279 = vpack.c.b16 %v1351, %v1343
    %v2280 = vpack.c.b16 %v1352, %v1344
    %v2281 = vpack.c.b16 %v1353, %v1345
    %v2282 = vpack.c.b16 %v1354, %v1346
    %v2283 = vpack.c.b16 %v1355, %v1347
    %v2284 = vpack.c.b16 %v1356, %v1348
    %v2285 = vpack.c.b16 %v1365, %v1357
    %v2286 = vpack.c.b16 %v1366, %v1358
    %v2287 = vpack.c.b16 %v1367, %v1359
    %v2288 = vpack.c.b16 %v1368, %v1360
    %v2289 = vpack.c.b16 %v1369, %v1361
    %v2290 = vpack.c.b16 %v1370, %v1362
    %v2291 = vpack.c.b16 %v1371, %v1363
    %v2292 = vpack.c.b16 %v1372, %v1364
    %v2293 = vpack.c.b16 %v1381, %v1373
    %v2294 = vpack.c.b16 %v1382, %v1374
    %v2295 = vpack.c.b16 %v1383, %v1375
    %v2296 = vpack.c.b16 %v1384, %v1376
    %v2297 = vpack.c.b16 %v1385, %v1377
    %v2298 = vpack.c.b16 %v1386, %v1378
    %v2299 = vpack.c.b16 %v1387, %v1379
    %v2300 = vpack.c.b16 %v1388, %v1380
    %v2301 = vpack.c.b16 %v1397, %v1389
    %v2302 = vpack.c.b16 %v1398, %v1390
    %v2303 = vpack.c.b16 %v1399, %v1391
    %v2304 = vpack.c.b16 %v1400, %v1392
    %v2305 = vpack.c.b16 %v1401, %v1393
    %v2306 = vpack.c.b16 %v1402, %v1394
    %v2307 = vpack.c.b16 %v1403, %v1395
    %v2308 = vpack.c.b16 %v1404, %v1396
    %v2309 = vpack.c.b16 %v1413, %v1405
    %v2310 = vpack.c.b16 %v1414, %v1406
    %v2311 = vpack.c.b16 %v1415, %v1407
    %v2312 = vpack.c.b16 %v1416, %v1408
    %v2313 = vpack.c.b16 %v1417, %v1409
    %v2314 = vpack.c.b16 %v1418, %v1410
    %v2315 = vpack.c.b16 %v1419, %v1411
    %v2316 = vpack.c.b16 %v1420, %v1412
    %v2317 = vpack.c.b16 %v1429, %v1421
    %v2318 = vpack.c.b16 %v1430, %v1422
    %v2319 = vpack.c.b16 %v1431, %v1423
    %v2320 = vpack.c.b16 %v1432, %v1424
    %v2321 = vpack.c.b16 %v1433, %v1425
    %v2322 = vpack.c.b16 %v1434, %v1426
    %v2323 = vpack.c.b16 %v1435, %v1427
    %v2324 = vpack.c.b16 %v1436, %v1428
    %v2325 = vpack.c.b16 %v1445, %v1437
    %v2326 = vpack.c.b16 %v1446, %v1438
    %v2327 = vpack.c.b16 %v1447, %v1439
    %v2328 = vpack.c.b16 %v1448, %v1440
    %v2329 = vpack.c.b16 %v1449, %v1441
    %v2330 = vpack.c.b16 %v1450, %v1442
    %v2331 = vpack.c.b16 %v1451, %v1443
    %v2332 = vpack.c.b16 %v1452, %v1444
    %v2333 = vpack.c.b16 %v1461, %v1453
    %v2334 = vpack.c.b16 %v1462, %v1454
    %v2335 = vpack.c.b16 %v1463, %v1455
    %v2336 = vpack.c.b16 %v1464, %v1456
    %v2337 = vpack.c.b16 %v1465, %v1457
    %v2338 = vpack.c.b16 %v1466, %v1458
    %v2339 = vpack.c.b16 %v1467, %v1459
    %v2340 = vpack.c.b16 %v1468, %v1460
    %v2341 = vpack.c.b16 %v1477, %v1469
    %v2342 = vpack.c.b16 %v1478, %v1470
    %v2343 = vpack.c.b16 %v1479, %v1471
    %v2344 = vpack.c.b16 %v1480, %v1472
    %v2345 = vpack.c.b16 %v1481, %v1473
    %v2346 = vpack.c.b16 %v1482, %v1474
    %v2347 = vpack.c.b16 %v1483, %v1475
    %v2348 = vpack.c.b16 %v1484, %v1476
    %v2349 = vpack.c.b16 %v1493, %v1485
    %v2350 = vpack.c.b16 %v1494, %v1486
    %v2351 = vpack.c.b16 %v1495, %v1487
    %v2352 = vpack.c.b16 %v1496, %v1488
    %v2353 = vpack.c.b16 %v1497, %v1489
    %v2354 = vpack.c.b16 %v1498, %v1490
    %v2355 = vpack.c.b16 %v1499, %v1491
    %v2356 = vpack.c.b16 %v1500, %v1492
    %v2357 = vpack.c.b16 %v1509, %v1501
    %v2358 = vpack.c.b16 %v1510, %v1502
    %v2359 = vpack.c.b16 %v1511, %v1503
    %v2360 = vpack.c.b16 %v1512, %v1504
    %v2361 = vpack.c.b16 %v1513, %v1505
    %v2362 = vpack.c.b16 %v1514, %v1506
    %v2363 = vpack.c.b16 %v1515, %v1507
    %v2364 = vpack.c.b16 %v1516, %v1508
    %v2365 = vpack.c.b16 %v1525, %v1517
    %v2366 = vpack.c.b16 %v1526, %v1518
    %v2367 = vpack.c.b16 %v1527, %v1519
    %v2368 = vpack.c.b16 %v1528, %v1520
    %v2369 = vpack.c.b16 %v1529, %v1521
    %v2370 = vpack.c.b16 %v1530, %v1522
    %v2371 = vpack.c.b16 %v1531, %v1523
    %v2372 = vpack.c.b16 %v1532, %v1524
    %v2373 = vpack.c.b16 %v1541, %v1533
    %v2374 = vpack.c.b16 %v1542, %v1534
    %v2375 = vpack.c.b16 %v1543, %v1535
    %v2376 = vpack.c.b16 %v1544, %v1536
    %v2377 = vpack.c.b16 %v1545, %v1537
    %v2378 = vpack.c.b16 %v1546, %v1538
    %v2379 = vpack.c.b16 %v1547, %v1539
    %v2380 = vpack.c.b16 %v1548, %v1540
    %v2381 = vpack.c.b16 %v1557, %v1549
    %v2382 = vpack.c.b16 %v1558, %v1550
    %v2383 = vpack.c.b16 %v1559, %v1551
    %v2384 = vpack.c.b16 %v1560, %v1552
    %v2385 = vpack.c.b16 %v1561, %v1553
    %v2386 = vpack.c.b16 %v1562, %v1554
    %v2387 = vpack.c.b16 %v1563, %v1555
    %v2388 = vpack.c.b16 %v1564, %v1556
    %v2389 = vpack.c.b16 %v1573, %v1565
    %v2390 = vpack.c.b16 %v1574, %v1566
    %v2391 = vpack.c.b16 %v1575, %v1567
    %v2392 = vpack.c.b16 %v1576, %v1568
    %v2393 = vpack.c.b16 %v1577, %v1569
    %v2394 = vpack.c.b16 %v1578, %v1570
    %v2395 = vpack.c.b16 %v1579, %v1571
    %v2396 = vpack.c.b16 %v1580, %v1572
    %v2397 = vpack.c.b16 %v1589, %v1581
    %v2398 = vpack.c.b16 %v1590, %v1582
    %v2399 = vpack.c.b16 %v1591, %v1583
    %v2400 = vpack.c.b16 %v1592, %v1584
    %v2401 = vpack.c.b16 %v1593, %v1585
    %v2402 = vpack.c.b16 %v1594, %v1586
    %v2403 = vpack.c.b16 %v1595, %v1587
    %v2404 = vpack.c.b16 %v1596, %v1588
    %v2405 = vpack.c.b16 %v1605, %v1597
    %v2406 = vpack.c.b16 %v1606, %v1598
    %v2407 = vpack.c.b16 %v1607, %v1599
    %v2408 = vpack.c.b16 %v1608, %v1600
    %v2409 = vpack.c.b16 %v1609, %v1601
    %v2410 = vpack.c.b16 %v1610, %v1602
    %v2411 = vpack.c.b16 %v1611, %v1603
    %v2412 = vpack.c.b16 %v1612, %v1604
    %v2413 = vpack.c.b16 %v1621, %v1613
    %v2414 = vpack.c.b16 %v1622, %v1614
    %v2415 = vpack.c.b16 %v1623, %v1615
    %v2416 = vpack.c.b16 %v1624, %v1616
    %v2417 = vpack.c.b16 %v1625, %v1617
    %v2418 = vpack.c.b16 %v1626, %v1618
    %v2419 = vpack.c.b16 %v1627, %v1619
    %v2420 = vpack.c.b16 %v1628, %v1620
    %v2421 = vpack.c.b16 %v1637, %v1629
    %v2422 = vpack.c.b16 %v1638, %v1630
    %v2423 = vpack.c.b16 %v1639, %v1631
    %v2424 = vpack.c.b16 %v1640, %v1632
    %v2425 = vpack.c.b16 %v1641, %v1633
    %v2426 = vpack.c.b16 %v1642, %v1634
    %v2427 = vpack.c.b16 %v1643, %v1635
    %v2428 = vpack.c.b16 %v1644, %v1636
    %v2429 = vpack.c.b16 %v1653, %v1645
    %v2430 = vpack.c.b16 %v1654, %v1646
    %v2431 = vpack.c.b16 %v1655, %v1647
    %v2432 = vpack.c.b16 %v1656, %v1648
    %v2433 = vpack.c.b16 %v1657, %v1649
    %v2434 = vpack.c.b16 %v1658, %v1650
    %v2435 = vpack.c.b16 %v1659, %v1651
    %v2436 = vpack.c.b16 %v1660, %v1652
    %v2437 = vpack.c.b16 %v1669, %v1661
    %v2438 = vpack.c.b16 %v1670, %v1662
    %v2439 = vpack.c.b16 %v1671, %v1663
    %v2440 = vpack.c.b16 %v1672, %v1664
    %v2441 = vpack.c.b16 %v1673, %v1665
    %v2442 = vpack.c.b16 %v1674, %v1666
    %v2443 = vpack.c.b16 %v1675, %v1667
    %v2444 = vpack.c.b16 %v1676, %v1668
    %v2445 = vpack.c.b16 %v1685, %v1677
    %v2446 = vpack.c.b16 %v1686, %v1678
    %v2447 = vpack.c.b16 %v1687, %v1679
    %v2448 = vpack.c.b16 %v1688, %v1680
    %v2449 = vpack.c.b16 %v1689, %v1681
    %v2450 = vpack.c.b16 %v1690, %v1682
    %v2451 = vpack.c.b16 %v1691, %v1683
    %v2452 = vpack.c.b16 %v1692, %v1684
    %v2453 = vpack.c.b16 %v1701, %v1693
    %v2454 = vpack.c.b16 %v1702, %v1694
    %v2455 = vpack.c.b16 %v1703, %v1695
    %v2456 = vpack.c.b16 %v1704, %v1696
    %v2457 = vpack.c.b16 %v1705, %v1697
    %v2458 = vpack.c.b16 %v1706, %v1698
    %v2459 = vpack.c.b16 %v1707, %v1699
    %v2460 = vpack.c.b16 %v1708, %v1700
    %v2461 = vpack.c.b16 %v1717, %v1709
    %v2462 = vpack.c.b16 %v1718, %v1710
    %v2463 = vpack.c.b16 %v1719, %v1711
    %v2464 = vpack.c.b16 %v1720, %v1712
    %v2465 = vpack.c.b16 %v1721, %v1713
    %v2466 = vpack.c.b16 %v1722, %v1714
    %v2467 = vpack.c.b16 %v1723, %v1715
    %v2468 = vpack.c.b16 %v1724, %v1716
    %v2469 = vpack.c.b16 %v1733, %v1725
    %v2470 = vpack.c.b16 %v1734, %v1726
    %v2471 = vpack.c.b16 %v1735, %v1727
    %v2472 = vpack.c.b16 %v1736, %v1728
    %v2473 = vpack.c.b16 %v1737, %v1729
    %v2474 = vpack.c.b16 %v1738, %v1730
    %v2475 = vpack.c.b16 %v1739, %v1731
    %v2476 = vpack.c.b16 %v1740, %v1732
    %v2477 = vpack.c.b16 %v1749, %v1741
    %v2478 = vpack.c.b16 %v1750, %v1742
    %v2479 = vpack.c.b16 %v1751, %v1743
    %v2480 = vpack.c.b16 %v1752, %v1744
    %v2481 = vpack.c.b16 %v1753, %v1745
    %v2482 = vpack.c.b16 %v1754, %v1746
    %v2483 = vpack.c.b16 %v1755, %v1747
    %v2484 = vpack.c.b16 %v1756, %v1748
    %v2485 = vpack.c.b16 %v1765, %v1757
    %v2486 = vpack.c.b16 %v1766, %v1758
    %v2487 = vpack.c.b16 %v1767, %v1759
    %v2488 = vpack.c.b16 %v1768, %v1760
    %v2489 = vpack.c.b16 %v1769, %v1761
    %v2490 = vpack.c.b16 %v1770, %v1762
    %v2491 = vpack.c.b16 %v1771, %v1763
    %v2492 = vpack.c.b16 %v1772, %v1764
    %v2493 = vpack.c.b16 %v1781, %v1773
    %v2494 = vpack.c.b16 %v1782, %v1774
    %v2495 = vpack.c.b16 %v1783, %v1775
    %v2496 = vpack.c.b16 %v1784, %v1776
    %v2497 = vpack.c.b16 %v1785, %v1777
    %v2498 = vpack.c.b16 %v1786, %v1778
    %v2499 = vpack.c.b16 %v1787, %v1779
    %v2500 = vpack.c.b16 %v1788, %v1780
    %v2501 = vpack.c.b16 %v1797, %v1789
    %v2502 = vpack.c.b16 %v1798, %v1790
    %v2503 = vpack.c.b16 %v1799, %v1791
    %v2504 = vpack.c.b16 %v1800, %v1792
    %v2505 = vpack.c.b16 %v1801, %v1793
    %v2506 = vpack.c.b16 %v1802, %v1794
    %v2507 = vpack.c.b16 %v1803, %v1795
    %v2508 = vpack.c.b16 %v1804, %v1796
    %v2509 = vpack.c.b16 %v1813, %v1805
    %v2510 = vpack.c.b16 %v1814, %v1806
    %v2511 = vpack.c.b16 %v1815, %v1807
    %v2512 = vpack.c.b16 %v1816, %v1808
    %v2513 = vpack.c.b16 %v1817, %v1809
    %v2514 = vpack.c.b16 %v1818, %v1810
    %v2515 = vpack.c.b16 %v1819, %v1811
    %v2516 = vpack.c.b16 %v1820, %v1812
    %v2517 = vpack.c.b16 %v1829, %v1821
    %v2518 = vpack.c.b16 %v1830, %v1822
    %v2519 = vpack.c.b16 %v1831, %v1823
    %v2520 = vpack.c.b16 %v1832, %v1824
    %v2521 = vpack.c.b16 %v1833, %v1825
    %v2522 = vpack.c.b16 %v1834, %v1826
    %v2523 = vpack.c.b16 %v1835, %v1827
    %v2524 = vpack.c.b16 %v1836, %v1828
    %v2525 = vpack.c.b16 %v1845, %v1837
    %v2526 = vpack.c.b16 %v1846, %v1838
    %v2527 = vpack.c.b16 %v1847, %v1839
    %v2528 = vpack.c.b16 %v1848, %v1840
    %v2529 = vpack.c.b16 %v1849, %v1841
    %v2530 = vpack.c.b16 %v1850, %v1842
    %v2531 = vpack.c.b16 %v1851, %v1843
    %v2532 = vpack.c.b16 %v1852, %v1844
    %v2533 = vpack.c.b16 %v1861, %v1853
    %v2534 = vpack.c.b16 %v1862, %v1854
    %v2535 = vpack.c.b16 %v1863, %v1855
    %v2536 = vpack.c.b16 %v1864, %v1856
    %v2537 = vpack.c.b16 %v1865, %v1857
    %v2538 = vpack.c.b16 %v1866, %v1858
    %v2539 = vpack.c.b16 %v1867, %v1859
    %v2540 = vpack.c.b16 %v1868, %v1860
    %v2541 = vpack.c.b16 %v1877, %v1869
    %v2542 = vpack.c.b16 %v1878, %v1870
    %v2543 = vpack.c.b16 %v1879, %v1871
    %v2544 = vpack.c.b16 %v1880, %v1872
    %v2545 = vpack.c.b16 %v1881, %v1873
    %v2546 = vpack.c.b16 %v1882, %v1874
    %v2547 = vpack.c.b16 %v1883, %v1875
    %v2548 = vpack.c.b16 %v1884, %v1876
    %v2549 = vpack.c.b16 %v1893, %v1885
    %v2550 = vpack.c.b16 %v1894, %v1886
    %v2551 = vpack.c.b16 %v1895, %v1887
    %v2552 = vpack.c.b16 %v1896, %v1888
    %v2553 = vpack.c.b16 %v1897, %v1889
    %v2554 = vpack.c.b16 %v1898, %v1890
    %v2555 = vpack.c.b16 %v1899, %v1891
    %v2556 = vpack.c.b16 %v1900, %v1892
    %v2557 = vpack.c.b16 %v1909, %v1901
    %v2558 = vpack.c.b16 %v1910, %v1902
    %v2559 = vpack.c.b16 %v1911, %v1903
    %v2560 = vpack.c.b16 %v1912, %v1904
    %v2561 = vpack.c.b16 %v1913, %v1905
    %v2562 = vpack.c.b16 %v1914, %v1906
    %v2563 = vpack.c.b16 %v1915, %v1907
    %v2564 = vpack.c.b16 %v1916, %v1908
    %v2565 = vpack.c.b16 %v1925, %v1917
    %v2566 = vpack.c.b16 %v1926, %v1918
    %v2567 = vpack.c.b16 %v1927, %v1919
    %v2568 = vpack.c.b16 %v1928, %v1920
    %v2569 = vpack.c.b16 %v1929, %v1921
    %v2570 = vpack.c.b16 %v1930, %v1922
    %v2571 = vpack.c.b16 %v1931, %v1923
    %v2572 = vpack.c.b16 %v1932, %v1924
    %v2573 = vpack.c.b16 %v1941, %v1933
    %v2574 = vpack.c.b16 %v1942, %v1934
    %v2575 = vpack.c.b16 %v1943, %v1935
    %v2576 = vpack.c.b16 %v1944, %v1936
    %v2577 = vpack.c.b16 %v1945, %v1937
    %v2578 = vpack.c.b16 %v1946, %v1938
    %v2579 = vpack.c.b16 %v1947, %v1939
    %v2580 = vpack.c.b16 %v1948, %v1940
    %v2581 = vpack.c.b16 %v1957, %v1949
    %v2582 = vpack.c.b16 %v1958, %v1950
    %v2583 = vpack.c.b16 %v1959, %v1951
    %v2584 = vpack.c.b16 %v1960, %v1952
    %v2585 = vpack.c.b16 %v1961, %v1953
    %v2586 = vpack.c.b16 %v1962, %v1954
    %v2587 = vpack.c.b16 %v1963, %v1955
    %v2588 = vpack.c.b16 %v1964, %v1956
    %v2589 = vpack.c.b16 %v1973, %v1965
    %v2590 = vpack.c.b16 %v1974, %v1966
    %v2591 = vpack.c.b16 %v1975, %v1967
    %v2592 = vpack.c.b16 %v1976, %v1968
    %v2593 = vpack.c.b16 %v1977, %v1969
    %v2594 = vpack.c.b16 %v1978, %v1970
    %v2595 = vpack.c.b16 %v1979, %v1971
    %v2596 = vpack.c.b16 %v1980, %v1972
    %v2597 = vpack.c.b16 %v1989, %v1981
    %v2598 = vpack.c.b16 %v1990, %v1982
    %v2599 = vpack.c.b16 %v1991, %v1983
    %v2600 = vpack.c.b16 %v1992, %v1984
    %v2601 = vpack.c.b16 %v1993, %v1985
    %v2602 = vpack.c.b16 %v1994, %v1986
    %v2603 = vpack.c.b16 %v1995, %v1987
    %v2604 = vpack.c.b16 %v1996, %v1988
    %v2605 = vpack.c.b16 %v2005, %v1997
    %v2606 = vpack.c.b16 %v2006, %v1998
    %v2607 = vpack.c.b16 %v2007, %v1999
    %v2608 = vpack.c.b16 %v2008, %v2000
    %v2609 = vpack.c.b16 %v2009, %v2001
    %v2610 = vpack.c.b16 %v2010, %v2002
    %v2611 = vpack.c.b16 %v2011, %v2003
    %v2612 = vpack.c.b16 %v2012, %v2004
    %v2613 = vpack.c.b16 %v2021, %v2013
    %v2614 = vpack.c.b16 %v2022, %v2014
    %v2615 = vpack.c.b16 %v2023, %v2015
    %v2616 = vpack.c.b16 %v2024, %v2016
    %v2617 = vpack.c.b16 %v2025, %v2017
    %v2618 = vpack.c.b16 %v2026, %v2018
    %v2619 = vpack.c.b16 %v2027, %v2019
    %v2620 = vpack.c.b16 %v2028, %v2020
    %v2621 = vpack.c.b16 %v2037, %v2029
    %v2622 = vpack.c.b16 %v2038, %v2030
    %v2623 = vpack.c.b16 %v2039, %v2031
    %v2624 = vpack.c.b16 %v2040, %v2032
    %v2625 = vpack.c.b16 %v2041, %v2033
    %v2626 = vpack.c.b16 %v2042, %v2034
    %v2627 = vpack.c.b16 %v2043, %v2035
    %v2628 = vpack.c.b16 %v2044, %v2036
    %v2629 = vpack.c.b16 %v2053, %v2045
    %v2630 = vpack.c.b16 %v2054, %v2046
    %v2631 = vpack.c.b16 %v2055, %v2047
    %v2632 = vpack.c.b16 %v2056, %v2048
    %v2633 = vpack.c.b16 %v2057, %v2049
    %v2634 = vpack.c.b16 %v2058, %v2050
    %v2635 = vpack.c.b16 %v2059, %v2051
    %v2636 = vpack.c.b16 %v2060, %v2052
    %v2637 = vpack.c.b16 %v2069, %v2061
    %v2638 = vpack.c.b16 %v2070, %v2062
    %v2639 = vpack.c.b16 %v2071, %v2063
    %v2640 = vpack.c.b16 %v2072, %v2064
    %v2641 = vpack.c.b16 %v2073, %v2065
    %v2642 = vpack.c.b16 %v2074, %v2066
    %v2643 = vpack.c.b16 %v2075, %v2067
    %v2644 = vpack.c.b16 %v2076, %v2068
    %v2645 = vpack.c.b16 %v2085, %v2077
    %v2646 = vpack.c.b16 %v2086, %v2078
    %v2647 = vpack.c.b16 %v2087, %v2079
    %v2648 = vpack.c.b16 %v2088, %v2080
    %v2649 = vpack.c.b16 %v2089, %v2081
    %v2650 = vpack.c.b16 %v2090, %v2082
    %v2651 = vpack.c.b16 %v2091, %v2083
    %v2652 = vpack.c.b16 %v2092, %v2084
    %v2653 = vpack.c.b16 %v2101, %v2093
    %v2654 = vpack.c.b16 %v2102, %v2094
    %v2655 = vpack.c.b16 %v2103, %v2095
    %v2656 = vpack.c.b16 %v2104, %v2096
    %v2657 = vpack.c.b16 %v2105, %v2097
    %v2658 = vpack.c.b16 %v2106, %v2098
    %v2659 = vpack.c.b16 %v2107, %v2099
    %v2660 = vpack.c.b16 %v2108, %v2100
    %v2661 = vpack.c.b16 %v2117, %v2109
    %v2662 = vpack.c.b16 %v2118, %v2110
    %v2663 = vpack.c.b16 %v2119, %v2111
    %v2664 = vpack.c.b16 %v2120, %v2112
    %v2665 = vpack.c.b16 %v2121, %v2113
    %v2666 = vpack.c.b16 %v2122, %v2114
    %v2667 = vpack.c.b16 %v2123, %v2115
    %v2668 = vpack.c.b16 %v2124, %v2116
    %v2669 = vpack.c.b16 %v2133, %v2125
    %v2670 = vpack.c.b16 %v2134, %v2126
    %v2671 = vpack.c.b16 %v2135, %v2127
    %v2672 = vpack.c.b16 %v2136, %v2128
    %v2673 = vpack.c.b16 %v2137, %v2129
    %v2674 = vpack.c.b16 %v2138, %v2130
    %v2675 = vpack.c.b16 %v2139, %v2131
    %v2676 = vpack.c.b16 %v2140, %v2132
    %v2677 = vpack.c.b16 %v2149, %v2141
    %v2678 = vpack.c.b16 %v2150, %v2142
    %v2679 = vpack.c.b16 %v2151, %v2143
    %v2680 = vpack.c.b16 %v2152, %v2144
    %v2681 = vpack.c.b16 %v2153, %v2145
    %v2682 = vpack.c.b16 %v2154, %v2146
    %v2683 = vpack.c.b16 %v2155, %v2147
    %v2684 = vpack.c.b16 %v2156, %v2148
    %v2685 = vpack.c.b16 %v2165, %v2157
    %v2686 = vpack.c.b16 %v2166, %v2158
    %v2687 = vpack.c.b16 %v2167, %v2159
    %v2688 = vpack.c.b16 %v2168, %v2160
    %v2689 = vpack.c.b16 %v2169, %v2161
    %v2690 = vpack.c.b16 %v2170, %v2162
    %v2691 = vpack.c.b16 %v2171, %v2163
    %v2692 = vpack.c.b16 %v2172, %v2164
    %v2693 = vpack.c.b16 %v2181, %v2173
    %v2694 = vpack.c.b16 %v2182, %v2174
    %v2695 = vpack.c.b16 %v2183, %v2175
    %v2696 = vpack.c.b16 %v2184, %v2176
    %v2697 = vpack.c.b16 %v2185, %v2177
    %v2698 = vpack.c.b16 %v2186, %v2178
    %v2699 = vpack.c.b16 %v2187, %v2179
    %v2700 = vpack.c.b16 %v2188, %v2180
    %3213 = vmatprep.subr.bf16.mxu0 %v2190
    %3214 = vmatpush1.bf16.msra.mxu0 %v2189
    %3215 = vmatprep.subr.bf16.mxu0 %v2198
    %3216 = vmatpush1.bf16.msra.mxu0 %v2197
    %3217 = vmatprep.subr.bf16.mxu0 %v2206
    %3218 = vmatpush1.bf16.msra.mxu0 %v2205
    %3219 = vmatprep.subr.bf16.mxu0 %v2214
    %3220 = vmatpush1.bf16.msra.mxu0 %v2213
    %3221 = vmatprep.subr.bf16.mxu0 %v2222
    %3222 = vmatpush1.bf16.msra.mxu0 %v2221
    %3223 = vmatprep.subr.bf16.mxu0 %v2230
    %3224 = vmatpush1.bf16.msra.mxu0 %v2229
    %3225 = vmatprep.subr.bf16.mxu0 %v2238
    %3226 = vmatpush1.bf16.msra.mxu0 %v2237
    %3227 = vmatprep.subr.bf16.mxu0 %v2246
    %3228 = vmatpush1.bf16.msra.mxu0 %v2245
    %3229 = vmatprep.subr.bf16.mxu0 %v2254
    %3230 = vmatpush1.bf16.msra.mxu0 %v2253
    %3231 = vmatprep.subr.bf16.mxu0 %v2262
    %3232 = vmatpush1.bf16.msra.mxu0 %v2261
    %3233 = vmatprep.subr.bf16.mxu0 %v2270
    %3234 = vmatpush1.bf16.msra.mxu0 %v2269
    %3235 = vmatprep.subr.bf16.mxu0 %v2278
    %3236 = vmatpush1.bf16.msra.mxu0 %v2277
    %3237 = vmatprep.subr.bf16.mxu0 %v2286
    %3238 = vmatpush1.bf16.msra.mxu0 %v2285
    %3239 = vmatprep.subr.bf16.mxu0 %v2294
    %3240 = vmatpush1.bf16.msra.mxu0 %v2293
    %3241 = vmatprep.subr.bf16.mxu0 %v2302
    %3242 = vmatpush1.bf16.msra.mxu0 %v2301
    %3243 = vmatprep.subr.bf16.mxu0 %v2310
    %3244 = vmatpush1.bf16.msra.mxu0 %v2309
    %3245 = vmatprep.mubr.bf16.mxu0 %v633
    %3246 = vmatmul.mubr.bf16.gmra.mrb[0].mxu0 %v619
    %v3247 = vpop.f32.mrb[0].mxu0
    %v3248 = vadd.f32 0.0, %v3247
    %v3249 = vpop.f32.mrb[0].mxu0
    %v3250 = vadd.f32 0.0, %v3249
    %v3251 = vpop.f32.mrb[0].mxu0
    %v3252 = vpop.f32.mrb[0].mxu0
    %3253 = vdwg.mxu0
    %3254 = vmatprep.subr.bf16.mxu0 %v2318
    %3255 = vmatpush1.bf16.msra.mxu0 %v2317
    %3256 = vmatprep.subr.bf16.mxu0 %v2326
    %3257 = vmatpush1.bf16.msra.mxu0 %v2325
    %3258 = vmatprep.subr.bf16.mxu0 %v2334
    %3259 = vmatpush1.bf16.msra.mxu0 %v2333
    %3260 = vmatprep.subr.bf16.mxu0 %v2342
    %3261 = vmatpush1.bf16.msra.mxu0 %v2341
    %3262 = vmatprep.subr.bf16.mxu0 %v2350
    %3263 = vmatpush1.bf16.msra.mxu0 %v2349
    %3264 = vmatprep.subr.bf16.mxu0 %v2358
    %3265 = vmatpush1.bf16.msra.mxu0 %v2357
    %3266 = vmatprep.subr.bf16.mxu0 %v2366
    %3267 = vmatpush1.bf16.msra.mxu0 %v2365
    %3268 = vmatprep.subr.bf16.mxu0 %v2374
    %3269 = vmatpush1.bf16.msra.mxu0 %v2373
    %3270 = vmatprep.subr.bf16.mxu0 %v2382
    %3271 = vmatpush1.bf16.msra.mxu0 %v2381
    %3272 = vmatprep.subr.bf16.mxu0 %v2390
    %3273 = vmatpush1.bf16.msra.mxu0 %v2389
    %3274 = vmatprep.subr.bf16.mxu0 %v2398
    %3275 = vmatpush1.bf16.msra.mxu0 %v2397
    %3276 = vmatprep.subr.bf16.mxu0 %v2406
    %3277 = vmatpush1.bf16.msra.mxu0 %v2405
    %3278 = vmatprep.subr.bf16.mxu0 %v2414
    %3279 = vmatpush1.bf16.msra.mxu0 %v2413
    %3280 = vmatprep.subr.bf16.mxu0 %v2422
    %3281 = vmatpush1.bf16.msra.mxu0 %v2421
    %3282 = vmatprep.subr.bf16.mxu0 %v2430
    %3283 = vmatpush1.bf16.msra.mxu0 %v2429
    %3284 = vmatprep.subr.bf16.mxu0 %v2438
    %3285 = vmatpush1.bf16.msra.mxu0 %v2437
    %3286 = vmatprep.mubr.bf16.mxu0 %v643
    %3287 = vmatmul.mubr.bf16.gmra.mrb[0].mxu0 %v641
    %v3288 = vpop.f32.mrb[0].mxu0
    %v3289 = vadd.f32 %v3248, %v3288
    %v3290 = vpop.f32.mrb[0].mxu0
    %v3291 = vadd.f32 %v3250, %v3290
    %v3292 = vpop.f32.mrb[0].mxu0
    %v3293 = vpop.f32.mrb[0].mxu0
    %3294 = vdwg.mxu0
    %3295 = vmatprep.subr.bf16.mxu0 %v2446
    %3296 = vmatpush1.bf16.msra.mxu0 %v2445
    %3297 = vmatprep.subr.bf16.mxu0 %v2454
    %3298 = vmatpush1.bf16.msra.mxu0 %v2453
    %3299 = vmatprep.subr.bf16.mxu0 %v2462
    %3300 = vmatpush1.bf16.msra.mxu0 %v2461
    %3301 = vmatprep.subr.bf16.mxu0 %v2470
    %3302 = vmatpush1.bf16.msra.mxu0 %v2469
    %3303 = vmatprep.subr.bf16.mxu0 %v2478
    %3304 = vmatpush1.bf16.msra.mxu0 %v2477
    %3305 = vmatprep.subr.bf16.mxu0 %v2486
    %3306 = vmatpush1.bf16.msra.mxu0 %v2485
    %3307 = vmatprep.subr.bf16.mxu0 %v2494
    %3308 = vmatpush1.bf16.msra.mxu0 %v2493
    %3309 = vmatprep.subr.bf16.mxu0 %v2502
    %3310 = vmatpush1.bf16.msra.mxu0 %v2501
    %3311 = vmatprep.subr.bf16.mxu0 %v2510
    %3312 = vmatpush1.bf16.msra.mxu0 %v2509
    %3313 = vmatprep.subr.bf16.mxu0 %v2518
    %3314 = vmatpush1.bf16.msra.mxu0 %v2517
    %3315 = vmatprep.subr.bf16.mxu0 %v2526
    %3316 = vmatpush1.bf16.msra.mxu0 %v2525
    %3317 = vmatprep.subr.bf16.mxu0 %v2534
    %3318 = vmatpush1.bf16.msra.mxu0 %v2533
    %3319 = vmatprep.subr.bf16.mxu0 %v2542
    %3320 = vmatpush1.bf16.msra.mxu0 %v2541
    %3321 = vmatprep.subr.bf16.mxu0 %v2550
    %3322 = vmatpush1.bf16.msra.mxu0 %v2549
    %3323 = vmatprep.subr.bf16.mxu0 %v2558
    %3324 = vmatpush1.bf16.msra.mxu0 %v2557
    %3325 = vmatprep.subr.bf16.mxu0 %v2566
    %3326 = vmatpush1.bf16.msra.mxu0 %v2565
    %3327 = vmatprep.mubr.bf16.mxu0 %v640
    %3328 = vmatmul.mubr.bf16.gmra.mrb[0].mxu0 %v626
    %v3329 = vpop.f32.mrb[0].mxu0
    %v3330 = vadd.f32 %v3289, %v3329
    %v3331 = vpop.f32.mrb[0].mxu0
    %v3332 = vadd.f32 %v3291, %v3331
    %v3333 = vpop.f32.mrb[0].mxu0
    %v3334 = vpop.f32.mrb[0].mxu0
    %3335 = vdwg.mxu0
    %3336 = vmatprep.subr.bf16.mxu0 %v2574
    %3337 = vmatpush1.bf16.msra.mxu0 %v2573
    %3338 = vmatprep.subr.bf16.mxu0 %v2582
    %3339 = vmatpush1.bf16.msra.mxu0 %v2581
    %3340 = vmatprep.subr.bf16.mxu0 %v2590
    %3341 = vmatpush1.bf16.msra.mxu0 %v2589
    %3342 = vmatprep.subr.bf16.mxu0 %v2598
    %3343 = vmatpush1.bf16.msra.mxu0 %v2597
    %3344 = vmatprep.subr.bf16.mxu0 %v2606
    %3345 = vmatpush1.bf16.msra.mxu0 %v2605
    %3346 = vmatprep.subr.bf16.mxu0 %v2614
    %3347 = vmatpush1.bf16.msra.mxu0 %v2613
    %3348 = vmatprep.subr.bf16.mxu0 %v2622
    %3349 = vmatpush1.bf16.msra.mxu0 %v2621
    %3350 = vmatprep.subr.bf16.mxu0 %v2630
    %3351 = vmatpush1.bf16.msra.mxu0 %v2629
    %3352 = vmatprep.subr.bf16.mxu0 %v2638
    %3353 = vmatpush1.bf16.msra.mxu0 %v2637
    %3354 = vmatprep.subr.bf16.mxu0 %v2646
    %3355 = vmatpush1.bf16.msra.mxu0 %v2645
    %3356 = vmatprep.subr.bf16.mxu0 %v2654
    %3357 = vmatpush1.bf16.msra.mxu0 %v2653
    %3358 = vmatprep.subr.bf16.mxu0 %v2662
    %3359 = vmatpush1.bf16.msra.mxu0 %v2661
    %3360 = vmatprep.subr.bf16.mxu0 %v2670
    %3361 = vmatpush1.bf16.msra.mxu0 %v2669
    %3362 = vmatprep.subr.bf16.mxu0 %v2678
    %3363 = vmatpush1.bf16.msra.mxu0 %v2677
    %3364 = vmatprep.subr.bf16.mxu0 %v2686
    %3365 = vmatpush1.bf16.msra.mxu0 %v2685
    %3366 = vmatprep.subr.bf16.mxu0 %v2694
    %3367 = vmatpush1.bf16.msra.mxu0 %v2693
    %3368 = vmatprep.mubr.bf16.mxu0 %v644
    %3369 = vmatmul.mubr.bf16.gmra.mrb[0].mxu0 %v642
    %v3370 = vpop.f32.mrb[0].mxu0
    %v3371 = vadd.f32 %v3330, %v3370
    %v3372 = vpop.f32.mrb[0].mxu0
    %v3373 = vadd.f32 %v3332, %v3372
    %v3374 = vpop.f32.mrb[0].mxu0
    %v3375 = vpop.f32.mrb[0].mxu0
    %3376 = vdwg.mxu0
    %3377 = vmatprep.subr.bf16.mxu0 %v2192
    %3378 = vmatpush1.bf16.msra.mxu0 %v2191
    %3379 = vmatprep.subr.bf16.mxu0 %v2200
    %3380 = vmatpush1.bf16.msra.mxu0 %v2199
    %3381 = vmatprep.subr.bf16.mxu0 %v2208
    %3382 = vmatpush1.bf16.msra.mxu0 %v2207
    %3383 = vmatprep.subr.bf16.mxu0 %v2216
    %3384 = vmatpush1.bf16.msra.mxu0 %v2215
    %3385 = vmatprep.subr.bf16.mxu0 %v2224
    %3386 = vmatpush1.bf16.msra.mxu0 %v2223
    %3387 = vmatprep.subr.bf16.mxu0 %v2232
    %3388 = vmatpush1.bf16.msra.mxu0 %v2231
    %3389 = vmatprep.subr.bf16.mxu0 %v2240
    %3390 = vmatpush1.bf16.msra.mxu0 %v2239
    %3391 = vmatprep.subr.bf16.mxu0 %v2248
    %3392 = vmatpush1.bf16.msra.mxu0 %v2247
    %3393 = vmatprep.subr.bf16.mxu0 %v2256
    %3394 = vmatpush1.bf16.msra.mxu0 %v2255
    %3395 = vmatprep.subr.bf16.mxu0 %v2264
    %3396 = vmatpush1.bf16.msra.mxu0 %v2263
    %3397 = vmatprep.subr.bf16.mxu0 %v2272
    %3398 = vmatpush1.bf16.msra.mxu0 %v2271
    %3399 = vmatprep.subr.bf16.mxu0 %v2280
    %3400 = vmatpush1.bf16.msra.mxu0 %v2279
    %3401 = vmatprep.subr.bf16.mxu0 %v2288
    %3402 = vmatpush1.bf16.msra.mxu0 %v2287
    %3403 = vmatprep.subr.bf16.mxu0 %v2296
    %3404 = vmatpush1.bf16.msra.mxu0 %v2295
    %3405 = vmatprep.subr.bf16.mxu0 %v2304
    %3406 = vmatpush1.bf16.msra.mxu0 %v2303
    %3407 = vmatprep.subr.bf16.mxu0 %v2312
    %3408 = vmatpush1.bf16.msra.mxu0 %v2311
    %3409 = vmatprep.mubr.bf16.mxu0 %v633
    %3410 = vmatmul.mubr.bf16.gmra.mrb[0].mxu0 %v619
    %v3411 = vpop.f32.mrb[0].mxu0
    %v3412 = vadd.f32 0.0, %v3411
    %v3413 = vpop.f32.mrb[0].mxu0
    %v3414 = vadd.f32 0.0, %v3413
    %v3415 = vpop.f32.mrb[0].mxu0
    %v3416 = vpop.f32.mrb[0].mxu0
    %3417 = vdwg.mxu0
    %3418 = vmatprep.subr.bf16.mxu0 %v2320
    %3419 = vmatpush1.bf16.msra.mxu0 %v2319
    %3420 = vmatprep.subr.bf16.mxu0 %v2328
    %3421 = vmatpush1.bf16.msra.mxu0 %v2327
    %3422 = vmatprep.subr.bf16.mxu0 %v2336
    %3423 = vmatpush1.bf16.msra.mxu0 %v2335
    %3424 = vmatprep.subr.bf16.mxu0 %v2344
    %3425 = vmatpush1.bf16.msra.mxu0 %v2343
    %3426 = vmatprep.subr.bf16.mxu0 %v2352
    %3427 = vmatpush1.bf16.msra.mxu0 %v2351
    %3428 = vmatprep.subr.bf16.mxu0 %v2360
    %3429 = vmatpush1.bf16.msra.mxu0 %v2359
    %3430 = vmatprep.subr.bf16.mxu0 %v2368
    %3431 = vmatpush1.bf16.msra.mxu0 %v2367
    %3432 = vmatprep.subr.bf16.mxu0 %v2376
    %3433 = vmatpush1.bf16.msra.mxu0 %v2375
    %3434 = vmatprep.subr.bf16.mxu0 %v2384
    %3435 = vmatpush1.bf16.msra.mxu0 %v2383
    %3436 = vmatprep.subr.bf16.mxu0 %v2392
    %3437 = vmatpush1.bf16.msra.mxu0 %v2391
    %3438 = vmatprep.subr.bf16.mxu0 %v2400
    %3439 = vmatpush1.bf16.msra.mxu0 %v2399
    %3440 = vmatprep.subr.bf16.mxu0 %v2408
    %3441 = vmatpush1.bf16.msra.mxu0 %v2407
    %3442 = vmatprep.subr.bf16.mxu0 %v2416
    %3443 = vmatpush1.bf16.msra.mxu0 %v2415
    %3444 = vmatprep.subr.bf16.mxu0 %v2424
    %3445 = vmatpush1.bf16.msra.mxu0 %v2423
    %3446 = vmatprep.subr.bf16.mxu0 %v2432
    %3447 = vmatpush1.bf16.msra.mxu0 %v2431
    %3448 = vmatprep.subr.bf16.mxu0 %v2440
    %3449 = vmatpush1.bf16.msra.mxu0 %v2439
    %3450 = vmatprep.mubr.bf16.mxu0 %v643
    %3451 = vmatmul.mubr.bf16.gmra.mrb[0].mxu0 %v641
    %v3452 = vpop.f32.mrb[0].mxu0
    %v3453 = vadd.f32 %v3412, %v3452
    %v3454 = vpop.f32.mrb[0].mxu0
    %v3455 = vadd.f32 %v3414, %v3454
    %v3456 = vpop.f32.mrb[0].mxu0
    %v3457 = vpop.f32.mrb[0].mxu0
    %3458 = vdwg.mxu0
    %3459 = vmatprep.subr.bf16.mxu0 %v2448
    %3460 = vmatpush1.bf16.msra.mxu0 %v2447
    %3461 = vmatprep.subr.bf16.mxu0 %v2456
    %3462 = vmatpush1.bf16.msra.mxu0 %v2455
    %3463 = vmatprep.subr.bf16.mxu0 %v2464
    %3464 = vmatpush1.bf16.msra.mxu0 %v2463
    %3465 = vmatprep.subr.bf16.mxu0 %v2472
    %3466 = vmatpush1.bf16.msra.mxu0 %v2471
    %3467 = vmatprep.subr.bf16.mxu0 %v2480
    %3468 = vmatpush1.bf16.msra.mxu0 %v2479
    %3469 = vmatprep.subr.bf16.mxu0 %v2488
    %3470 = vmatpush1.bf16.msra.mxu0 %v2487
    %3471 = vmatprep.subr.bf16.mxu0 %v2496
    %3472 = vmatpush1.bf16.msra.mxu0 %v2495
    %3473 = vmatprep.subr.bf16.mxu0 %v2504
    %3474 = vmatpush1.bf16.msra.mxu0 %v2503
    %3475 = vmatprep.subr.bf16.mxu0 %v2512
    %3476 = vmatpush1.bf16.msra.mxu0 %v2511
    %3477 = vmatprep.subr.bf16.mxu0 %v2520
    %3478 = vmatpush1.bf16.msra.mxu0 %v2519
    %3479 = vmatprep.subr.bf16.mxu0 %v2528
    %3480 = vmatpush1.bf16.msra.mxu0 %v2527
    %3481 = vmatprep.subr.bf16.mxu0 %v2536
    %3482 = vmatpush1.bf16.msra.mxu0 %v2535
    %3483 = vmatprep.subr.bf16.mxu0 %v2544
    %3484 = vmatpush1.bf16.msra.mxu0 %v2543
    %3485 = vmatprep.subr.bf16.mxu0 %v2552
    %3486 = vmatpush1.bf16.msra.mxu0 %v2551
    %3487 = vmatprep.subr.bf16.mxu0 %v2560
    %3488 = vmatpush1.bf16.msra.mxu0 %v2559
    %3489 = vmatprep.subr.bf16.mxu0 %v2568
    %3490 = vmatpush1.bf16.msra.mxu0 %v2567
    %3491 = vmatprep.mubr.bf16.mxu0 %v640
    %3492 = vmatmul.mubr.bf16.gmra.mrb[0].mxu0 %v626
    %v3493 = vpop.f32.mrb[0].mxu0
    %v3494 = vadd.f32 %v3453, %v3493
    %v3495 = vpop.f32.mrb[0].mxu0
    %v3496 = vadd.f32 %v3455, %v3495
    %v3497 = vpop.f32.mrb[0].mxu0
    %v3498 = vpop.f32.mrb[0].mxu0
    %3499 = vdwg.mxu0
    %3500 = vmatprep.subr.bf16.mxu0 %v2576
    %3501 = vmatpush1.bf16.msra.mxu0 %v2575
    %3502 = vmatprep.subr.bf16.mxu0 %v2584
    %3503 = vmatpush1.bf16.msra.mxu0 %v2583
    %3504 = vmatprep.subr.bf16.mxu0 %v2592
    %3505 = vmatpush1.bf16.msra.mxu0 %v2591
    %3506 = vmatprep.subr.bf16.mxu0 %v2600
    %3507 = vmatpush1.bf16.msra.mxu0 %v2599
    %3508 = vmatprep.subr.bf16.mxu0 %v2608
    %3509 = vmatpush1.bf16.msra.mxu0 %v2607
    %3510 = vmatprep.subr.bf16.mxu0 %v2616
    %3511 = vmatpush1.bf16.msra.mxu0 %v2615
    %3512 = vmatprep.subr.bf16.mxu0 %v2624
    %3513 = vmatpush1.bf16.msra.mxu0 %v2623
    %3514 = vmatprep.subr.bf16.mxu0 %v2632
    %3515 = vmatpush1.bf16.msra.mxu0 %v2631
    %3516 = vmatprep.subr.bf16.mxu0 %v2640
    %3517 = vmatpush1.bf16.msra.mxu0 %v2639
    %3518 = vmatprep.subr.bf16.mxu0 %v2648
    %3519 = vmatpush1.bf16.msra.mxu0 %v2647
    %3520 = vmatprep.subr.bf16.mxu0 %v2656
    %3521 = vmatpush1.bf16.msra.mxu0 %v2655
    %3522 = vmatprep.subr.bf16.mxu0 %v2664
    %3523 = vmatpush1.bf16.msra.mxu0 %v2663
    %3524 = vmatprep.subr.bf16.mxu0 %v2672
    %3525 = vmatpush1.bf16.msra.mxu0 %v2671
    %3526 = vmatprep.subr.bf16.mxu0 %v2680
    %3527 = vmatpush1.bf16.msra.mxu0 %v2679
    %3528 = vmatprep.subr.bf16.mxu0 %v2688
    %3529 = vmatpush1.bf16.msra.mxu0 %v2687
    %3530 = vmatprep.subr.bf16.mxu0 %v2696
    %3531 = vmatpush1.bf16.msra.mxu0 %v2695
    %3532 = vmatprep.mubr.bf16.mxu0 %v644
    %3533 = vmatmul.mubr.bf16.gmra.mrb[0].mxu0 %v642
    %v3534 = vpop.f32.mrb[0].mxu0
    %v3535 = vadd.f32 %v3494, %v3534
    %v3536 = vpop.f32.mrb[0].mxu0
    %v3537 = vadd.f32 %v3496, %v3536
    %v3538 = vpop.f32.mrb[0].mxu0
    %v3539 = vpop.f32.mrb[0].mxu0
    %3540 = vdwg.mxu0
    %3541 = vmatprep.subr.bf16.mxu0 %v2194
    %3542 = vmatpush1.bf16.msra.mxu0 %v2193
    %3543 = vmatprep.subr.bf16.mxu0 %v2202
    %3544 = vmatpush1.bf16.msra.mxu0 %v2201
    %3545 = vmatprep.subr.bf16.mxu0 %v2210
    %3546 = vmatpush1.bf16.msra.mxu0 %v2209
    %3547 = vmatprep.subr.bf16.mxu0 %v2218
    %3548 = vmatpush1.bf16.msra.mxu0 %v2217
    %3549 = vmatprep.subr.bf16.mxu0 %v2226
    %3550 = vmatpush1.bf16.msra.mxu0 %v2225
    %3551 = vmatprep.subr.bf16.mxu0 %v2234
    %3552 = vmatpush1.bf16.msra.mxu0 %v2233
    %3553 = vmatprep.subr.bf16.mxu0 %v2242
    %3554 = vmatpush1.bf16.msra.mxu0 %v2241
    %3555 = vmatprep.subr.bf16.mxu0 %v2250
    %3556 = vmatpush1.bf16.msra.mxu0 %v2249
    %3557 = vmatprep.subr.bf16.mxu0 %v2258
    %3558 = vmatpush1.bf16.msra.mxu0 %v2257
    %3559 = vmatprep.subr.bf16.mxu0 %v2266
    %3560 = vmatpush1.bf16.msra.mxu0 %v2265
    %3561 = vmatprep.subr.bf16.mxu0 %v2274
    %3562 = vmatpush1.bf16.msra.mxu0 %v2273
    %3563 = vmatprep.subr.bf16.mxu0 %v2282
    %3564 = vmatpush1.bf16.msra.mxu0 %v2281
    %3565 = vmatprep.subr.bf16.mxu0 %v2290
    %3566 = vmatpush1.bf16.msra.mxu0 %v2289
    %3567 = vmatprep.subr.bf16.mxu0 %v2298
    %3568 = vmatpush1.bf16.msra.mxu0 %v2297
    %3569 = vmatprep.subr.bf16.mxu0 %v2306
    %3570 = vmatpush1.bf16.msra.mxu0 %v2305
    %3571 = vmatprep.subr.bf16.mxu0 %v2314
    %3572 = vmatpush1.bf16.msra.mxu0 %v2313
    %3573 = vmatprep.mubr.bf16.mxu0 %v633
    %3574 = vmatmul.mubr.bf16.gmra.mrb[0].mxu0 %v619
    %v3575 = vpop.f32.mrb[0].mxu0
    %v3576 = vadd.f32 0.0, %v3575
    %v3577 = vpop.f32.mrb[0].mxu0
    %v3578 = vadd.f32 0.0, %v3577
    %v3579 = vpop.f32.mrb[0].mxu0
    %v3580 = vpop.f32.mrb[0].mxu0
    %3581 = vdwg.mxu0
    %3582 = vmatprep.subr.bf16.mxu0 %v2322
    %3583 = vmatpush1.bf16.msra.mxu0 %v2321
    %3584 = vmatprep.subr.bf16.mxu0 %v2330
    %3585 = vmatpush1.bf16.msra.mxu0 %v2329
    %3586 = vmatprep.subr.bf16.mxu0 %v2338
    %3587 = vmatpush1.bf16.msra.mxu0 %v2337
    %3588 = vmatprep.subr.bf16.mxu0 %v2346
    %3589 = vmatpush1.bf16.msra.mxu0 %v2345
    %3590 = vmatprep.subr.bf16.mxu0 %v2354
    %3591 = vmatpush1.bf16.msra.mxu0 %v2353
    %3592 = vmatprep.subr.bf16.mxu0 %v2362
    %3593 = vmatpush1.bf16.msra.mxu0 %v2361
    %3594 = vmatprep.subr.bf16.mxu0 %v2370
    %3595 = vmatpush1.bf16.msra.mxu0 %v2369
    %3596 = vmatprep.subr.bf16.mxu0 %v2378
    %3597 = vmatpush1.bf16.msra.mxu0 %v2377
    %3598 = vmatprep.subr.bf16.mxu0 %v2386
    %3599 = vmatpush1.bf16.msra.mxu0 %v2385
    %3600 = vmatprep.subr.bf16.mxu0 %v2394
    %3601 = vmatpush1.bf16.msra.mxu0 %v2393
    %3602 = vmatprep.subr.bf16.mxu0 %v2402
    %3603 = vmatpush1.bf16.msra.mxu0 %v2401
    %3604 = vmatprep.subr.bf16.mxu0 %v2410
    %3605 = vmatpush1.bf16.msra.mxu0 %v2409
    %3606 = vmatprep.subr.bf16.mxu0 %v2418
    %3607 = vmatpush1.bf16.msra.mxu0 %v2417
    %3608 = vmatprep.subr.bf16.mxu0 %v2426
    %3609 = vmatpush1.bf16.msra.mxu0 %v2425
    %3610 = vmatprep.subr.bf16.mxu0 %v2434
    %3611 = vmatpush1.bf16.msra.mxu0 %v2433
    %3612 = vmatprep.subr.bf16.mxu0 %v2442
    %3613 = vmatpush1.bf16.msra.mxu0 %v2441
    %3614 = vmatprep.mubr.bf16.mxu0 %v643
    %3615 = vmatmul.mubr.bf16.gmra.mrb[0].mxu0 %v641
    %v3616 = vpop.f32.mrb[0].mxu0
    %v3617 = vadd.f32 %v3576, %v3616
    %v3618 = vpop.f32.mrb[0].mxu0
    %v3619 = vadd.f32 %v3578, %v3618
    %v3620 = vpop.f32.mrb[0].mxu0
    %v3621 = vpop.f32.mrb[0].mxu0
    %3622 = vdwg.mxu0
    %3623 = vmatprep.subr.bf16.mxu0 %v2450
    %3624 = vmatpush1.bf16.msra.mxu0 %v2449
    %3625 = vmatprep.subr.bf16.mxu0 %v2458
    %3626 = vmatpush1.bf16.msra.mxu0 %v2457
    %3627 = vmatprep.subr.bf16.mxu0 %v2466
    %3628 = vmatpush1.bf16.msra.mxu0 %v2465
    %3629 = vmatprep.subr.bf16.mxu0 %v2474
    %3630 = vmatpush1.bf16.msra.mxu0 %v2473
    %3631 = vmatprep.subr.bf16.mxu0 %v2482
    %3632 = vmatpush1.bf16.msra.mxu0 %v2481
    %3633 = vmatprep.subr.bf16.mxu0 %v2490
    %3634 = vmatpush1.bf16.msra.mxu0 %v2489
    %3635 = vmatprep.subr.bf16.mxu0 %v2498
    %3636 = vmatpush1.bf16.msra.mxu0 %v2497
    %3637 = vmatprep.subr.bf16.mxu0 %v2506
    %3638 = vmatpush1.bf16.msra.mxu0 %v2505
    %3639 = vmatprep.subr.bf16.mxu0 %v2514
    %3640 = vmatpush1.bf16.msra.mxu0 %v2513
    %3641 = vmatprep.subr.bf16.mxu0 %v2522
    %3642 = vmatpush1.bf16.msra.mxu0 %v2521
    %3643 = vmatprep.subr.bf16.mxu0 %v2530
    %3644 = vmatpush1.bf16.msra.mxu0 %v2529
    %3645 = vmatprep.subr.bf16.mxu0 %v2538
    %3646 = vmatpush1.bf16.msra.mxu0 %v2537
    %3647 = vmatprep.subr.bf16.mxu0 %v2546
    %3648 = vmatpush1.bf16.msra.mxu0 %v2545
    %3649 = vmatprep.subr.bf16.mxu0 %v2554
    %3650 = vmatpush1.bf16.msra.mxu0 %v2553
    %3651 = vmatprep.subr.bf16.mxu0 %v2562
    %3652 = vmatpush1.bf16.msra.mxu0 %v2561
    %3653 = vmatprep.subr.bf16.mxu0 %v2570
    %3654 = vmatpush1.bf16.msra.mxu0 %v2569
    %3655 = vmatprep.mubr.bf16.mxu0 %v640
    %3656 = vmatmul.mubr.bf16.gmra.mrb[0].mxu0 %v626
    %v3657 = vpop.f32.mrb[0].mxu0
    %v3658 = vadd.f32 %v3617, %v3657
    %v3659 = vpop.f32.mrb[0].mxu0
    %v3660 = vadd.f32 %v3619, %v3659
    %v3661 = vpop.f32.mrb[0].mxu0
    %v3662 = vpop.f32.mrb[0].mxu0
    %3663 = vdwg.mxu0
    %3664 = vmatprep.subr.bf16.mxu0 %v2578
    %3665 = vmatpush1.bf16.msra.mxu0 %v2577
    %3666 = vmatprep.subr.bf16.mxu0 %v2586
    %3667 = vmatpush1.bf16.msra.mxu0 %v2585
    %3668 = vmatprep.subr.bf16.mxu0 %v2594
    %3669 = vmatpush1.bf16.msra.mxu0 %v2593
    %3670 = vmatprep.subr.bf16.mxu0 %v2602
    %3671 = vmatpush1.bf16.msra.mxu0 %v2601
    %3672 = vmatprep.subr.bf16.mxu0 %v2610
    %3673 = vmatpush1.bf16.msra.mxu0 %v2609
    %3674 = vmatprep.subr.bf16.mxu0 %v2618
    %3675 = vmatpush1.bf16.msra.mxu0 %v2617
    %3676 = vmatprep.subr.bf16.mxu0 %v2626
    %3677 = vmatpush1.bf16.msra.mxu0 %v2625
    %3678 = vmatprep.subr.bf16.mxu0 %v2634
    %3679 = vmatpush1.bf16.msra.mxu0 %v2633
    %3680 = vmatprep.subr.bf16.mxu0 %v2642
    %3681 = vmatpush1.bf16.msra.mxu0 %v2641
    %3682 = vmatprep.subr.bf16.mxu0 %v2650
    %3683 = vmatpush1.bf16.msra.mxu0 %v2649
    %3684 = vmatprep.subr.bf16.mxu0 %v2658
    %3685 = vmatpush1.bf16.msra.mxu0 %v2657
    %3686 = vmatprep.subr.bf16.mxu0 %v2666
    %3687 = vmatpush1.bf16.msra.mxu0 %v2665
    %3688 = vmatprep.subr.bf16.mxu0 %v2674
    %3689 = vmatpush1.bf16.msra.mxu0 %v2673
    %3690 = vmatprep.subr.bf16.mxu0 %v2682
    %3691 = vmatpush1.bf16.msra.mxu0 %v2681
    %3692 = vmatprep.subr.bf16.mxu0 %v2690
    %3693 = vmatpush1.bf16.msra.mxu0 %v2689
    %3694 = vmatprep.subr.bf16.mxu0 %v2698
    %3695 = vmatpush1.bf16.msra.mxu0 %v2697
    %3696 = vmatprep.mubr.bf16.mxu0 %v644
    %3697 = vmatmul.mubr.bf16.gmra.mrb[0].mxu0 %v642
    %v3698 = vpop.f32.mrb[0].mxu0
    %v3699 = vadd.f32 %v3658, %v3698
    %v3700 = vpop.f32.mrb[0].mxu0
    %v3701 = vadd.f32 %v3660, %v3700
    %v3702 = vpop.f32.mrb[0].mxu0
    %v3703 = vpop.f32.mrb[0].mxu0
    %3704 = vdwg.mxu0
    %3705 = vmatprep.subr.bf16.mxu0 %v2196
    %3706 = vmatpush1.bf16.msra.mxu0 %v2195
    %3707 = vmatprep.subr.bf16.mxu0 %v2204
    %3708 = vmatpush1.bf16.msra.mxu0 %v2203
    %3709 = vmatprep.subr.bf16.mxu0 %v2212
    %3710 = vmatpush1.bf16.msra.mxu0 %v2211
    %3711 = vmatprep.subr.bf16.mxu0 %v2220
    %3712 = vmatpush1.bf16.msra.mxu0 %v2219
    %3713 = vmatprep.subr.bf16.mxu0 %v2228
    %3714 = vmatpush1.bf16.msra.mxu0 %v2227
    %3715 = vmatprep.subr.bf16.mxu0 %v2236
    %3716 = vmatpush1.bf16.msra.mxu0 %v2235
    %3717 = vmatprep.subr.bf16.mxu0 %v2244
    %3718 = vmatpush1.bf16.msra.mxu0 %v2243
    %3719 = vmatprep.subr.bf16.mxu0 %v2252
    %3720 = vmatpush1.bf16.msra.mxu0 %v2251
    %3721 = vmatprep.subr.bf16.mxu0 %v2260
    %3722 = vmatpush1.bf16.msra.mxu0 %v2259
    %3723 = vmatprep.subr.bf16.mxu0 %v2268
    %3724 = vmatpush1.bf16.msra.mxu0 %v2267
    %3725 = vmatprep.subr.bf16.mxu0 %v2276
    %3726 = vmatpush1.bf16.msra.mxu0 %v2275
    %3727 = vmatprep.subr.bf16.mxu0 %v2284
    %3728 = vmatpush1.bf16.msra.mxu0 %v2283
    %3729 = vmatprep.subr.bf16.mxu0 %v2292
    %3730 = vmatpush1.bf16.msra.mxu0 %v2291
    %3731 = vmatprep.subr.bf16.mxu0 %v2300
    %3732 = vmatpush1.bf16.msra.mxu0 %v2299
    %3733 = vmatprep.subr.bf16.mxu0 %v2308
    %3734 = vmatpush1.bf16.msra.mxu0 %v2307
    %3735 = vmatprep.subr.bf16.mxu0 %v2316
    %3736 = vmatpush1.bf16.msra.mxu0 %v2315
    %3737 = vmatprep.mubr.bf16.mxu0 %v633
    %3738 = vmatmul.mubr.bf16.gmra.mrb[0].mxu0 %v619
    %v3739 = vpop.f32.mrb[0].mxu0
    %v3740 = vadd.f32 0.0, %v3739
    %v3741 = vpop.f32.mrb[0].mxu0
    %v3742 = vadd.f32 0.0, %v3741
    %v3743 = vpop.f32.mrb[0].mxu0
    %v3744 = vpop.f32.mrb[0].mxu0
    %3745 = vdwg.mxu0
    %3746 = vmatprep.subr.bf16.mxu0 %v2324
    %3747 = vmatpush1.bf16.msra.mxu0 %v2323
    %3748 = vmatprep.subr.bf16.mxu0 %v2332
    %3749 = vmatpush1.bf16.msra.mxu0 %v2331
    %3750 = vmatprep.subr.bf16.mxu0 %v2340
    %3751 = vmatpush1.bf16.msra.mxu0 %v2339
    %3752 = vmatprep.subr.bf16.mxu0 %v2348
    %3753 = vmatpush1.bf16.msra.mxu0 %v2347
    %3754 = vmatprep.subr.bf16.mxu0 %v2356
    %3755 = vmatpush1.bf16.msra.mxu0 %v2355
    %3756 = vmatprep.subr.bf16.mxu0 %v2364
    %3757 = vmatpush1.bf16.msra.mxu0 %v2363
    %3758 = vmatprep.subr.bf16.mxu0 %v2372
    %3759 = vmatpush1.bf16.msra.mxu0 %v2371
    %3760 = vmatprep.subr.bf16.mxu0 %v2380
    %3761 = vmatpush1.bf16.msra.mxu0 %v2379
    %3762 = vmatprep.subr.bf16.mxu0 %v2388
    %3763 = vmatpush1.bf16.msra.mxu0 %v2387
    %3764 = vmatprep.subr.bf16.mxu0 %v2396
    %3765 = vmatpush1.bf16.msra.mxu0 %v2395
    %3766 = vmatprep.subr.bf16.mxu0 %v2404
    %3767 = vmatpush1.bf16.msra.mxu0 %v2403
    %3768 = vmatprep.subr.bf16.mxu0 %v2412
    %3769 = vmatpush1.bf16.msra.mxu0 %v2411
    %3770 = vmatprep.subr.bf16.mxu0 %v2420
    %3771 = vmatpush1.bf16.msra.mxu0 %v2419
    %3772 = vmatprep.subr.bf16.mxu0 %v2428
    %3773 = vmatpush1.bf16.msra.mxu0 %v2427
    %3774 = vmatprep.subr.bf16.mxu0 %v2436
    %3775 = vmatpush1.bf16.msra.mxu0 %v2435
    %3776 = vmatprep.subr.bf16.mxu0 %v2444
    %3777 = vmatpush1.bf16.msra.mxu0 %v2443
    %3778 = vmatprep.mubr.bf16.mxu0 %v643
    %3779 = vmatmul.mubr.bf16.gmra.mrb[0].mxu0 %v641
    %v3780 = vpop.f32.mrb[0].mxu0
    %v3781 = vadd.f32 %v3740, %v3780
    %v3782 = vpop.f32.mrb[0].mxu0
    %v3783 = vadd.f32 %v3742, %v3782
    %v3784 = vpop.f32.mrb[0].mxu0
    %v3785 = vpop.f32.mrb[0].mxu0
    %3786 = vdwg.mxu0
    %3787 = vmatprep.subr.bf16.mxu0 %v2452
    %3788 = vmatpush1.bf16.msra.mxu0 %v2451
    %3789 = vmatprep.subr.bf16.mxu0 %v2460
    %3790 = vmatpush1.bf16.msra.mxu0 %v2459
    %3791 = vmatprep.subr.bf16.mxu0 %v2468
    %3792 = vmatpush1.bf16.msra.mxu0 %v2467
    %3793 = vmatprep.subr.bf16.mxu0 %v2476
    %3794 = vmatpush1.bf16.msra.mxu0 %v2475
    %3795 = vmatprep.subr.bf16.mxu0 %v2484
    %3796 = vmatpush1.bf16.msra.mxu0 %v2483
    %3797 = vmatprep.subr.bf16.mxu0 %v2492
    %3798 = vmatpush1.bf16.msra.mxu0 %v2491
    %3799 = vmatprep.subr.bf16.mxu0 %v2500
    %3800 = vmatpush1.bf16.msra.mxu0 %v2499
    %3801 = vmatprep.subr.bf16.mxu0 %v2508
    %3802 = vmatpush1.bf16.msra.mxu0 %v2507
    %3803 = vmatprep.subr.bf16.mxu0 %v2516
    %3804 = vmatpush1.bf16.msra.mxu0 %v2515
    %3805 = vmatprep.subr.bf16.mxu0 %v2524
    %3806 = vmatpush1.bf16.msra.mxu0 %v2523
    %3807 = vmatprep.subr.bf16.mxu0 %v2532
    %3808 = vmatpush1.bf16.msra.mxu0 %v2531
    %3809 = vmatprep.subr.bf16.mxu0 %v2540
    %3810 = vmatpush1.bf16.msra.mxu0 %v2539
    %3811 = vmatprep.subr.bf16.mxu0 %v2548
    %3812 = vmatpush1.bf16.msra.mxu0 %v2547
    %3813 = vmatprep.subr.bf16.mxu0 %v2556
    %3814 = vmatpush1.bf16.msra.mxu0 %v2555
    %3815 = vmatprep.subr.bf16.mxu0 %v2564
    %3816 = vmatpush1.bf16.msra.mxu0 %v2563
    %3817 = vmatprep.subr.bf16.mxu0 %v2572
    %3818 = vmatpush1.bf16.msra.mxu0 %v2571
    %3819 = vmatprep.mubr.bf16.mxu0 %v640
    %3820 = vmatmul.mubr.bf16.gmra.mrb[0].mxu0 %v626
    %v3821 = vpop.f32.mrb[0].mxu0
    %v3822 = vadd.f32 %v3781, %v3821
    %v3823 = vpop.f32.mrb[0].mxu0
    %v3824 = vadd.f32 %v3783, %v3823
    %v3825 = vpop.f32.mrb[0].mxu0
    %v3826 = vpop.f32.mrb[0].mxu0
    %3827 = vdwg.mxu0
    %3828 = vmatprep.subr.bf16.mxu0 %v2580
    %3829 = vmatpush1.bf16.msra.mxu0 %v2579
    %3830 = vmatprep.subr.bf16.mxu0 %v2588
    %3831 = vmatpush1.bf16.msra.mxu0 %v2587
    %3832 = vmatprep.subr.bf16.mxu0 %v2596
    %3833 = vmatpush1.bf16.msra.mxu0 %v2595
    %3834 = vmatprep.subr.bf16.mxu0 %v2604
    %3835 = vmatpush1.bf16.msra.mxu0 %v2603
    %3836 = vmatprep.subr.bf16.mxu0 %v2612
    %3837 = vmatpush1.bf16.msra.mxu0 %v2611
    %3838 = vmatprep.subr.bf16.mxu0 %v2620
    %3839 = vmatpush1.bf16.msra.mxu0 %v2619
    %3840 = vmatprep.subr.bf16.mxu0 %v2628
    %3841 = vmatpush1.bf16.msra.mxu0 %v2627
    %3842 = vmatprep.subr.bf16.mxu0 %v2636
    %3843 = vmatpush1.bf16.msra.mxu0 %v2635
    %3844 = vmatprep.subr.bf16.mxu0 %v2644
    %3845 = vmatpush1.bf16.msra.mxu0 %v2643
    %3846 = vmatprep.subr.bf16.mxu0 %v2652
    %3847 = vmatpush1.bf16.msra.mxu0 %v2651
    %3848 = vmatprep.subr.bf16.mxu0 %v2660
    %3849 = vmatpush1.bf16.msra.mxu0 %v2659
    %3850 = vmatprep.subr.bf16.mxu0 %v2668
    %3851 = vmatpush1.bf16.msra.mxu0 %v2667
    %3852 = vmatprep.subr.bf16.mxu0 %v2676
    %3853 = vmatpush1.bf16.msra.mxu0 %v2675
    %3854 = vmatprep.subr.bf16.mxu0 %v2684
    %3855 = vmatpush1.bf16.msra.mxu0 %v2683
    %3856 = vmatprep.subr.bf16.mxu0 %v2692
    %3857 = vmatpush1.bf16.msra.mxu0 %v2691
    %3858 = vmatprep.subr.bf16.mxu0 %v2700
    %3859 = vmatpush1.bf16.msra.mxu0 %v2699
    %3860 = vmatprep.mubr.bf16.mxu0 %v644
    %3861 = vmatmul.mubr.bf16.gmra.mrb[0].mxu0 %v642
    %v3862 = vpop.f32.mrb[0].mxu0
    %v3863 = vadd.f32 %v3822, %v3862
    %v3864 = vpop.f32.mrb[0].mxu0
    %v3865 = vadd.f32 %v3824, %v3864
    %v3866 = vpop.f32.mrb[0].mxu0
    %v3867 = vpop.f32.mrb[0].mxu0
    %3868 = vdwg.mxu0
    %v3877 = vcombine.low %v3371, %v3373
    %v3878 = vcombine.low %v3535, %v3537
    %v3880 = vunpack.c.l.s4 1983009808
    %v3881 = vunpack.c.0.s8 %v3880
    %v3882 = vlaneseq
    %v3883 = vshrl.u32 %v3882, 7
    %v3884 = vsub.s32 %v3881, %v3883
    %v3885 = vrot.slane %v3877, %v3884
    %v3887 = vunpack.c.l.s4 1983009808
    %v3888 = vunpack.c.0.s8 %v3887
    %v3889 = vlaneseq
    %v3890 = vshrl.u32 %v3889, 7
    %v3891 = vsub.s32 %v3888, %v3890
    %v3892 = vrot.slane %v3878, %v3891
    %v3893 = vcombine.low %v3885, %v3892
    %v3894 = vcombine.low %v3699, %v3701
    %v3895 = vcombine.low %v3863, %v3865
    %v3897 = vunpack.c.l.s4 1983009808
    %v3898 = vunpack.c.0.s8 %v3897
    %v3899 = vlaneseq
    %v3900 = vshrl.u32 %v3899, 7
    %v3901 = vsub.s32 %v3898, %v3900
    %v3902 = vrot.slane %v3894, %v3901
    %v3904 = vunpack.c.l.s4 1983009808
    %v3905 = vunpack.c.0.s8 %v3904
    %v3906 = vlaneseq
    %v3907 = vshrl.u32 %v3906, 7
    %v3908 = vsub.s32 %v3905, %v3907
    %v3909 = vrot.slane %v3895, %v3908
    %v3910 = vcombine.low %v3902, %v3909
    %v3913 = vadd.f32 %v77, %v3893
    %v3914 = vadd.f32 %v78, %v3910
    %3915 = vst [vmem:[#allocation2] sm:$0xff] %v3913
    %3916 = vst [vmem:[#allocation2 + $0x8] sm:$0xff] %v3914
    // Predicated region
    $region38: #{tpu_custom_call.1} parent=1 // pred_check
      %p3917 = pneg %p70
    $region39: #{tpu_custom_call.1} parent=1 // pred_check_branch
      %3919 = sbr.rel (%p3917) target = $region41
    $region40: #{tpu_custom_call.1} parent=1 // pred_region
      %v3920 = vld [vmem:[#allocation2] sm:$0xff]
      %v3921 = vld [vmem:[#allocation2 + $0x8] sm:$0xff]
      %v3922 = vld [vmem:[#allocation8] sm:$0xff]
      %v3924 = vlaneseq
      %v3925 = vshrl.u32 %v3924, 7
      %v3926 = vsub.s32 0, %v3925
      %v3927 = vrot.slane %v3922, %v3926
      %v3928 = vlaneseq
      %v3929 = vshrl.u32 %v3928, 7
      %v3930 = vsub.s32 1, %v3929
      %v3931 = vrot.slane %v3922, %v3930
      %v3932 = vlaneseq
      %v3933 = vshrl.u32 %v3932, 7
      %v3934 = vsub.s32 2, %v3933
      %v3935 = vrot.slane %v3922, %v3934
      %v3936 = vlaneseq
      %v3937 = vshrl.u32 %v3936, 7
      %v3938 = vsub.s32 3, %v3937
      %v3939 = vrot.slane %v3922, %v3938
      %v3940 = vlaneseq
      %v3941 = vshrl.u32 %v3940, 7
      %v3942 = vsub.s32 4, %v3941
      %v3943 = vrot.slane %v3922, %v3942
      %v3944 = vlaneseq
      %v3945 = vshrl.u32 %v3944, 7
      %v3946 = vsub.s32 5, %v3945
      %v3947 = vrot.slane %v3922, %v3946
      %v3948 = vlaneseq
      %v3949 = vshrl.u32 %v3948, 7
      %v3950 = vsub.s32 6, %v3949
      %v3951 = vrot.slane %v3922, %v3950
      %v3952 = vlaneseq
      %v3953 = vshrl.u32 %v3952, 7
      %v3954 = vsub.s32 7, %v3953
      %v3955 = vrot.slane %v3922, %v3954
      %v3956 = vcombine.low %v3927, %v3931
      %v3957 = vcombine.low %v3935, %v3939
      %v3959 = vunpack.c.l.s4 1983009808
      %v3960 = vunpack.c.0.s8 %v3959
      %v3961 = vlaneseq
      %v3962 = vshrl.u32 %v3961, 7
      %v3963 = vsub.s32 %v3960, %v3962
      %v3964 = vrot.slane %v3956, %v3963
      %v3966 = vunpack.c.l.s4 1983009808
      %v3967 = vunpack.c.0.s8 %v3966
      %v3968 = vlaneseq
      %v3969 = vshrl.u32 %v3968, 7
      %v3970 = vsub.s32 %v3967, %v3969
      %v3971 = vrot.slane %v3957, %v3970
      %v3972 = vcombine.low %v3964, %v3971
      %v3973 = vcombine.low %v3943, %v3947
      %v3974 = vcombine.low %v3951, %v3955
      %v3976 = vunpack.c.l.s4 1983009808
      %v3977 = vunpack.c.0.s8 %v3976
      %v3978 = vlaneseq
      %v3979 = vshrl.u32 %v3978, 7
      %v3980 = vsub.s32 %v3977, %v3979
      %v3981 = vrot.slane %v3973, %v3980
      %v3983 = vunpack.c.l.s4 1983009808
      %v3984 = vunpack.c.0.s8 %v3983
      %v3985 = vlaneseq
      %v3986 = vshrl.u32 %v3985, 7
      %v3987 = vsub.s32 %v3984, %v3986
      %v3988 = vrot.slane %v3974, %v3987
      %v3989 = vcombine.low %v3981, %v3988
      %v3992 = vadd.f32 %v3920, %v3972
      %v3993 = vadd.f32 %v3921, %v3989
      %v3994 = vmax.f32 %v3992, 0.0
      %v3995 = vmax.f32 %v3993, 0.0
      %v3998 = vcombine.high %v3994, %v3994
      %v4000 = vunpack.c.l.s4 1983009808
      %v4001 = vunpack.c.0.s8 %v4000
      %v4002 = vlaneseq
      %v4003 = vshrl.u32 %v4002, 7
      %v4004 = vsub.s32 %v4001, %v4003
      %v4005 = vrot.slane %v3994, %v4004
      %v4007 = vunpack.c.l.s4 1983009808
      %v4008 = vunpack.c.0.s8 %v4007
      %v4009 = vlaneseq
      %v4010 = vshrl.u32 %v4009, 7
      %v4011 = vsub.s32 %v4008, %v4010
      %v4012 = vrot.slane %v3998, %v4011
      %v4013 = vcombine.high %v4005, %v4005
      %v4014 = vcombine.high %v4012, %v4012
      %v4015 = vcombine.high %v3995, %v3995
      %v4017 = vunpack.c.l.s4 1983009808
      %v4018 = vunpack.c.0.s8 %v4017
      %v4019 = vlaneseq
      %v4020 = vshrl.u32 %v4019, 7
      %v4021 = vsub.s32 %v4018, %v4020
      %v4022 = vrot.slane %v3995, %v4021
      %v4024 = vunpack.c.l.s4 1983009808
      %v4025 = vunpack.c.0.s8 %v4024
      %v4026 = vlaneseq
      %v4027 = vshrl.u32 %v4026, 7
      %v4028 = vsub.s32 %v4025, %v4027
      %v4029 = vrot.slane %v4015, %v4028
      %v4030 = vcombine.high %v4022, %v4022
      %v4031 = vcombine.high %v4029, %v4029
      %v4040 = vpack.c.bf16 %v4005, %v4005
      %v4041 = vpack.c.bf16 %v4013, %v4013
      %v4042 = vpack.c.bf16 %v4012, %v4012
      %v4043 = vpack.c.bf16 %v4014, %v4014
      %v4044 = vpack.c.bf16 %v4022, %v4022
      %v4045 = vpack.c.bf16 %v4030, %v4030
      %v4046 = vpack.c.bf16 %v4029, %v4029
      %v4047 = vpack.c.bf16 %v4031, %v4031
      %v4048 = vld [vmem:[#allocation9] sm:$0xf]
      %v4049 = vld [vmem:[#allocation9 + $0x4] sm:$0xf]
      %v4050 = vld [vmem:[#allocation9 + $0x8] sm:$0xf]
      %v4051 = vld [vmem:[#allocation9 + $0xc] sm:$0xf]
      %v4052 = vld [vmem:[#allocation9 + $0x10] sm:$0xf]
      %v4053 = vld [vmem:[#allocation9 + $0x14] sm:$0xf]
      %v4054 = vld [vmem:[#allocation9 + $0x18] sm:$0xf]
      %v4055 = vld [vmem:[#allocation9 + $0x1c] sm:$0xf]
      %v4056 = vld [vmem:[#allocation9 + $0x20] sm:$0xf]
      %v4057 = vld [vmem:[#allocation9 + $0x24] sm:$0xf]
      %v4058 = vld [vmem:[#allocation9 + $0x28] sm:$0xf]
      %v4059 = vld [vmem:[#allocation9 + $0x2c] sm:$0xf]
      %v4060 = vld [vmem:[#allocation9 + $0x30] sm:$0xf]
      %v4061 = vld [vmem:[#allocation9 + $0x34] sm:$0xf]
      %v4062 = vld [vmem:[#allocation9 + $0x38] sm:$0xf]
      %v4063 = vld [vmem:[#allocation9 + $0x3c] sm:$0xf]
      %v4064 = vld [vmem:[#allocation9 + $0x40] sm:$0xf]
      %v4065 = vld [vmem:[#allocation9 + $0x44] sm:$0xf]
      %v4066 = vld [vmem:[#allocation9 + $0x48] sm:$0xf]
      %v4067 = vld [vmem:[#allocation9 + $0x4c] sm:$0xf]
      %v4068 = vld [vmem:[#allocation9 + $0x50] sm:$0xf]
      %v4069 = vld [vmem:[#allocation9 + $0x54] sm:$0xf]
      %v4070 = vld [vmem:[#allocation9 + $0x58] sm:$0xf]
      %v4071 = vld [vmem:[#allocation9 + $0x5c] sm:$0xf]
      %v4072 = vld [vmem:[#allocation9 + $0x60] sm:$0xf]
      %v4073 = vld [vmem:[#allocation9 + $0x64] sm:$0xf]
      %v4074 = vld [vmem:[#allocation9 + $0x68] sm:$0xf]
      %v4075 = vld [vmem:[#allocation9 + $0x6c] sm:$0xf]
      %v4076 = vld [vmem:[#allocation9 + $0x70] sm:$0xf]
      %v4077 = vld [vmem:[#allocation9 + $0x74] sm:$0xf]
      %v4078 = vld [vmem:[#allocation9 + $0x78] sm:$0xf]
      %v4079 = vld [vmem:[#allocation9 + $0x7c] sm:$0xf]
      %v4080 = vld [vmem:[#allocation9 + $0x80] sm:$0xf]
      %v4081 = vld [vmem:[#allocation9 + $0x84] sm:$0xf]
      %v4082 = vld [vmem:[#allocation9 + $0x88] sm:$0xf]
      %v4083 = vld [vmem:[#allocation9 + $0x8c] sm:$0xf]
      %v4084 = vld [vmem:[#allocation9 + $0x90] sm:$0xf]
      %v4085 = vld [vmem:[#allocation9 + $0x94] sm:$0xf]
      %v4086 = vld [vmem:[#allocation9 + $0x98] sm:$0xf]
      %v4087 = vld [vmem:[#allocation9 + $0x9c] sm:$0xf]
      %v4088 = vld [vmem:[#allocation9 + $0xa0] sm:$0xf]
      %v4089 = vld [vmem:[#allocation9 + $0xa4] sm:$0xf]
      %v4090 = vld [vmem:[#allocation9 + $0xa8] sm:$0xf]
      %v4091 = vld [vmem:[#allocation9 + $0xac] sm:$0xf]
      %v4092 = vld [vmem:[#allocation9 + $0xb0] sm:$0xf]
      %v4093 = vld [vmem:[#allocation9 + $0xb4] sm:$0xf]
      %v4094 = vld [vmem:[#allocation9 + $0xb8] sm:$0xf]
      %v4095 = vld [vmem:[#allocation9 + $0xbc] sm:$0xf]
      %v4096 = vld [vmem:[#allocation9 + $0xc0] sm:$0xf]
      %v4097 = vld [vmem:[#allocation9 + $0xc4] sm:$0xf]
      %v4098 = vld [vmem:[#allocation9 + $0xc8] sm:$0xf]
      %v4099 = vld [vmem:[#allocation9 + $0xcc] sm:$0xf]
      %v4100 = vld [vmem:[#allocation9 + $0xd0] sm:$0xf]
      %v4101 = vld [vmem:[#allocation9 + $0xd4] sm:$0xf]
      %v4102 = vld [vmem:[#allocation9 + $0xd8] sm:$0xf]
      %v4103 = vld [vmem:[#allocation9 + $0xdc] sm:$0xf]
      %v4104 = vld [vmem:[#allocation9 + $0xe0] sm:$0xf]
      %v4105 = vld [vmem:[#allocation9 + $0xe4] sm:$0xf]
      %v4106 = vld [vmem:[#allocation9 + $0xe8] sm:$0xf]
      %v4107 = vld [vmem:[#allocation9 + $0xec] sm:$0xf]
      %v4108 = vld [vmem:[#allocation9 + $0xf0] sm:$0xf]
      %v4109 = vld [vmem:[#allocation9 + $0xf4] sm:$0xf]
      %v4110 = vld [vmem:[#allocation9 + $0xf8] sm:$0xf]
      %v4111 = vld [vmem:[#allocation9 + $0xfc] sm:$0xf]
      %v4112 = vld [vmem:[#allocation9 + $0x100] sm:$0xf]
      %v4113 = vld [vmem:[#allocation9 + $0x104] sm:$0xf]
      %v4114 = vld [vmem:[#allocation9 + $0x108] sm:$0xf]
      %v4115 = vld [vmem:[#allocation9 + $0x10c] sm:$0xf]
      %v4116 = vld [vmem:[#allocation9 + $0x110] sm:$0xf]
      %v4117 = vld [vmem:[#allocation9 + $0x114] sm:$0xf]
      %v4118 = vld [vmem:[#allocation9 + $0x118] sm:$0xf]
      %v4119 = vld [vmem:[#allocation9 + $0x11c] sm:$0xf]
      %v4120 = vld [vmem:[#allocation9 + $0x120] sm:$0xf]
      %v4121 = vld [vmem:[#allocation9 + $0x124] sm:$0xf]
      %v4122 = vld [vmem:[#allocation9 + $0x128] sm:$0xf]
      %v4123 = vld [vmem:[#allocation9 + $0x12c] sm:$0xf]
      %v4124 = vld [vmem:[#allocation9 + $0x130] sm:$0xf]
      %v4125 = vld [vmem:[#allocation9 + $0x134] sm:$0xf]
      %v4126 = vld [vmem:[#allocation9 + $0x138] sm:$0xf]
      %v4127 = vld [vmem:[#allocation9 + $0x13c] sm:$0xf]
      %v4128 = vld [vmem:[#allocation9 + $0x140] sm:$0xf]
      %v4129 = vld [vmem:[#allocation9 + $0x144] sm:$0xf]
      %v4130 = vld [vmem:[#allocation9 + $0x148] sm:$0xf]
      %v4131 = vld [vmem:[#allocation9 + $0x14c] sm:$0xf]
      %v4132 = vld [vmem:[#allocation9 + $0x150] sm:$0xf]
      %v4133 = vld [vmem:[#allocation9 + $0x154] sm:$0xf]
      %v4134 = vld [vmem:[#allocation9 + $0x158] sm:$0xf]
      %v4135 = vld [vmem:[#allocation9 + $0x15c] sm:$0xf]
      %v4136 = vld [vmem:[#allocation9 + $0x160] sm:$0xf]
      %v4137 = vld [vmem:[#allocation9 + $0x164] sm:$0xf]
      %v4138 = vld [vmem:[#allocation9 + $0x168] sm:$0xf]
      %v4139 = vld [vmem:[#allocation9 + $0x16c] sm:$0xf]
      %v4140 = vld [vmem:[#allocation9 + $0x170] sm:$0xf]
      %v4141 = vld [vmem:[#allocation9 + $0x174] sm:$0xf]
      %v4142 = vld [vmem:[#allocation9 + $0x178] sm:$0xf]
      %v4143 = vld [vmem:[#allocation9 + $0x17c] sm:$0xf]
      %v4144 = vld [vmem:[#allocation9 + $0x180] sm:$0xf]
      %v4145 = vld [vmem:[#allocation9 + $0x184] sm:$0xf]
      %v4146 = vld [vmem:[#allocation9 + $0x188] sm:$0xf]
      %v4147 = vld [vmem:[#allocation9 + $0x18c] sm:$0xf]
      %v4148 = vld [vmem:[#allocation9 + $0x190] sm:$0xf]
      %v4149 = vld [vmem:[#allocation9 + $0x194] sm:$0xf]
      %v4150 = vld [vmem:[#allocation9 + $0x198] sm:$0xf]
      %v4151 = vld [vmem:[#allocation9 + $0x19c] sm:$0xf]
      %v4152 = vld [vmem:[#allocation9 + $0x1a0] sm:$0xf]
      %v4153 = vld [vmem:[#allocation9 + $0x1a4] sm:$0xf]
      %v4154 = vld [vmem:[#allocation9 + $0x1a8] sm:$0xf]
      %v4155 = vld [vmem:[#allocation9 + $0x1ac] sm:$0xf]
      %v4156 = vld [vmem:[#allocation9 + $0x1b0] sm:$0xf]
      %v4157 = vld [vmem:[#allocation9 + $0x1b4] sm:$0xf]
      %v4158 = vld [vmem:[#allocation9 + $0x1b8] sm:$0xf]
      %v4159 = vld [vmem:[#allocation9 + $0x1bc] sm:$0xf]
      %v4160 = vld [vmem:[#allocation9 + $0x1c0] sm:$0xf]
      %v4161 = vld [vmem:[#allocation9 + $0x1c4] sm:$0xf]
      %v4162 = vld [vmem:[#allocation9 + $0x1c8] sm:$0xf]
      %v4163 = vld [vmem:[#allocation9 + $0x1cc] sm:$0xf]
      %v4164 = vld [vmem:[#allocation9 + $0x1d0] sm:$0xf]
      %v4165 = vld [vmem:[#allocation9 + $0x1d4] sm:$0xf]
      %v4166 = vld [vmem:[#allocation9 + $0x1d8] sm:$0xf]
      %v4167 = vld [vmem:[#allocation9 + $0x1dc] sm:$0xf]
      %v4168 = vld [vmem:[#allocation9 + $0x1e0] sm:$0xf]
      %v4169 = vld [vmem:[#allocation9 + $0x1e4] sm:$0xf]
      %v4170 = vld [vmem:[#allocation9 + $0x1e8] sm:$0xf]
      %v4171 = vld [vmem:[#allocation9 + $0x1ec] sm:$0xf]
      %v4172 = vld [vmem:[#allocation9 + $0x1f0] sm:$0xf]
      %v4173 = vld [vmem:[#allocation9 + $0x1f4] sm:$0xf]
      %v4174 = vld [vmem:[#allocation9 + $0x1f8] sm:$0xf]
      %v4175 = vld [vmem:[#allocation9 + $0x1fc] sm:$0xf]
      %v4304 = vunpack.c.l.b16 %v4048
      %v4305 = vunpack.c.l.b16 %v4049
      %v4306 = vunpack.c.l.b16 %v4050
      %v4307 = vunpack.c.l.b16 %v4051
      %v4308 = vunpack.c.l.b16 %v4052
      %v4309 = vunpack.c.l.b16 %v4053
      %v4310 = vunpack.c.l.b16 %v4054
      %v4311 = vunpack.c.l.b16 %v4055
      %v4312 = vunpack.c.l.b16 %v4056
      %v4313 = vunpack.c.l.b16 %v4057
      %v4314 = vunpack.c.l.b16 %v4058
      %v4315 = vunpack.c.l.b16 %v4059
      %v4316 = vunpack.c.l.b16 %v4060
      %v4317 = vunpack.c.l.b16 %v4061
      %v4318 = vunpack.c.l.b16 %v4062
      %v4319 = vunpack.c.l.b16 %v4063
      %v4320 = vunpack.c.l.b16 %v4064
      %v4321 = vunpack.c.l.b16 %v4065
      %v4322 = vunpack.c.l.b16 %v4066
      %v4323 = vunpack.c.l.b16 %v4067
      %v4324 = vunpack.c.l.b16 %v4068
      %v4325 = vunpack.c.l.b16 %v4069
      %v4326 = vunpack.c.l.b16 %v4070
      %v4327 = vunpack.c.l.b16 %v4071
      %v4328 = vunpack.c.l.b16 %v4072
      %v4329 = vunpack.c.l.b16 %v4073
      %v4330 = vunpack.c.l.b16 %v4074
      %v4331 = vunpack.c.l.b16 %v4075
      %v4332 = vunpack.c.l.b16 %v4076
      %v4333 = vunpack.c.l.b16 %v4077
      %v4334 = vunpack.c.l.b16 %v4078
      %v4335 = vunpack.c.l.b16 %v4079
      %v4336 = vunpack.c.l.b16 %v4080
      %v4337 = vunpack.c.l.b16 %v4081
      %v4338 = vunpack.c.l.b16 %v4082
      %v4339 = vunpack.c.l.b16 %v4083
      %v4340 = vunpack.c.l.b16 %v4084
      %v4341 = vunpack.c.l.b16 %v4085
      %v4342 = vunpack.c.l.b16 %v4086
      %v4343 = vunpack.c.l.b16 %v4087
      %v4344 = vunpack.c.l.b16 %v4088
      %v4345 = vunpack.c.l.b16 %v4089
      %v4346 = vunpack.c.l.b16 %v4090
      %v4347 = vunpack.c.l.b16 %v4091
      %v4348 = vunpack.c.l.b16 %v4092
      %v4349 = vunpack.c.l.b16 %v4093
      %v4350 = vunpack.c.l.b16 %v4094
      %v4351 = vunpack.c.l.b16 %v4095
      %v4352 = vunpack.c.l.b16 %v4096
      %v4353 = vunpack.c.l.b16 %v4097
      %v4354 = vunpack.c.l.b16 %v4098
      %v4355 = vunpack.c.l.b16 %v4099
      %v4356 = vunpack.c.l.b16 %v4100
      %v4357 = vunpack.c.l.b16 %v4101
      %v4358 = vunpack.c.l.b16 %v4102
      %v4359 = vunpack.c.l.b16 %v4103
      %v4360 = vunpack.c.l.b16 %v4104
      %v4361 = vunpack.c.l.b16 %v4105
      %v4362 = vunpack.c.l.b16 %v4106
      %v4363 = vunpack.c.l.b16 %v4107
      %v4364 = vunpack.c.l.b16 %v4108
      %v4365 = vunpack.c.l.b16 %v4109
      %v4366 = vunpack.c.l.b16 %v4110
      %v4367 = vunpack.c.l.b16 %v4111
      %v4368 = vunpack.c.l.b16 %v4112
      %v4369 = vunpack.c.l.b16 %v4113
      %v4370 = vunpack.c.l.b16 %v4114
      %v4371 = vunpack.c.l.b16 %v4115
      %v4372 = vunpack.c.l.b16 %v4116
      %v4373 = vunpack.c.l.b16 %v4117
      %v4374 = vunpack.c.l.b16 %v4118
      %v4375 = vunpack.c.l.b16 %v4119
      %v4376 = vunpack.c.l.b16 %v4120
      %v4377 = vunpack.c.l.b16 %v4121
      %v4378 = vunpack.c.l.b16 %v4122
      %v4379 = vunpack.c.l.b16 %v4123
      %v4380 = vunpack.c.l.b16 %v4124
      %v4381 = vunpack.c.l.b16 %v4125
      %v4382 = vunpack.c.l.b16 %v4126
      %v4383 = vunpack.c.l.b16 %v4127
      %v4384 = vunpack.c.l.b16 %v4128
      %v4385 = vunpack.c.l.b16 %v4129
      %v4386 = vunpack.c.l.b16 %v4130
      %v4387 = vunpack.c.l.b16 %v4131
      %v4388 = vunpack.c.l.b16 %v4132
      %v4389 = vunpack.c.l.b16 %v4133
      %v4390 = vunpack.c.l.b16 %v4134
      %v4391 = vunpack.c.l.b16 %v4135
      %v4392 = vunpack.c.l.b16 %v4136
      %v4393 = vunpack.c.l.b16 %v4137
      %v4394 = vunpack.c.l.b16 %v4138
      %v4395 = vunpack.c.l.b16 %v4139
      %v4396 = vunpack.c.l.b16 %v4140
      %v4397 = vunpack.c.l.b16 %v4141
      %v4398 = vunpack.c.l.b16 %v4142
      %v4399 = vunpack.c.l.b16 %v4143
      %v4400 = vunpack.c.l.b16 %v4144
      %v4401 = vunpack.c.l.b16 %v4145
      %v4402 = vunpack.c.l.b16 %v4146
      %v4403 = vunpack.c.l.b16 %v4147
      %v4404 = vunpack.c.l.b16 %v4148
      %v4405 = vunpack.c.l.b16 %v4149
      %v4406 = vunpack.c.l.b16 %v4150
      %v4407 = vunpack.c.l.b16 %v4151
      %v4408 = vunpack.c.l.b16 %v4152
      %v4409 = vunpack.c.l.b16 %v4153
      %v4410 = vunpack.c.l.b16 %v4154
      %v4411 = vunpack.c.l.b16 %v4155
      %v4412 = vunpack.c.l.b16 %v4156
      %v4413 = vunpack.c.l.b16 %v4157
      %v4414 = vunpack.c.l.b16 %v4158
      %v4415 = vunpack.c.l.b16 %v4159
      %v4416 = vunpack.c.l.b16 %v4160
      %v4417 = vunpack.c.l.b16 %v4161
      %v4418 = vunpack.c.l.b16 %v4162
      %v4419 = vunpack.c.l.b16 %v4163
      %v4420 = vunpack.c.l.b16 %v4164
      %v4421 = vunpack.c.l.b16 %v4165
      %v4422 = vunpack.c.l.b16 %v4166
      %v4423 = vunpack.c.l.b16 %v4167
      %v4424 = vunpack.c.l.b16 %v4168
      %v4425 = vunpack.c.l.b16 %v4169
      %v4426 = vunpack.c.l.b16 %v4170
      %v4427 = vunpack.c.l.b16 %v4171
      %v4428 = vunpack.c.l.b16 %v4172
      %v4429 = vunpack.c.l.b16 %v4173
      %v4430 = vunpack.c.l.b16 %v4174
      %v4431 = vunpack.c.l.b16 %v4175
      %v4432 = vpack.c.b16 %v4305, %v4304
      %v4433 = vpack.c.b16 %v4307, %v4306
      %v4434 = vpack.c.b16 %v4309, %v4308
      %v4435 = vpack.c.b16 %v4311, %v4310
      %v4436 = vpack.c.b16 %v4313, %v4312
      %v4437 = vpack.c.b16 %v4315, %v4314
      %v4438 = vpack.c.b16 %v4317, %v4316
      %v4439 = vpack.c.b16 %v4319, %v4318
      %v4440 = vpack.c.b16 %v4321, %v4320
      %v4441 = vpack.c.b16 %v4323, %v4322
      %v4442 = vpack.c.b16 %v4325, %v4324
      %v4443 = vpack.c.b16 %v4327, %v4326
      %v4444 = vpack.c.b16 %v4329, %v4328
      %v4445 = vpack.c.b16 %v4331, %v4330
      %v4446 = vpack.c.b16 %v4333, %v4332
      %v4447 = vpack.c.b16 %v4335, %v4334
      %v4448 = vpack.c.b16 %v4337, %v4336
      %v4449 = vpack.c.b16 %v4339, %v4338
      %v4450 = vpack.c.b16 %v4341, %v4340
      %v4451 = vpack.c.b16 %v4343, %v4342
      %v4452 = vpack.c.b16 %v4345, %v4344
      %v4453 = vpack.c.b16 %v4347, %v4346
      %v4454 = vpack.c.b16 %v4349, %v4348
      %v4455 = vpack.c.b16 %v4351, %v4350
      %v4456 = vpack.c.b16 %v4353, %v4352
      %v4457 = vpack.c.b16 %v4355, %v4354
      %v4458 = vpack.c.b16 %v4357, %v4356
      %v4459 = vpack.c.b16 %v4359, %v4358
      %v4460 = vpack.c.b16 %v4361, %v4360
      %v4461 = vpack.c.b16 %v4363, %v4362
      %v4462 = vpack.c.b16 %v4365, %v4364
      %v4463 = vpack.c.b16 %v4367, %v4366
      %v4464 = vpack.c.b16 %v4369, %v4368
      %v4465 = vpack.c.b16 %v4371, %v4370
      %v4466 = vpack.c.b16 %v4373, %v4372
      %v4467 = vpack.c.b16 %v4375, %v4374
      %v4468 = vpack.c.b16 %v4377, %v4376
      %v4469 = vpack.c.b16 %v4379, %v4378
      %v4470 = vpack.c.b16 %v4381, %v4380
      %v4471 = vpack.c.b16 %v4383, %v4382
      %v4472 = vpack.c.b16 %v4385, %v4384
      %v4473 = vpack.c.b16 %v4387, %v4386
      %v4474 = vpack.c.b16 %v4389, %v4388
      %v4475 = vpack.c.b16 %v4391, %v4390
      %v4476 = vpack.c.b16 %v4393, %v4392
      %v4477 = vpack.c.b16 %v4395, %v4394
      %v4478 = vpack.c.b16 %v4397, %v4396
      %v4479 = vpack.c.b16 %v4399, %v4398
      %v4480 = vpack.c.b16 %v4401, %v4400
      %v4481 = vpack.c.b16 %v4403, %v4402
      %v4482 = vpack.c.b16 %v4405, %v4404
      %v4483 = vpack.c.b16 %v4407, %v4406
      %v4484 = vpack.c.b16 %v4409, %v4408
      %v4485 = vpack.c.b16 %v4411, %v4410
      %v4486 = vpack.c.b16 %v4413, %v4412
      %v4487 = vpack.c.b16 %v4415, %v4414
      %v4488 = vpack.c.b16 %v4417, %v4416
      %v4489 = vpack.c.b16 %v4419, %v4418
      %v4490 = vpack.c.b16 %v4421, %v4420
      %v4491 = vpack.c.b16 %v4423, %v4422
      %v4492 = vpack.c.b16 %v4425, %v4424
      %v4493 = vpack.c.b16 %v4427, %v4426
      %v4494 = vpack.c.b16 %v4429, %v4428
      %v4495 = vpack.c.b16 %v4431, %v4430
      %4560 = vmatprep.subr.bf16.mxu0 0
      %4561 = vmatpush1.bf16.msra.mxu0 %v4432
      %4562 = vmatprep.subr.bf16.mxu0 0
      %4563 = vmatpush1.bf16.msra.mxu0 %v4433
      %4564 = vmatprep.subr.bf16.mxu0 0
      %4565 = vmatpush1.bf16.msra.mxu0 %v4434
      %4566 = vmatprep.subr.bf16.mxu0 0
      %4567 = vmatpush1.bf16.msra.mxu0 %v4435
      %4568 = vmatprep.subr.bf16.mxu0 0
      %4569 = vmatpush1.bf16.msra.mxu0 %v4436
      %4570 = vmatprep.subr.bf16.mxu0 0
      %4571 = vmatpush1.bf16.msra.mxu0 %v4437
      %4572 = vmatprep.subr.bf16.mxu0 0
      %4573 = vmatpush1.bf16.msra.mxu0 %v4438
      %4574 = vmatprep.subr.bf16.mxu0 0
      %4575 = vmatpush1.bf16.msra.mxu0 %v4439
      %4576 = vmatprep.subr.bf16.mxu0 0
      %4577 = vmatpush1.bf16.msra.mxu0 %v4440
      %4578 = vmatprep.subr.bf16.mxu0 0
      %4579 = vmatpush1.bf16.msra.mxu0 %v4441
      %4580 = vmatprep.subr.bf16.mxu0 0
      %4581 = vmatpush1.bf16.msra.mxu0 %v4442
      %4582 = vmatprep.subr.bf16.mxu0 0
      %4583 = vmatpush1.bf16.msra.mxu0 %v4443
      %4584 = vmatprep.subr.bf16.mxu0 0
      %4585 = vmatpush1.bf16.msra.mxu0 %v4444
      %4586 = vmatprep.subr.bf16.mxu0 0
      %4587 = vmatpush1.bf16.msra.mxu0 %v4445
      %4588 = vmatprep.subr.bf16.mxu0 0
      %4589 = vmatpush1.bf16.msra.mxu0 %v4446
      %4590 = vmatprep.subr.bf16.mxu0 0
      %4591 = vmatpush1.bf16.msra.mxu0 %v4447
      %4592 = vmatprep.mubr.bf16.mxu0 %v4041
      %4593 = vmatmul.mubr.bf16.gmra.mrb[0].mxu0 %v4040
      %v4594 = vpop.f32.mrb[0].mxu0
      %v4595 = vadd.f32 0.0, %v4594
      %v4596 = vpop.f32.mrb[0].mxu0
      %v4597 = vpop.f32.mrb[0].mxu0
      %v4598 = vpop.f32.mrb[0].mxu0
      %4599 = vdwg.mxu0
      %4600 = vmatprep.subr.bf16.mxu0 0
      %4601 = vmatpush1.bf16.msra.mxu0 %v4448
      %4602 = vmatprep.subr.bf16.mxu0 0
      %4603 = vmatpush1.bf16.msra.mxu0 %v4449
      %4604 = vmatprep.subr.bf16.mxu0 0
      %4605 = vmatpush1.bf16.msra.mxu0 %v4450
      %4606 = vmatprep.subr.bf16.mxu0 0
      %4607 = vmatpush1.bf16.msra.mxu0 %v4451
      %4608 = vmatprep.subr.bf16.mxu0 0
      %4609 = vmatpush1.bf16.msra.mxu0 %v4452
      %4610 = vmatprep.subr.bf16.mxu0 0
      %4611 = vmatpush1.bf16.msra.mxu0 %v4453
      %4612 = vmatprep.subr.bf16.mxu0 0
      %4613 = vmatpush1.bf16.msra.mxu0 %v4454
      %4614 = vmatprep.subr.bf16.mxu0 0
      %4615 = vmatpush1.bf16.msra.mxu0 %v4455
      %4616 = vmatprep.subr.bf16.mxu0 0
      %4617 = vmatpush1.bf16.msra.mxu0 %v4456
      %4618 = vmatprep.subr.bf16.mxu0 0
      %4619 = vmatpush1.bf16.msra.mxu0 %v4457
      %4620 = vmatprep.subr.bf16.mxu0 0
      %4621 = vmatpush1.bf16.msra.mxu0 %v4458
      %4622 = vmatprep.subr.bf16.mxu0 0
      %4623 = vmatpush1.bf16.msra.mxu0 %v4459
      %4624 = vmatprep.subr.bf16.mxu0 0
      %4625 = vmatpush1.bf16.msra.mxu0 %v4460
      %4626 = vmatprep.subr.bf16.mxu0 0
      %4627 = vmatpush1.bf16.msra.mxu0 %v4461
      %4628 = vmatprep.subr.bf16.mxu0 0
      %4629 = vmatpush1.bf16.msra.mxu0 %v4462
      %4630 = vmatprep.subr.bf16.mxu0 0
      %4631 = vmatpush1.bf16.msra.mxu0 %v4463
      %4632 = vmatprep.mubr.bf16.mxu0 %v4043
      %4633 = vmatmul.mubr.bf16.gmra.mrb[0].mxu0 %v4042
      %v4634 = vpop.f32.mrb[0].mxu0
      %v4635 = vadd.f32 %v4595, %v4634
      %v4636 = vpop.f32.mrb[0].mxu0
      %v4637 = vpop.f32.mrb[0].mxu0
      %v4638 = vpop.f32.mrb[0].mxu0
      %4639 = vdwg.mxu0
      %4640 = vmatprep.subr.bf16.mxu0 0
      %4641 = vmatpush1.bf16.msra.mxu0 %v4464
      %4642 = vmatprep.subr.bf16.mxu0 0
      %4643 = vmatpush1.bf16.msra.mxu0 %v4465
      %4644 = vmatprep.subr.bf16.mxu0 0
      %4645 = vmatpush1.bf16.msra.mxu0 %v4466
      %4646 = vmatprep.subr.bf16.mxu0 0
      %4647 = vmatpush1.bf16.msra.mxu0 %v4467
      %4648 = vmatprep.subr.bf16.mxu0 0
      %4649 = vmatpush1.bf16.msra.mxu0 %v4468
      %4650 = vmatprep.subr.bf16.mxu0 0
      %4651 = vmatpush1.bf16.msra.mxu0 %v4469
      %4652 = vmatprep.subr.bf16.mxu0 0
      %4653 = vmatpush1.bf16.msra.mxu0 %v4470
      %4654 = vmatprep.subr.bf16.mxu0 0
      %4655 = vmatpush1.bf16.msra.mxu0 %v4471
      %4656 = vmatprep.subr.bf16.mxu0 0
      %4657 = vmatpush1.bf16.msra.mxu0 %v4472
      %4658 = vmatprep.subr.bf16.mxu0 0
      %4659 = vmatpush1.bf16.msra.mxu0 %v4473
      %4660 = vmatprep.subr.bf16.mxu0 0
      %4661 = vmatpush1.bf16.msra.mxu0 %v4474
      %4662 = vmatprep.subr.bf16.mxu0 0
      %4663 = vmatpush1.bf16.msra.mxu0 %v4475
      %4664 = vmatprep.subr.bf16.mxu0 0
      %4665 = vmatpush1.bf16.msra.mxu0 %v4476
      %4666 = vmatprep.subr.bf16.mxu0 0
      %4667 = vmatpush1.bf16.msra.mxu0 %v4477
      %4668 = vmatprep.subr.bf16.mxu0 0
      %4669 = vmatpush1.bf16.msra.mxu0 %v4478
      %4670 = vmatprep.subr.bf16.mxu0 0
      %4671 = vmatpush1.bf16.msra.mxu0 %v4479
      %4672 = vmatprep.mubr.bf16.mxu0 %v4045
      %4673 = vmatmul.mubr.bf16.gmra.mrb[0].mxu0 %v4044
      %v4674 = vpop.f32.mrb[0].mxu0
      %v4675 = vadd.f32 %v4635, %v4674
      %v4676 = vpop.f32.mrb[0].mxu0
      %v4677 = vpop.f32.mrb[0].mxu0
      %v4678 = vpop.f32.mrb[0].mxu0
      %4679 = vdwg.mxu0
      %4680 = vmatprep.subr.bf16.mxu0 0
      %4681 = vmatpush1.bf16.msra.mxu0 %v4480
      %4682 = vmatprep.subr.bf16.mxu0 0
      %4683 = vmatpush1.bf16.msra.mxu0 %v4481
      %4684 = vmatprep.subr.bf16.mxu0 0
      %4685 = vmatpush1.bf16.msra.mxu0 %v4482
      %4686 = vmatprep.subr.bf16.mxu0 0
      %4687 = vmatpush1.bf16.msra.mxu0 %v4483
      %4688 = vmatprep.subr.bf16.mxu0 0
      %4689 = vmatpush1.bf16.msra.mxu0 %v4484
      %4690 = vmatprep.subr.bf16.mxu0 0
      %4691 = vmatpush1.bf16.msra.mxu0 %v4485
      %4692 = vmatprep.subr.bf16.mxu0 0
      %4693 = vmatpush1.bf16.msra.mxu0 %v4486
      %4694 = vmatprep.subr.bf16.mxu0 0
      %4695 = vmatpush1.bf16.msra.mxu0 %v4487
      %4696 = vmatprep.subr.bf16.mxu0 0
      %4697 = vmatpush1.bf16.msra.mxu0 %v4488
      %4698 = vmatprep.subr.bf16.mxu0 0
      %4699 = vmatpush1.bf16.msra.mxu0 %v4489
      %4700 = vmatprep.subr.bf16.mxu0 0
      %4701 = vmatpush1.bf16.msra.mxu0 %v4490
      %4702 = vmatprep.subr.bf16.mxu0 0
      %4703 = vmatpush1.bf16.msra.mxu0 %v4491
      %4704 = vmatprep.subr.bf16.mxu0 0
      %4705 = vmatpush1.bf16.msra.mxu0 %v4492
      %4706 = vmatprep.subr.bf16.mxu0 0
      %4707 = vmatpush1.bf16.msra.mxu0 %v4493
      %4708 = vmatprep.subr.bf16.mxu0 0
      %4709 = vmatpush1.bf16.msra.mxu0 %v4494
      %4710 = vmatprep.subr.bf16.mxu0 0
      %4711 = vmatpush1.bf16.msra.mxu0 %v4495
      %4712 = vmatprep.mubr.bf16.mxu0 %v4047
      %4713 = vmatmul.mubr.bf16.gmra.mrb[0].mxu0 %v4046
      %v4714 = vpop.f32.mrb[0].mxu0
      %v4715 = vadd.f32 %v4675, %v4714
      %v4716 = vpop.f32.mrb[0].mxu0
      %v4717 = vpop.f32.mrb[0].mxu0
      %v4718 = vpop.f32.mrb[0].mxu0
      %4719 = vdwg.mxu0
      %4720 = vst [vmem:[#allocation11] sm:$0x3] %v4715
    $region41: #{tpu_custom_call.1} parent=1 // pred_fallthru
      _
    // Predicated region
    $region42: #{tpu_custom_call.1} parent=1 // pred_check
      _
    $region43: #{tpu_custom_call.1} parent=1 // pred_check_branch
      %4722 = sbr.rel (0) target = $region45
    $region44: #{tpu_custom_call.1} parent=1 // pred_region
      %s4724 = ssub.s32 32, 32
      %4725 = vsyncadd [#allocation5], %s4724
      %s4727 = sshll.u32 [#allocation11], 4
      %s4728 = int_to_ptr.vmem [resolvable:$true] %s4727
      %4730 = dma.vmem_to_hbm [thread:$0]  %s4728, 32, %s4, [#allocation5]
    $region45: #{tpu_custom_call.1} parent=1 // pred_fallthru
      _
    // Predicated region
    $region46: #{tpu_custom_call.1} parent=1 // pred_check
      _
    $region47: #{tpu_custom_call.1} parent=1 // pred_check_branch
      %4732 = sbr.rel (0) target = $region49
    $region48: #{tpu_custom_call.1} parent=1 // pred_region
      %4733 = dma.done [#allocation5], 32
    $region49: #{tpu_custom_call.1} parent=1 // pred_fallthru
      _
    %4734 = vsyncpa [#allocation4], 1
    %4735 = vsyncpa [#allocation7], 1
    %4736 = vsyncpa [#allocation10], 1
    %4737 = vsyncpa [#allocation5], 1

</llo_original>
